<compile_context>
chip_gen: v7x
topology: tpu7x:2x2x1
jax: 0.10.0
libtpu: 0.0.40
codegen_flags: <defaults>
</compile_context>

<pallas_src>
import functools

import jax
import jax.numpy as jnp
from jax.experimental import pallas as pl
from jax.experimental.pallas import tpu as pltpu

_SQRT_HALF = 0.7071067811865476
_LN_EPS = 1e-5


def _erf(x):
    # Abramowitz & Stegun 7.1.26 (|err| < 1.5e-7) built from exp; the divide is
    # replaced by an EUP approximate reciprocal (otherwise-idle VLIW slot).
    # TODO(synk): re-validate tolerance vs torch F.gelu (erf form) if tight
    # parity is required; approx reciprocal adds ~1e-4 abs error to GELU.
    a1, a2, a3, a4, a5 = 0.254829592, -0.284496736, 1.421413741, -1.453152027, 1.061405429
    p = 0.3275911
    s = jnp.where(x >= 0.0, 1.0, -1.0)
    ax = jnp.abs(x)
    t = pl.reciprocal(1.0 + p * ax, approx=True)
    poly = ((((a5 * t + a4) * t + a3) * t + a2) * t + a1) * t
    return s * (1.0 - poly * jnp.exp(-ax * ax))


def _gelu(x):
    # PyTorch F.gelu default (erf formulation), f32 elementwise.
    return 0.5 * x * (1.0 + _erf(x * _SQRT_HALF))


def _layernorm(x, gamma, beta):
    mu = jnp.mean(x, axis=-1, keepdims=True)
    var = jnp.mean(jnp.square(x - mu), axis=-1, keepdims=True)
    return (x - mu) * jax.lax.rsqrt(var + _LN_EPS) * gamma + beta


def s5_backbone_kernel(
    x_ref,                       # (1, L*BT, H)  time-major rows: r = t*BT + b
    ln1_g_ref, ln1_b_ref,        # (NL, H)   f32
    lam_re_ref, lam_im_ref,      # (NL, P)   f32   Lambda_bar (discretized)
    b_pack_ref,                  # (NL, H, 2P) bf16  [Re(B_bar)^T | Im(B_bar)^T]
    c_pack_ref,                  # (NL, 2P, H) bf16  [[2Re(C)^T], [-2Im(C)^T]]
    d_ref,                       # (NL, H)   f32
    ln2_g_ref, ln2_b_ref,        # (NL, H)   f32
    w_enc_ref,                   # (NL, H, 2H) bf16  fused GEGLU [value | gate]
    w_dec_ref,                   # (NL, H, H)  bf16
    out_ref,                     # (1, L*BT, H)
    *, seq_len, batch_tile,
):
    L, BT = seq_len, batch_tile
    H = x_ref.shape[2]
    NL, P = lam_re_ref.shape

    x = x_ref[0].astype(jnp.float32)                 # (L*BT, H), stays resident

    for l in range(NL):                               # fused static layer loop
        # ---- attn_norm (pre-norm), f32 ----
        fx = _layernorm(x, ln1_g_ref[l:l + 1, :], ln1_b_ref[l:l + 1, :])

        # ---- S5 input projection hoisted off the serial chain (bf16 MXU) ----
        bu = jnp.dot(fx.astype(jnp.bfloat16), b_pack_ref[l],
                     preferred_element_type=jnp.float32)        # (L*BT, 2P) f32
        bu_r = bu[:, :P]                              # lane split once per layer
        bu_i = bu[:, P:]
        lam_r = lam_re_ref[l:l + 1, :]                # (1, P)
        lam_i = lam_im_ref[l:l + 1, :]

        # ---- complex recurrence, batch on sublanes: state is (BT, P) ----
        # Each timestep's BT batch rows are a contiguous sublane slice of bu.
        # TODO(synk): swap for a log-depth associative scan if L grows large.
        s_r = jnp.zeros((BT, P), jnp.float32)
        s_i = jnp.zeros((BT, P), jnp.float32)
        srs, sis = [], []
        for t in range(L):                            # L small & static
            r0 = t * BT
            n_r = lam_r * s_r - lam_i * s_i + bu_r[r0:r0 + BT, :]
            n_i = lam_r * s_i + lam_i * s_r + bu_i[r0:r0 + BT, :]
            s_r, s_i = n_r, n_i
            srs.append(n_r)
            sis.append(n_i)
        S = jnp.concatenate(
            [jnp.concatenate(srs, axis=0), jnp.concatenate(sis, axis=0)],
            axis=1)                                   # (L*BT, 2P) state history

        # ---- deferred C projection + hoisted D*u:  y = 2*Re(C s) + D*u ----
        y = (jnp.dot(S.astype(jnp.bfloat16), c_pack_ref[l],
                     preferred_element_type=jnp.float32)
             + d_ref[l:l + 1, :] * fx)                # (L*BT, H)

        # ---- GELU + residual (residual is the post-norm tensor) ----
        h = _gelu(y) + fx

        # ---- ff_norm + GEGLU feed-forward + residual ----
        # TODO(synk): s5-pytorch FF Linears are bias-free; add bias vectors if
        # the target checkpoint uses biased nn.Linear layers.
        f2 = _layernorm(h, ln2_g_ref[l:l + 1, :], ln2_b_ref[l:l + 1, :])
        enc = jnp.dot(f2.astype(jnp.bfloat16), w_enc_ref[l],
                      preferred_element_type=jnp.float32)       # (L*BT, 2H)
        a = enc[:, :H]                                # GEGLU value
        g = enc[:, H:]                                # GEGLU gate
        ff = jnp.dot((a * _gelu(g)).astype(jnp.bfloat16), w_dec_ref[l],
                     preferred_element_type=jnp.float32)
        x = ff + f2

    out_ref[0] = x.astype(out_ref.dtype)


def s5_backbone_apply(x, params, bt=None):
    """Apply the whole S5 backbone (all layers fused). x: (B, L, H) float32."""
    B, L, H = x.shape
    NL, P = params["lam_re"].shape

    BT = min(8, B) if bt is None else max(1, min(bt, B))   # batch rows per grid step
    NB = pl.cdiv(B, BT)
    Bp = NB * BT
    if Bp > B:
        x = jnp.pad(x, ((0, Bp - B), (0, 0), (0, 0)))

    # Wrapper-side (XLA) scramble to time-major batch blocks:
    # (Bp, L, H) -> (NB, L*BT, H), row within a block = t*BT + b_local.
    xb = x.reshape(NB, BT, L, H).transpose(0, 2, 1, 3).reshape(NB, L * BT, H)

    weights = [
        params["ln1_g"], params["ln1_b"],
        params["lam_re"], params["lam_im"],
        params["b_pack"], params["c_pack"], params["d"],
        params["ln2_g"], params["ln2_b"],
        params["w_enc"], params["w_dec"],
    ]

    def _w_spec(w):
        n = w.ndim
        return pl.BlockSpec(w.shape, lambda i, n=n: (0,) * n)

    # Advisory cost estimate so XLA schedules around the custom call sensibly.
    R = Bp * L
    mm_flops = NL * (2 * R * H * (2 * P) + 2 * R * (2 * P) * H
                     + 2 * R * H * (2 * H) + 2 * R * H * H)
    rec_flops = NL * 10 * R * P
    w_bytes = sum(int(w.size) * w.dtype.itemsize for w in weights)
    cost = pl.CostEstimate(
        flops=int(mm_flops + rec_flops),
        transcendentals=int(NL * 4 * R * H),
        bytes_accessed=int(2 * R * H * 4 + w_bytes),
    )

    kernel = functools.partial(s5_backbone_kernel, seq_len=L, batch_tile=BT)

    yb = pl.pallas_call(
        kernel,
        out_shape=jax.ShapeDtypeStruct((NB, L * BT, H), jnp.float32),
        grid=(NB,),
        in_specs=[pl.BlockSpec((1, L * BT, H), lambda i: (i, 0, 0))]
                 + [_w_spec(w) for w in weights],
        out_specs=pl.BlockSpec((1, L * BT, H), lambda i: (i, 0, 0)),
        compiler_params=pltpu.CompilerParams(dimension_semantics=("parallel",)),
        cost_estimate=cost,
    )(xb, *weights)

    # Unscramble back to (B, L, H).
    y = yb.reshape(NB, L, BT, H).transpose(0, 2, 1, 3).reshape(Bp, L, H)
    return y[:B]


def _init_s5_block_params(key, H, P):
    """Deterministic synthetic init for one S5Block, pre-packed for the kernel.

    All complex arithmetic (ZOH discretization) is done in explicit real math
    so no complex dtype ever reaches the TPU.
    """
    ks = jax.random.split(key, 8)

    # Continuous-time diagonal SSM params (S4D-Lin style, negative real parts).
    lam_re_c = -0.5 * jnp.ones((P,), jnp.float32)
    lam_im_c = jnp.pi * jnp.arange(P, dtype=jnp.float32)

    log_step = jax.random.uniform(ks[0], (P,), jnp.float32,
                                  minval=jnp.log(1e-3), maxval=jnp.log(1e-1))
    step = jnp.exp(log_step)

    B_re = jax.random.normal(ks[1], (P, H), jnp.float32) / jnp.sqrt(2.0 * H)
    B_im = jax.random.normal(ks[2], (P, H), jnp.float32) / jnp.sqrt(2.0 * H)
    C_re = jax.random.normal(ks[3], (H, P), jnp.float32) / jnp.sqrt(2.0 * P)
    C_im = jax.random.normal(ks[4], (H, P), jnp.float32) / jnp.sqrt(2.0 * P)
    D = jax.random.normal(ks[5], (H,), jnp.float32)

    # ZOH discretization:  Lambda_bar = exp(Lambda*step)
    mag = jnp.exp(lam_re_c * step)
    lam_bar_re = mag * jnp.cos(lam_im_c * step)
    lam_bar_im = mag * jnp.sin(lam_im_c * step)
    #                    B_bar = (1/Lambda) * (Lambda_bar - 1) * B_tilde
    den = lam_re_c * lam_re_c + lam_im_c * lam_im_c
    inv_re, inv_im = lam_re_c / den, -lam_im_c / den              # 1/Lambda
    num_re, num_im = lam_bar_re - 1.0, lam_bar_im
    coef_re = num_re * inv_re - num_im * inv_im
    coef_im = num_re * inv_im + num_im * inv_re
    Bbar_re = coef_re[:, None] * B_re - coef_im[:, None] * B_im   # (P, H)
    Bbar_im = coef_re[:, None] * B_im + coef_im[:, None] * B_re

    w_enc = jax.random.normal(ks[6], (H, 2 * H), jnp.float32) / jnp.sqrt(float(H))
    w_dec = jax.random.normal(ks[7], (H, H), jnp.float32) / jnp.sqrt(float(H))

    return dict(
        ln1_g=jnp.ones((H,), jnp.float32),
        ln1_b=jnp.zeros((H,), jnp.float32),
        lam_re=lam_bar_re,                                        # (P,) f32
        lam_im=lam_bar_im,
        # Packed input projection [Re | Im] of B_bar^T -> (H, 2P), bf16 for MXU.
        b_pack=jnp.concatenate([Bbar_re.T, Bbar_im.T], axis=1).astype(jnp.bfloat16),
        # Packed output projection [[2*Re(C)^T], [-2*Im(C)^T]] -> (2P, H), bf16.
        c_pack=jnp.concatenate([2.0 * C_re.T, -2.0 * C_im.T],
                               axis=0).astype(jnp.bfloat16),
        d=D,
        ln2_g=jnp.ones((H,), jnp.float32),
        ln2_b=jnp.zeros((H,), jnp.float32),
        w_enc=w_enc.astype(jnp.bfloat16),                         # fused GEGLU enc
        w_dec=w_dec.astype(jnp.bfloat16),
    )


def init_s5_backbone_params(key, H, P, num_layers):
    """Per-layer params stacked along a leading layer axis for the fused kernel."""
    per_layer = []
    for _ in range(num_layers):
        key, sub = jax.random.split(key)
        per_layer.append(_init_s5_block_params(sub, H, P))
    return {k: jnp.stack([p[k] for p in per_layer], axis=0) for k in per_layer[0]}


if __name__ == "__main__":
    # Small shapes consistent with the module: input_dim=32, state_dim=16,
    # num_layers=3, batch=2, seq=8.
    B, L, H, P, NUM_LAYERS = 2, 8, 32, 16, 3

    key = jax.random.PRNGKey(0)
    key, xk = jax.random.split(key)
    x = jax.random.normal(xk, (B, L, H), jnp.float32)

    params = init_s5_backbone_params(key, H, P, NUM_LAYERS)

    y = s5_backbone_apply(x, params)
    jax.block_until_ready(y)
    assert y.shape == (B, L, H) and y.dtype == jnp.float32
    assert bool(jnp.isfinite(y).all())
    print("KERNEL_OK")
</pallas_src>

<mosaic_0001>
module attributes {stable_mosaic.version = 11 : i64} {
  func.func @s5_backbone_kernel(%arg0: i32, %arg1: memref<1x16x32xf32, #tpu.memory_space<vmem>>, %arg2: memref<3x32xf32, #tpu.memory_space<vmem>>, %arg3: memref<3x32xf32, #tpu.memory_space<vmem>>, %arg4: memref<3x16xf32, #tpu.memory_space<vmem>>, %arg5: memref<3x16xf32, #tpu.memory_space<vmem>>, %arg6: memref<3x32x32xbf16, #tpu.memory_space<vmem>>, %arg7: memref<3x32x32xbf16, #tpu.memory_space<vmem>>, %arg8: memref<3x32xf32, #tpu.memory_space<vmem>>, %arg9: memref<3x32xf32, #tpu.memory_space<vmem>>, %arg10: memref<3x32xf32, #tpu.memory_space<vmem>>, %arg11: memref<3x32x64xbf16, #tpu.memory_space<vmem>>, %arg12: memref<3x32x32xbf16, #tpu.memory_space<vmem>>, %arg13: memref<1x16x32xf32, #tpu.memory_space<vmem>>) attributes {dimension_semantics = [#tpu.dimension_semantics<parallel>], iteration_bounds = array<i64: 1>, scalar_prefetch = 0 : i64, scratch_operands = 0 : i64, tpu.core_type = #tpu.core_type<tc>, window_params = [{transform_indices = @transform_0, window_bounds = array<i64: 1, 16, 32>}, {pipeline_mode = #tpu.pipeline_mode<synchronous>, transform_indices = @transform_1, window_bounds = array<i64: 3, 32>}, {pipeline_mode = #tpu.pipeline_mode<synchronous>, transform_indices = @transform_2, window_bounds = array<i64: 3, 32>}, {pipeline_mode = #tpu.pipeline_mode<synchronous>, transform_indices = @transform_3, window_bounds = array<i64: 3, 16>}, {pipeline_mode = #tpu.pipeline_mode<synchronous>, transform_indices = @transform_4, window_bounds = array<i64: 3, 16>}, {pipeline_mode = #tpu.pipeline_mode<synchronous>, transform_indices = @transform_5, window_bounds = array<i64: 3, 32, 32>}, {pipeline_mode = #tpu.pipeline_mode<synchronous>, transform_indices = @transform_6, window_bounds = array<i64: 3, 32, 32>}, {pipeline_mode = #tpu.pipeline_mode<synchronous>, transform_indices = @transform_7, window_bounds = array<i64: 3, 32>}, {pipeline_mode = #tpu.pipeline_mode<synchronous>, transform_indices = @transform_8, window_bounds = array<i64: 3, 32>}, {pipeline_mode = #tpu.pipeline_mode<synchronous>, transform_indices = @transform_9, window_bounds = array<i64: 3, 32>}, {pipeline_mode = #tpu.pipeline_mode<synchronous>, transform_indices = @transform_10, window_bounds = array<i64: 3, 32, 64>}, {pipeline_mode = #tpu.pipeline_mode<synchronous>, transform_indices = @transform_11, window_bounds = array<i64: 3, 32, 32>}, {transform_indices = @transform_12, window_bounds = array<i64: 1, 16, 32>}]} {
    %c0 = arith.constant 0 : index
    %c0_0 = arith.constant 0 : index
    %c0_1 = arith.constant 0 : index
    %0 = vector.load %arg1[%c0, %c0_0, %c0_1] : memref<1x16x32xf32, #tpu.memory_space<vmem>>, vector<1x16x32xf32>
    %1 = vector.shape_cast %0 : vector<1x16x32xf32> to vector<16x32xf32>
    %c0_2 = arith.constant 0 : index
    %c0_3 = arith.constant 0 : index
    %2 = vector.load %arg2[%c0_2, %c0_3] : memref<3x32xf32, #tpu.memory_space<vmem>>, vector<1x32xf32>
    %c0_4 = arith.constant 0 : index
    %c0_5 = arith.constant 0 : index
    %3 = vector.load %arg3[%c0_4, %c0_5] : memref<3x32xf32, #tpu.memory_space<vmem>>, vector<1x32xf32>
    %cst = arith.constant dense<0.000000e+00> : vector<16xf32>
    %4 = vector.multi_reduction <add>, %1, %cst [1] : vector<16x32xf32> to vector<16xf32>
    %5 = vector.shape_cast %4 : vector<16xf32> to vector<16x1xf32>
    %cst_6 = arith.constant 3.200000e+01 : f32
    %6 = vector.broadcast %cst_6 : f32 to vector<16x1xf32>
    %7 = arith.divf %5, %6 : vector<16x1xf32>
    %8 = vector.broadcast %7 : vector<16x1xf32> to vector<16x32xf32>
    %9 = arith.subf %1, %8 : vector<16x32xf32>
    %10 = arith.mulf %9, %9 : vector<16x32xf32>
    %cst_7 = arith.constant dense<0.000000e+00> : vector<16xf32>
    %11 = vector.multi_reduction <add>, %10, %cst_7 [1] : vector<16x32xf32> to vector<16xf32>
    %12 = vector.shape_cast %11 : vector<16xf32> to vector<16x1xf32>
    %cst_8 = arith.constant 3.200000e+01 : f32
    %13 = vector.broadcast %cst_8 : f32 to vector<16x1xf32>
    %14 = arith.divf %12, %13 : vector<16x1xf32>
    %15 = vector.broadcast %7 : vector<16x1xf32> to vector<16x32xf32>
    %16 = arith.subf %1, %15 : vector<16x32xf32>
    %cst_9 = arith.constant 9.99999974E-6 : f32
    %17 = vector.broadcast %cst_9 : f32 to vector<16x1xf32>
    %18 = arith.addf %14, %17 : vector<16x1xf32>
    %19 = math.rsqrt %18 : vector<16x1xf32>
    %20 = vector.broadcast %19 : vector<16x1xf32> to vector<16x32xf32>
    %21 = arith.mulf %16, %20 : vector<16x32xf32>
    %22 = vector.broadcast %2 : vector<1x32xf32> to vector<16x32xf32>
    %23 = arith.mulf %21, %22 : vector<16x32xf32>
    %24 = vector.broadcast %3 : vector<1x32xf32> to vector<16x32xf32>
    %25 = arith.addf %23, %24 : vector<16x32xf32>
    %26 = arith.truncf %25 : vector<16x32xf32> to vector<16x32xbf16>
    %c0_10 = arith.constant 0 : index
    %c0_11 = arith.constant 0 : index
    %c0_12 = arith.constant 0 : index
    %27 = vector.load %arg6[%c0_10, %c0_11, %c0_12] : memref<3x32x32xbf16, #tpu.memory_space<vmem>>, vector<1x32x32xbf16>
    %28 = vector.shape_cast %27 : vector<1x32x32xbf16> to vector<32x32xbf16>
    %cst_13 = arith.constant dense<0.000000e+00> : vector<16x32xf32>
    %29 = tpu.matmul %26, %28, %cst_13 {dimension_numbers = #tpu.dot_dimension_numbers<[1], [0], [0], [1], [0, 0, 1, 1], [], []>} : vector<16x32xbf16>, vector<32x32xbf16>, vector<16x32xf32> -> vector<16x32xf32>
    %30 = vector.extract_strided_slice %29 {offsets = [0, 0], sizes = [16, 16], strides = [1, 1]} : vector<16x32xf32> to vector<16x16xf32>
    %31 = vector.extract_strided_slice %29 {offsets = [0, 16], sizes = [16, 16], strides = [1, 1]} : vector<16x32xf32> to vector<16x16xf32>
    %c0_14 = arith.constant 0 : index
    %c0_15 = arith.constant 0 : index
    %32 = vector.load %arg4[%c0_14, %c0_15] : memref<3x16xf32, #tpu.memory_space<vmem>>, vector<1x16xf32>
    %c0_16 = arith.constant 0 : index
    %c0_17 = arith.constant 0 : index
    %33 = vector.load %arg5[%c0_16, %c0_17] : memref<3x16xf32, #tpu.memory_space<vmem>>, vector<1x16xf32>
    %cst_18 = arith.constant 0.000000e+00 : f32
    %34 = vector.broadcast %cst_18 : f32 to vector<2x16xf32>
    %cst_19 = arith.constant 0.000000e+00 : f32
    %35 = vector.broadcast %cst_19 : f32 to vector<2x16xf32>
    %36 = vector.broadcast %32 : vector<1x16xf32> to vector<2x16xf32>
    %37 = arith.mulf %36, %34 : vector<2x16xf32>
    %38 = vector.broadcast %33 : vector<1x16xf32> to vector<2x16xf32>
    %39 = arith.mulf %38, %35 : vector<2x16xf32>
    %40 = arith.subf %37, %39 : vector<2x16xf32>
    %41 = vector.extract_strided_slice %30 {offsets = [0, 0], sizes = [2, 16], strides = [1, 1]} : vector<16x16xf32> to vector<2x16xf32>
    %42 = arith.addf %40, %41 : vector<2x16xf32>
    %43 = vector.broadcast %32 : vector<1x16xf32> to vector<2x16xf32>
    %44 = arith.mulf %43, %35 : vector<2x16xf32>
    %45 = vector.broadcast %33 : vector<1x16xf32> to vector<2x16xf32>
    %46 = arith.mulf %45, %34 : vector<2x16xf32>
    %47 = arith.addf %44, %46 : vector<2x16xf32>
    %48 = vector.extract_strided_slice %31 {offsets = [0, 0], sizes = [2, 16], strides = [1, 1]} : vector<16x16xf32> to vector<2x16xf32>
    %49 = arith.addf %47, %48 : vector<2x16xf32>
    %50 = vector.broadcast %32 : vector<1x16xf32> to vector<2x16xf32>
    %51 = arith.mulf %50, %42 : vector<2x16xf32>
    %52 = vector.broadcast %33 : vector<1x16xf32> to vector<2x16xf32>
    %53 = arith.mulf %52, %49 : vector<2x16xf32>
    %54 = arith.subf %51, %53 : vector<2x16xf32>
    %55 = vector.extract_strided_slice %30 {offsets = [2, 0], sizes = [2, 16], strides = [1, 1]} : vector<16x16xf32> to vector<2x16xf32>
    %56 = arith.addf %54, %55 : vector<2x16xf32>
    %57 = vector.broadcast %32 : vector<1x16xf32> to vector<2x16xf32>
    %58 = arith.mulf %57, %49 : vector<2x16xf32>
    %59 = vector.broadcast %33 : vector<1x16xf32> to vector<2x16xf32>
    %60 = arith.mulf %59, %42 : vector<2x16xf32>
    %61 = arith.addf %58, %60 : vector<2x16xf32>
    %62 = vector.extract_strided_slice %31 {offsets = [2, 0], sizes = [2, 16], strides = [1, 1]} : vector<16x16xf32> to vector<2x16xf32>
    %63 = arith.addf %61, %62 : vector<2x16xf32>
    %64 = vector.broadcast %32 : vector<1x16xf32> to vector<2x16xf32>
    %65 = arith.mulf %64, %56 : vector<2x16xf32>
    %66 = vector.broadcast %33 : vector<1x16xf32> to vector<2x16xf32>
    %67 = arith.mulf %66, %63 : vector<2x16xf32>
    %68 = arith.subf %65, %67 : vector<2x16xf32>
    %69 = vector.extract_strided_slice %30 {offsets = [4, 0], sizes = [2, 16], strides = [1, 1]} : vector<16x16xf32> to vector<2x16xf32>
    %70 = arith.addf %68, %69 : vector<2x16xf32>
    %71 = vector.broadcast %32 : vector<1x16xf32> to vector<2x16xf32>
    %72 = arith.mulf %71, %63 : vector<2x16xf32>
    %73 = vector.broadcast %33 : vector<1x16xf32> to vector<2x16xf32>
    %74 = arith.mulf %73, %56 : vector<2x16xf32>
    %75 = arith.addf %72, %74 : vector<2x16xf32>
    %76 = vector.extract_strided_slice %31 {offsets = [4, 0], sizes = [2, 16], strides = [1, 1]} : vector<16x16xf32> to vector<2x16xf32>
    %77 = arith.addf %75, %76 : vector<2x16xf32>
    %78 = vector.broadcast %32 : vector<1x16xf32> to vector<2x16xf32>
    %79 = arith.mulf %78, %70 : vector<2x16xf32>
    %80 = vector.broadcast %33 : vector<1x16xf32> to vector<2x16xf32>
    %81 = arith.mulf %80, %77 : vector<2x16xf32>
    %82 = arith.subf %79, %81 : vector<2x16xf32>
    %83 = vector.extract_strided_slice %30 {offsets = [6, 0], sizes = [2, 16], strides = [1, 1]} : vector<16x16xf32> to vector<2x16xf32>
    %84 = arith.addf %82, %83 : vector<2x16xf32>
    %85 = vector.broadcast %32 : vector<1x16xf32> to vector<2x16xf32>
    %86 = arith.mulf %85, %77 : vector<2x16xf32>
    %87 = vector.broadcast %33 : vector<1x16xf32> to vector<2x16xf32>
    %88 = arith.mulf %87, %70 : vector<2x16xf32>
    %89 = arith.addf %86, %88 : vector<2x16xf32>
    %90 = vector.extract_strided_slice %31 {offsets = [6, 0], sizes = [2, 16], strides = [1, 1]} : vector<16x16xf32> to vector<2x16xf32>
    %91 = arith.addf %89, %90 : vector<2x16xf32>
    %92 = vector.broadcast %32 : vector<1x16xf32> to vector<2x16xf32>
    %93 = arith.mulf %92, %84 : vector<2x16xf32>
    %94 = vector.broadcast %33 : vector<1x16xf32> to vector<2x16xf32>
    %95 = arith.mulf %94, %91 : vector<2x16xf32>
    %96 = arith.subf %93, %95 : vector<2x16xf32>
    %97 = vector.extract_strided_slice %30 {offsets = [8, 0], sizes = [2, 16], strides = [1, 1]} : vector<16x16xf32> to vector<2x16xf32>
    %98 = arith.addf %96, %97 : vector<2x16xf32>
    %99 = vector.broadcast %32 : vector<1x16xf32> to vector<2x16xf32>
    %100 = arith.mulf %99, %91 : vector<2x16xf32>
    %101 = vector.broadcast %33 : vector<1x16xf32> to vector<2x16xf32>
    %102 = arith.mulf %101, %84 : vector<2x16xf32>
    %103 = arith.addf %100, %102 : vector<2x16xf32>
    %104 = vector.extract_strided_slice %31 {offsets = [8, 0], sizes = [2, 16], strides = [1, 1]} : vector<16x16xf32> to vector<2x16xf32>
    %105 = arith.addf %103, %104 : vector<2x16xf32>
    %106 = vector.broadcast %32 : vector<1x16xf32> to vector<2x16xf32>
    %107 = arith.mulf %106, %98 : vector<2x16xf32>
    %108 = vector.broadcast %33 : vector<1x16xf32> to vector<2x16xf32>
    %109 = arith.mulf %108, %105 : vector<2x16xf32>
    %110 = arith.subf %107, %109 : vector<2x16xf32>
    %111 = vector.extract_strided_slice %30 {offsets = [10, 0], sizes = [2, 16], strides = [1, 1]} : vector<16x16xf32> to vector<2x16xf32>
    %112 = arith.addf %110, %111 : vector<2x16xf32>
    %113 = vector.broadcast %32 : vector<1x16xf32> to vector<2x16xf32>
    %114 = arith.mulf %113, %105 : vector<2x16xf32>
    %115 = vector.broadcast %33 : vector<1x16xf32> to vector<2x16xf32>
    %116 = arith.mulf %115, %98 : vector<2x16xf32>
    %117 = arith.addf %114, %116 : vector<2x16xf32>
    %118 = vector.extract_strided_slice %31 {offsets = [10, 0], sizes = [2, 16], strides = [1, 1]} : vector<16x16xf32> to vector<2x16xf32>
    %119 = arith.addf %117, %118 : vector<2x16xf32>
    %120 = vector.broadcast %32 : vector<1x16xf32> to vector<2x16xf32>
    %121 = arith.mulf %120, %112 : vector<2x16xf32>
    %122 = vector.broadcast %33 : vector<1x16xf32> to vector<2x16xf32>
    %123 = arith.mulf %122, %119 : vector<2x16xf32>
    %124 = arith.subf %121, %123 : vector<2x16xf32>
    %125 = vector.extract_strided_slice %30 {offsets = [12, 0], sizes = [2, 16], strides = [1, 1]} : vector<16x16xf32> to vector<2x16xf32>
    %126 = arith.addf %124, %125 : vector<2x16xf32>
    %127 = vector.broadcast %32 : vector<1x16xf32> to vector<2x16xf32>
    %128 = arith.mulf %127, %119 : vector<2x16xf32>
    %129 = vector.broadcast %33 : vector<1x16xf32> to vector<2x16xf32>
    %130 = arith.mulf %129, %112 : vector<2x16xf32>
    %131 = arith.addf %128, %130 : vector<2x16xf32>
    %132 = vector.extract_strided_slice %31 {offsets = [12, 0], sizes = [2, 16], strides = [1, 1]} : vector<16x16xf32> to vector<2x16xf32>
    %133 = arith.addf %131, %132 : vector<2x16xf32>
    %134 = vector.broadcast %32 : vector<1x16xf32> to vector<2x16xf32>
    %135 = arith.mulf %134, %126 : vector<2x16xf32>
    %136 = vector.broadcast %33 : vector<1x16xf32> to vector<2x16xf32>
    %137 = arith.mulf %136, %133 : vector<2x16xf32>
    %138 = arith.subf %135, %137 : vector<2x16xf32>
    %139 = vector.extract_strided_slice %30 {offsets = [14, 0], sizes = [2, 16], strides = [1, 1]} : vector<16x16xf32> to vector<2x16xf32>
    %140 = arith.addf %138, %139 : vector<2x16xf32>
    %141 = vector.broadcast %32 : vector<1x16xf32> to vector<2x16xf32>
    %142 = arith.mulf %141, %133 : vector<2x16xf32>
    %143 = vector.broadcast %33 : vector<1x16xf32> to vector<2x16xf32>
    %144 = arith.mulf %143, %126 : vector<2x16xf32>
    %145 = arith.addf %142, %144 : vector<2x16xf32>
    %146 = vector.extract_strided_slice %31 {offsets = [14, 0], sizes = [2, 16], strides = [1, 1]} : vector<16x16xf32> to vector<2x16xf32>
    %147 = arith.addf %145, %146 : vector<2x16xf32>
    %148 = tpu.concatenate %42, %56, %70, %84, %98, %112, %126, %140 in 0 : vector<2x16xf32>, vector<2x16xf32>, vector<2x16xf32>, vector<2x16xf32>, vector<2x16xf32>, vector<2x16xf32>, vector<2x16xf32>, vector<2x16xf32> -> vector<16x16xf32>
    %149 = tpu.concatenate %49, %63, %77, %91, %105, %119, %133, %147 in 0 : vector<2x16xf32>, vector<2x16xf32>, vector<2x16xf32>, vector<2x16xf32>, vector<2x16xf32>, vector<2x16xf32>, vector<2x16xf32>, vector<2x16xf32> -> vector<16x16xf32>
    %150 = tpu.concatenate %148, %149 in 1 : vector<16x16xf32>, vector<16x16xf32> -> vector<16x32xf32>
    %151 = arith.truncf %150 : vector<16x32xf32> to vector<16x32xbf16>
    %c0_20 = arith.constant 0 : index
    %c0_21 = arith.constant 0 : index
    %c0_22 = arith.constant 0 : index
    %152 = vector.load %arg7[%c0_20, %c0_21, %c0_22] : memref<3x32x32xbf16, #tpu.memory_space<vmem>>, vector<1x32x32xbf16>
    %153 = vector.shape_cast %152 : vector<1x32x32xbf16> to vector<32x32xbf16>
    %cst_23 = arith.constant dense<0.000000e+00> : vector<16x32xf32>
    %154 = tpu.matmul %151, %153, %cst_23 {dimension_numbers = #tpu.dot_dimension_numbers<[1], [0], [0], [1], [0, 0, 1, 1], [], []>} : vector<16x32xbf16>, vector<32x32xbf16>, vector<16x32xf32> -> vector<16x32xf32>
    %c0_24 = arith.constant 0 : index
    %c0_25 = arith.constant 0 : index
    %155 = vector.load %arg8[%c0_24, %c0_25] : memref<3x32xf32, #tpu.memory_space<vmem>>, vector<1x32xf32>
    %156 = vector.broadcast %155 : vector<1x32xf32> to vector<16x32xf32>
    %157 = arith.mulf %156, %25 : vector<16x32xf32>
    %158 = arith.addf %154, %157 : vector<16x32xf32>
    %cst_26 = arith.constant 5.000000e-01 : f32
    %159 = vector.broadcast %cst_26 : f32 to vector<16x32xf32>
    %160 = arith.mulf %159, %158 : vector<16x32xf32>
    %cst_27 = arith.constant 0.707106769 : f32
    %161 = vector.broadcast %cst_27 : f32 to vector<16x32xf32>
    %162 = arith.mulf %158, %161 : vector<16x32xf32>
    %cst_28 = arith.constant 0.000000e+00 : f32
    %163 = vector.broadcast %cst_28 : f32 to vector<16x32xf32>
    %164 = arith.cmpf oge, %162, %163 : vector<16x32xf32>
    %cst_29 = arith.constant 1.000000e+00 : f32
    %cst_30 = arith.constant -1.000000e+00 : f32
    %165 = vector.broadcast %cst_29 : f32 to vector<16x32xf32>
    %166 = vector.broadcast %cst_30 : f32 to vector<16x32xf32>
    %167 = arith.select %164, %165, %166 : vector<16x32xi1>, vector<16x32xf32>
    %168 = math.absf %162 : vector<16x32xf32>
    %cst_31 = arith.constant 0.327591091 : f32
    %169 = vector.broadcast %cst_31 : f32 to vector<16x32xf32>
    %170 = arith.mulf %169, %168 : vector<16x32xf32>
    %cst_32 = arith.constant 1.000000e+00 : f32
    %171 = vector.broadcast %cst_32 : f32 to vector<16x32xf32>
    %172 = arith.addf %171, %170 : vector<16x32xf32>
    %173 = tpu.reciprocal %172 {approx = true} : vector<16x32xf32> -> vector<16x32xf32>
    %cst_33 = arith.constant 1.06140542 : f32
    %174 = vector.broadcast %cst_33 : f32 to vector<16x32xf32>
    %175 = arith.mulf %174, %173 : vector<16x32xf32>
    %cst_34 = arith.constant -1.45315206 : f32
    %176 = vector.broadcast %cst_34 : f32 to vector<16x32xf32>
    %177 = arith.addf %175, %176 : vector<16x32xf32>
    %178 = arith.mulf %177, %173 : vector<16x32xf32>
    %cst_35 = arith.constant 1.42141378 : f32
    %179 = vector.broadcast %cst_35 : f32 to vector<16x32xf32>
    %180 = arith.addf %178, %179 : vector<16x32xf32>
    %181 = arith.mulf %180, %173 : vector<16x32xf32>
    %cst_36 = arith.constant -0.284496725 : f32
    %182 = vector.broadcast %cst_36 : f32 to vector<16x32xf32>
    %183 = arith.addf %181, %182 : vector<16x32xf32>
    %184 = arith.mulf %183, %173 : vector<16x32xf32>
    %cst_37 = arith.constant 0.254829586 : f32
    %185 = vector.broadcast %cst_37 : f32 to vector<16x32xf32>
    %186 = arith.addf %184, %185 : vector<16x32xf32>
    %187 = arith.mulf %186, %173 : vector<16x32xf32>
    %cst_38 = arith.constant 0.000000e+00 : f32
    %188 = vector.broadcast %cst_38 : f32 to vector<16x32xf32>
    %189 = arith.subf %188, %168 : vector<16x32xf32>
    %190 = arith.mulf %189, %168 : vector<16x32xf32>
    %191 = math.exp %190 : vector<16x32xf32>
    %192 = arith.mulf %187, %191 : vector<16x32xf32>
    %cst_39 = arith.constant 1.000000e+00 : f32
    %193 = vector.broadcast %cst_39 : f32 to vector<16x32xf32>
    %194 = arith.subf %193, %192 : vector<16x32xf32>
    %195 = arith.mulf %167, %194 : vector<16x32xf32>
    %cst_40 = arith.constant 1.000000e+00 : f32
    %196 = vector.broadcast %cst_40 : f32 to vector<16x32xf32>
    %197 = arith.addf %196, %195 : vector<16x32xf32>
    %198 = arith.mulf %160, %197 : vector<16x32xf32>
    %199 = arith.addf %198, %25 : vector<16x32xf32>
    %c0_41 = arith.constant 0 : index
    %c0_42 = arith.constant 0 : index
    %200 = vector.load %arg9[%c0_41, %c0_42] : memref<3x32xf32, #tpu.memory_space<vmem>>, vector<1x32xf32>
    %c0_43 = arith.constant 0 : index
    %c0_44 = arith.constant 0 : index
    %201 = vector.load %arg10[%c0_43, %c0_44] : memref<3x32xf32, #tpu.memory_space<vmem>>, vector<1x32xf32>
    %cst_45 = arith.constant dense<0.000000e+00> : vector<16xf32>
    %202 = vector.multi_reduction <add>, %199, %cst_45 [1] : vector<16x32xf32> to vector<16xf32>
    %203 = vector.shape_cast %202 : vector<16xf32> to vector<16x1xf32>
    %cst_46 = arith.constant 3.200000e+01 : f32
    %204 = vector.broadcast %cst_46 : f32 to vector<16x1xf32>
    %205 = arith.divf %203, %204 : vector<16x1xf32>
    %206 = vector.broadcast %205 : vector<16x1xf32> to vector<16x32xf32>
    %207 = arith.subf %199, %206 : vector<16x32xf32>
    %208 = arith.mulf %207, %207 : vector<16x32xf32>
    %cst_47 = arith.constant dense<0.000000e+00> : vector<16xf32>
    %209 = vector.multi_reduction <add>, %208, %cst_47 [1] : vector<16x32xf32> to vector<16xf32>
    %210 = vector.shape_cast %209 : vector<16xf32> to vector<16x1xf32>
    %cst_48 = arith.constant 3.200000e+01 : f32
    %211 = vector.broadcast %cst_48 : f32 to vector<16x1xf32>
    %212 = arith.divf %210, %211 : vector<16x1xf32>
    %213 = vector.broadcast %205 : vector<16x1xf32> to vector<16x32xf32>
    %214 = arith.subf %199, %213 : vector<16x32xf32>
    %cst_49 = arith.constant 9.99999974E-6 : f32
    %215 = vector.broadcast %cst_49 : f32 to vector<16x1xf32>
    %216 = arith.addf %212, %215 : vector<16x1xf32>
    %217 = math.rsqrt %216 : vector<16x1xf32>
    %218 = vector.broadcast %217 : vector<16x1xf32> to vector<16x32xf32>
    %219 = arith.mulf %214, %218 : vector<16x32xf32>
    %220 = vector.broadcast %200 : vector<1x32xf32> to vector<16x32xf32>
    %221 = arith.mulf %219, %220 : vector<16x32xf32>
    %222 = vector.broadcast %201 : vector<1x32xf32> to vector<16x32xf32>
    %223 = arith.addf %221, %222 : vector<16x32xf32>
    %224 = arith.truncf %223 : vector<16x32xf32> to vector<16x32xbf16>
    %c0_50 = arith.constant 0 : index
    %c0_51 = arith.constant 0 : index
    %c0_52 = arith.constant 0 : index
    %225 = vector.load %arg11[%c0_50, %c0_51, %c0_52] : memref<3x32x64xbf16, #tpu.memory_space<vmem>>, vector<1x32x64xbf16>
    %226 = vector.shape_cast %225 : vector<1x32x64xbf16> to vector<32x64xbf16>
    %cst_53 = arith.constant dense<0.000000e+00> : vector<16x64xf32>
    %227 = tpu.matmul %224, %226, %cst_53 {dimension_numbers = #tpu.dot_dimension_numbers<[1], [0], [0], [1], [0, 0, 1, 1], [], []>} : vector<16x32xbf16>, vector<32x64xbf16>, vector<16x64xf32> -> vector<16x64xf32>
    %228 = vector.extract_strided_slice %227 {offsets = [0, 0], sizes = [16, 32], strides = [1, 1]} : vector<16x64xf32> to vector<16x32xf32>
    %229 = vector.extract_strided_slice %227 {offsets = [0, 32], sizes = [16, 32], strides = [1, 1]} : vector<16x64xf32> to vector<16x32xf32>
    %cst_54 = arith.constant 5.000000e-01 : f32
    %230 = vector.broadcast %cst_54 : f32 to vector<16x32xf32>
    %231 = arith.mulf %230, %229 : vector<16x32xf32>
    %cst_55 = arith.constant 0.707106769 : f32
    %232 = vector.broadcast %cst_55 : f32 to vector<16x32xf32>
    %233 = arith.mulf %229, %232 : vector<16x32xf32>
    %cst_56 = arith.constant 0.000000e+00 : f32
    %234 = vector.broadcast %cst_56 : f32 to vector<16x32xf32>
    %235 = arith.cmpf oge, %233, %234 : vector<16x32xf32>
    %cst_57 = arith.constant 1.000000e+00 : f32
    %cst_58 = arith.constant -1.000000e+00 : f32
    %236 = vector.broadcast %cst_57 : f32 to vector<16x32xf32>
    %237 = vector.broadcast %cst_58 : f32 to vector<16x32xf32>
    %238 = arith.select %235, %236, %237 : vector<16x32xi1>, vector<16x32xf32>
    %239 = math.absf %233 : vector<16x32xf32>
    %cst_59 = arith.constant 0.327591091 : f32
    %240 = vector.broadcast %cst_59 : f32 to vector<16x32xf32>
    %241 = arith.mulf %240, %239 : vector<16x32xf32>
    %cst_60 = arith.constant 1.000000e+00 : f32
    %242 = vector.broadcast %cst_60 : f32 to vector<16x32xf32>
    %243 = arith.addf %242, %241 : vector<16x32xf32>
    %244 = tpu.reciprocal %243 {approx = true} : vector<16x32xf32> -> vector<16x32xf32>
    %cst_61 = arith.constant 1.06140542 : f32
    %245 = vector.broadcast %cst_61 : f32 to vector<16x32xf32>
    %246 = arith.mulf %245, %244 : vector<16x32xf32>
    %cst_62 = arith.constant -1.45315206 : f32
    %247 = vector.broadcast %cst_62 : f32 to vector<16x32xf32>
    %248 = arith.addf %246, %247 : vector<16x32xf32>
    %249 = arith.mulf %248, %244 : vector<16x32xf32>
    %cst_63 = arith.constant 1.42141378 : f32
    %250 = vector.broadcast %cst_63 : f32 to vector<16x32xf32>
    %251 = arith.addf %249, %250 : vector<16x32xf32>
    %252 = arith.mulf %251, %244 : vector<16x32xf32>
    %cst_64 = arith.constant -0.284496725 : f32
    %253 = vector.broadcast %cst_64 : f32 to vector<16x32xf32>
    %254 = arith.addf %252, %253 : vector<16x32xf32>
    %255 = arith.mulf %254, %244 : vector<16x32xf32>
    %cst_65 = arith.constant 0.254829586 : f32
    %256 = vector.broadcast %cst_65 : f32 to vector<16x32xf32>
    %257 = arith.addf %255, %256 : vector<16x32xf32>
    %258 = arith.mulf %257, %244 : vector<16x32xf32>
    %cst_66 = arith.constant 0.000000e+00 : f32
    %259 = vector.broadcast %cst_66 : f32 to vector<16x32xf32>
    %260 = arith.subf %259, %239 : vector<16x32xf32>
    %261 = arith.mulf %260, %239 : vector<16x32xf32>
    %262 = math.exp %261 : vector<16x32xf32>
    %263 = arith.mulf %258, %262 : vector<16x32xf32>
    %cst_67 = arith.constant 1.000000e+00 : f32
    %264 = vector.broadcast %cst_67 : f32 to vector<16x32xf32>
    %265 = arith.subf %264, %263 : vector<16x32xf32>
    %266 = arith.mulf %238, %265 : vector<16x32xf32>
    %cst_68 = arith.constant 1.000000e+00 : f32
    %267 = vector.broadcast %cst_68 : f32 to vector<16x32xf32>
    %268 = arith.addf %267, %266 : vector<16x32xf32>
    %269 = arith.mulf %231, %268 : vector<16x32xf32>
    %270 = arith.mulf %228, %269 : vector<16x32xf32>
    %271 = arith.truncf %270 : vector<16x32xf32> to vector<16x32xbf16>
    %c0_69 = arith.constant 0 : index
    %c0_70 = arith.constant 0 : index
    %c0_71 = arith.constant 0 : index
    %272 = vector.load %arg12[%c0_69, %c0_70, %c0_71] : memref<3x32x32xbf16, #tpu.memory_space<vmem>>, vector<1x32x32xbf16>
    %273 = vector.shape_cast %272 : vector<1x32x32xbf16> to vector<32x32xbf16>
    %cst_72 = arith.constant dense<0.000000e+00> : vector<16x32xf32>
    %274 = tpu.matmul %271, %273, %cst_72 {dimension_numbers = #tpu.dot_dimension_numbers<[1], [0], [0], [1], [0, 0, 1, 1], [], []>} : vector<16x32xbf16>, vector<32x32xbf16>, vector<16x32xf32> -> vector<16x32xf32>
    %275 = arith.addf %274, %223 : vector<16x32xf32>
    %c1 = arith.constant 1 : index
    %c0_73 = arith.constant 0 : index
    %276 = vector.load %arg2[%c1, %c0_73] : memref<3x32xf32, #tpu.memory_space<vmem>>, vector<1x32xf32>
    %c1_74 = arith.constant 1 : index
    %c0_75 = arith.constant 0 : index
    %277 = vector.load %arg3[%c1_74, %c0_75] : memref<3x32xf32, #tpu.memory_space<vmem>>, vector<1x32xf32>
    %cst_76 = arith.constant dense<0.000000e+00> : vector<16xf32>
    %278 = vector.multi_reduction <add>, %275, %cst_76 [1] : vector<16x32xf32> to vector<16xf32>
    %279 = vector.shape_cast %278 : vector<16xf32> to vector<16x1xf32>
    %cst_77 = arith.constant 3.200000e+01 : f32
    %280 = vector.broadcast %cst_77 : f32 to vector<16x1xf32>
    %281 = arith.divf %279, %280 : vector<16x1xf32>
    %282 = vector.broadcast %281 : vector<16x1xf32> to vector<16x32xf32>
    %283 = arith.subf %275, %282 : vector<16x32xf32>
    %284 = arith.mulf %283, %283 : vector<16x32xf32>
    %cst_78 = arith.constant dense<0.000000e+00> : vector<16xf32>
    %285 = vector.multi_reduction <add>, %284, %cst_78 [1] : vector<16x32xf32> to vector<16xf32>
    %286 = vector.shape_cast %285 : vector<16xf32> to vector<16x1xf32>
    %cst_79 = arith.constant 3.200000e+01 : f32
    %287 = vector.broadcast %cst_79 : f32 to vector<16x1xf32>
    %288 = arith.divf %286, %287 : vector<16x1xf32>
    %289 = vector.broadcast %281 : vector<16x1xf32> to vector<16x32xf32>
    %290 = arith.subf %275, %289 : vector<16x32xf32>
    %cst_80 = arith.constant 9.99999974E-6 : f32
    %291 = vector.broadcast %cst_80 : f32 to vector<16x1xf32>
    %292 = arith.addf %288, %291 : vector<16x1xf32>
    %293 = math.rsqrt %292 : vector<16x1xf32>
    %294 = vector.broadcast %293 : vector<16x1xf32> to vector<16x32xf32>
    %295 = arith.mulf %290, %294 : vector<16x32xf32>
    %296 = vector.broadcast %276 : vector<1x32xf32> to vector<16x32xf32>
    %297 = arith.mulf %295, %296 : vector<16x32xf32>
    %298 = vector.broadcast %277 : vector<1x32xf32> to vector<16x32xf32>
    %299 = arith.addf %297, %298 : vector<16x32xf32>
    %300 = arith.truncf %299 : vector<16x32xf32> to vector<16x32xbf16>
    %c1_81 = arith.constant 1 : index
    %c0_82 = arith.constant 0 : index
    %c0_83 = arith.constant 0 : index
    %301 = vector.load %arg6[%c1_81, %c0_82, %c0_83] : memref<3x32x32xbf16, #tpu.memory_space<vmem>>, vector<1x32x32xbf16>
    %302 = vector.shape_cast %301 : vector<1x32x32xbf16> to vector<32x32xbf16>
    %cst_84 = arith.constant dense<0.000000e+00> : vector<16x32xf32>
    %303 = tpu.matmul %300, %302, %cst_84 {dimension_numbers = #tpu.dot_dimension_numbers<[1], [0], [0], [1], [0, 0, 1, 1], [], []>} : vector<16x32xbf16>, vector<32x32xbf16>, vector<16x32xf32> -> vector<16x32xf32>
    %304 = vector.extract_strided_slice %303 {offsets = [0, 0], sizes = [16, 16], strides = [1, 1]} : vector<16x32xf32> to vector<16x16xf32>
    %305 = vector.extract_strided_slice %303 {offsets = [0, 16], sizes = [16, 16], strides = [1, 1]} : vector<16x32xf32> to vector<16x16xf32>
    %c1_85 = arith.constant 1 : index
    %c0_86 = arith.constant 0 : index
    %306 = vector.load %arg4[%c1_85, %c0_86] : memref<3x16xf32, #tpu.memory_space<vmem>>, vector<1x16xf32>
    %c1_87 = arith.constant 1 : index
    %c0_88 = arith.constant 0 : index
    %307 = vector.load %arg5[%c1_87, %c0_88] : memref<3x16xf32, #tpu.memory_space<vmem>>, vector<1x16xf32>
    %cst_89 = arith.constant 0.000000e+00 : f32
    %308 = vector.broadcast %cst_89 : f32 to vector<2x16xf32>
    %cst_90 = arith.constant 0.000000e+00 : f32
    %309 = vector.broadcast %cst_90 : f32 to vector<2x16xf32>
    %310 = vector.broadcast %306 : vector<1x16xf32> to vector<2x16xf32>
    %311 = arith.mulf %310, %308 : vector<2x16xf32>
    %312 = vector.broadcast %307 : vector<1x16xf32> to vector<2x16xf32>
    %313 = arith.mulf %312, %309 : vector<2x16xf32>
    %314 = arith.subf %311, %313 : vector<2x16xf32>
    %315 = vector.extract_strided_slice %304 {offsets = [0, 0], sizes = [2, 16], strides = [1, 1]} : vector<16x16xf32> to vector<2x16xf32>
    %316 = arith.addf %314, %315 : vector<2x16xf32>
    %317 = vector.broadcast %306 : vector<1x16xf32> to vector<2x16xf32>
    %318 = arith.mulf %317, %309 : vector<2x16xf32>
    %319 = vector.broadcast %307 : vector<1x16xf32> to vector<2x16xf32>
    %320 = arith.mulf %319, %308 : vector<2x16xf32>
    %321 = arith.addf %318, %320 : vector<2x16xf32>
    %322 = vector.extract_strided_slice %305 {offsets = [0, 0], sizes = [2, 16], strides = [1, 1]} : vector<16x16xf32> to vector<2x16xf32>
    %323 = arith.addf %321, %322 : vector<2x16xf32>
    %324 = vector.broadcast %306 : vector<1x16xf32> to vector<2x16xf32>
    %325 = arith.mulf %324, %316 : vector<2x16xf32>
    %326 = vector.broadcast %307 : vector<1x16xf32> to vector<2x16xf32>
    %327 = arith.mulf %326, %323 : vector<2x16xf32>
    %328 = arith.subf %325, %327 : vector<2x16xf32>
    %329 = vector.extract_strided_slice %304 {offsets = [2, 0], sizes = [2, 16], strides = [1, 1]} : vector<16x16xf32> to vector<2x16xf32>
    %330 = arith.addf %328, %329 : vector<2x16xf32>
    %331 = vector.broadcast %306 : vector<1x16xf32> to vector<2x16xf32>
    %332 = arith.mulf %331, %323 : vector<2x16xf32>
    %333 = vector.broadcast %307 : vector<1x16xf32> to vector<2x16xf32>
    %334 = arith.mulf %333, %316 : vector<2x16xf32>
    %335 = arith.addf %332, %334 : vector<2x16xf32>
    %336 = vector.extract_strided_slice %305 {offsets = [2, 0], sizes = [2, 16], strides = [1, 1]} : vector<16x16xf32> to vector<2x16xf32>
    %337 = arith.addf %335, %336 : vector<2x16xf32>
    %338 = vector.broadcast %306 : vector<1x16xf32> to vector<2x16xf32>
    %339 = arith.mulf %338, %330 : vector<2x16xf32>
    %340 = vector.broadcast %307 : vector<1x16xf32> to vector<2x16xf32>
    %341 = arith.mulf %340, %337 : vector<2x16xf32>
    %342 = arith.subf %339, %341 : vector<2x16xf32>
    %343 = vector.extract_strided_slice %304 {offsets = [4, 0], sizes = [2, 16], strides = [1, 1]} : vector<16x16xf32> to vector<2x16xf32>
    %344 = arith.addf %342, %343 : vector<2x16xf32>
    %345 = vector.broadcast %306 : vector<1x16xf32> to vector<2x16xf32>
    %346 = arith.mulf %345, %337 : vector<2x16xf32>
    %347 = vector.broadcast %307 : vector<1x16xf32> to vector<2x16xf32>
    %348 = arith.mulf %347, %330 : vector<2x16xf32>
    %349 = arith.addf %346, %348 : vector<2x16xf32>
    %350 = vector.extract_strided_slice %305 {offsets = [4, 0], sizes = [2, 16], strides = [1, 1]} : vector<16x16xf32> to vector<2x16xf32>
    %351 = arith.addf %349, %350 : vector<2x16xf32>
    %352 = vector.broadcast %306 : vector<1x16xf32> to vector<2x16xf32>
    %353 = arith.mulf %352, %344 : vector<2x16xf32>
    %354 = vector.broadcast %307 : vector<1x16xf32> to vector<2x16xf32>
    %355 = arith.mulf %354, %351 : vector<2x16xf32>
    %356 = arith.subf %353, %355 : vector<2x16xf32>
    %357 = vector.extract_strided_slice %304 {offsets = [6, 0], sizes = [2, 16], strides = [1, 1]} : vector<16x16xf32> to vector<2x16xf32>
    %358 = arith.addf %356, %357 : vector<2x16xf32>
    %359 = vector.broadcast %306 : vector<1x16xf32> to vector<2x16xf32>
    %360 = arith.mulf %359, %351 : vector<2x16xf32>
    %361 = vector.broadcast %307 : vector<1x16xf32> to vector<2x16xf32>
    %362 = arith.mulf %361, %344 : vector<2x16xf32>
    %363 = arith.addf %360, %362 : vector<2x16xf32>
    %364 = vector.extract_strided_slice %305 {offsets = [6, 0], sizes = [2, 16], strides = [1, 1]} : vector<16x16xf32> to vector<2x16xf32>
    %365 = arith.addf %363, %364 : vector<2x16xf32>
    %366 = vector.broadcast %306 : vector<1x16xf32> to vector<2x16xf32>
    %367 = arith.mulf %366, %358 : vector<2x16xf32>
    %368 = vector.broadcast %307 : vector<1x16xf32> to vector<2x16xf32>
    %369 = arith.mulf %368, %365 : vector<2x16xf32>
    %370 = arith.subf %367, %369 : vector<2x16xf32>
    %371 = vector.extract_strided_slice %304 {offsets = [8, 0], sizes = [2, 16], strides = [1, 1]} : vector<16x16xf32> to vector<2x16xf32>
    %372 = arith.addf %370, %371 : vector<2x16xf32>
    %373 = vector.broadcast %306 : vector<1x16xf32> to vector<2x16xf32>
    %374 = arith.mulf %373, %365 : vector<2x16xf32>
    %375 = vector.broadcast %307 : vector<1x16xf32> to vector<2x16xf32>
    %376 = arith.mulf %375, %358 : vector<2x16xf32>
    %377 = arith.addf %374, %376 : vector<2x16xf32>
    %378 = vector.extract_strided_slice %305 {offsets = [8, 0], sizes = [2, 16], strides = [1, 1]} : vector<16x16xf32> to vector<2x16xf32>
    %379 = arith.addf %377, %378 : vector<2x16xf32>
    %380 = vector.broadcast %306 : vector<1x16xf32> to vector<2x16xf32>
    %381 = arith.mulf %380, %372 : vector<2x16xf32>
    %382 = vector.broadcast %307 : vector<1x16xf32> to vector<2x16xf32>
    %383 = arith.mulf %382, %379 : vector<2x16xf32>
    %384 = arith.subf %381, %383 : vector<2x16xf32>
    %385 = vector.extract_strided_slice %304 {offsets = [10, 0], sizes = [2, 16], strides = [1, 1]} : vector<16x16xf32> to vector<2x16xf32>
    %386 = arith.addf %384, %385 : vector<2x16xf32>
    %387 = vector.broadcast %306 : vector<1x16xf32> to vector<2x16xf32>
    %388 = arith.mulf %387, %379 : vector<2x16xf32>
    %389 = vector.broadcast %307 : vector<1x16xf32> to vector<2x16xf32>
    %390 = arith.mulf %389, %372 : vector<2x16xf32>
    %391 = arith.addf %388, %390 : vector<2x16xf32>
    %392 = vector.extract_strided_slice %305 {offsets = [10, 0], sizes = [2, 16], strides = [1, 1]} : vector<16x16xf32> to vector<2x16xf32>
    %393 = arith.addf %391, %392 : vector<2x16xf32>
    %394 = vector.broadcast %306 : vector<1x16xf32> to vector<2x16xf32>
    %395 = arith.mulf %394, %386 : vector<2x16xf32>
    %396 = vector.broadcast %307 : vector<1x16xf32> to vector<2x16xf32>
    %397 = arith.mulf %396, %393 : vector<2x16xf32>
    %398 = arith.subf %395, %397 : vector<2x16xf32>
    %399 = vector.extract_strided_slice %304 {offsets = [12, 0], sizes = [2, 16], strides = [1, 1]} : vector<16x16xf32> to vector<2x16xf32>
    %400 = arith.addf %398, %399 : vector<2x16xf32>
    %401 = vector.broadcast %306 : vector<1x16xf32> to vector<2x16xf32>
    %402 = arith.mulf %401, %393 : vector<2x16xf32>
    %403 = vector.broadcast %307 : vector<1x16xf32> to vector<2x16xf32>
    %404 = arith.mulf %403, %386 : vector<2x16xf32>
    %405 = arith.addf %402, %404 : vector<2x16xf32>
    %406 = vector.extract_strided_slice %305 {offsets = [12, 0], sizes = [2, 16], strides = [1, 1]} : vector<16x16xf32> to vector<2x16xf32>
    %407 = arith.addf %405, %406 : vector<2x16xf32>
    %408 = vector.broadcast %306 : vector<1x16xf32> to vector<2x16xf32>
    %409 = arith.mulf %408, %400 : vector<2x16xf32>
    %410 = vector.broadcast %307 : vector<1x16xf32> to vector<2x16xf32>
    %411 = arith.mulf %410, %407 : vector<2x16xf32>
    %412 = arith.subf %409, %411 : vector<2x16xf32>
    %413 = vector.extract_strided_slice %304 {offsets = [14, 0], sizes = [2, 16], strides = [1, 1]} : vector<16x16xf32> to vector<2x16xf32>
    %414 = arith.addf %412, %413 : vector<2x16xf32>
    %415 = vector.broadcast %306 : vector<1x16xf32> to vector<2x16xf32>
    %416 = arith.mulf %415, %407 : vector<2x16xf32>
    %417 = vector.broadcast %307 : vector<1x16xf32> to vector<2x16xf32>
    %418 = arith.mulf %417, %400 : vector<2x16xf32>
    %419 = arith.addf %416, %418 : vector<2x16xf32>
    %420 = vector.extract_strided_slice %305 {offsets = [14, 0], sizes = [2, 16], strides = [1, 1]} : vector<16x16xf32> to vector<2x16xf32>
    %421 = arith.addf %419, %420 : vector<2x16xf32>
    %422 = tpu.concatenate %316, %330, %344, %358, %372, %386, %400, %414 in 0 : vector<2x16xf32>, vector<2x16xf32>, vector<2x16xf32>, vector<2x16xf32>, vector<2x16xf32>, vector<2x16xf32>, vector<2x16xf32>, vector<2x16xf32> -> vector<16x16xf32>
    %423 = tpu.concatenate %323, %337, %351, %365, %379, %393, %407, %421 in 0 : vector<2x16xf32>, vector<2x16xf32>, vector<2x16xf32>, vector<2x16xf32>, vector<2x16xf32>, vector<2x16xf32>, vector<2x16xf32>, vector<2x16xf32> -> vector<16x16xf32>
    %424 = tpu.concatenate %422, %423 in 1 : vector<16x16xf32>, vector<16x16xf32> -> vector<16x32xf32>
    %425 = arith.truncf %424 : vector<16x32xf32> to vector<16x32xbf16>
    %c1_91 = arith.constant 1 : index
    %c0_92 = arith.constant 0 : index
    %c0_93 = arith.constant 0 : index
    %426 = vector.load %arg7[%c1_91, %c0_92, %c0_93] : memref<3x32x32xbf16, #tpu.memory_space<vmem>>, vector<1x32x32xbf16>
    %427 = vector.shape_cast %426 : vector<1x32x32xbf16> to vector<32x32xbf16>
    %cst_94 = arith.constant dense<0.000000e+00> : vector<16x32xf32>
    %428 = tpu.matmul %425, %427, %cst_94 {dimension_numbers = #tpu.dot_dimension_numbers<[1], [0], [0], [1], [0, 0, 1, 1], [], []>} : vector<16x32xbf16>, vector<32x32xbf16>, vector<16x32xf32> -> vector<16x32xf32>
    %c1_95 = arith.constant 1 : index
    %c0_96 = arith.constant 0 : index
    %429 = vector.load %arg8[%c1_95, %c0_96] : memref<3x32xf32, #tpu.memory_space<vmem>>, vector<1x32xf32>
    %430 = vector.broadcast %429 : vector<1x32xf32> to vector<16x32xf32>
    %431 = arith.mulf %430, %299 : vector<16x32xf32>
    %432 = arith.addf %428, %431 : vector<16x32xf32>
    %cst_97 = arith.constant 5.000000e-01 : f32
    %433 = vector.broadcast %cst_97 : f32 to vector<16x32xf32>
    %434 = arith.mulf %433, %432 : vector<16x32xf32>
    %cst_98 = arith.constant 0.707106769 : f32
    %435 = vector.broadcast %cst_98 : f32 to vector<16x32xf32>
    %436 = arith.mulf %432, %435 : vector<16x32xf32>
    %cst_99 = arith.constant 0.000000e+00 : f32
    %437 = vector.broadcast %cst_99 : f32 to vector<16x32xf32>
    %438 = arith.cmpf oge, %436, %437 : vector<16x32xf32>
    %cst_100 = arith.constant 1.000000e+00 : f32
    %cst_101 = arith.constant -1.000000e+00 : f32
    %439 = vector.broadcast %cst_100 : f32 to vector<16x32xf32>
    %440 = vector.broadcast %cst_101 : f32 to vector<16x32xf32>
    %441 = arith.select %438, %439, %440 : vector<16x32xi1>, vector<16x32xf32>
    %442 = math.absf %436 : vector<16x32xf32>
    %cst_102 = arith.constant 0.327591091 : f32
    %443 = vector.broadcast %cst_102 : f32 to vector<16x32xf32>
    %444 = arith.mulf %443, %442 : vector<16x32xf32>
    %cst_103 = arith.constant 1.000000e+00 : f32
    %445 = vector.broadcast %cst_103 : f32 to vector<16x32xf32>
    %446 = arith.addf %445, %444 : vector<16x32xf32>
    %447 = tpu.reciprocal %446 {approx = true} : vector<16x32xf32> -> vector<16x32xf32>
    %cst_104 = arith.constant 1.06140542 : f32
    %448 = vector.broadcast %cst_104 : f32 to vector<16x32xf32>
    %449 = arith.mulf %448, %447 : vector<16x32xf32>
    %cst_105 = arith.constant -1.45315206 : f32
    %450 = vector.broadcast %cst_105 : f32 to vector<16x32xf32>
    %451 = arith.addf %449, %450 : vector<16x32xf32>
    %452 = arith.mulf %451, %447 : vector<16x32xf32>
    %cst_106 = arith.constant 1.42141378 : f32
    %453 = vector.broadcast %cst_106 : f32 to vector<16x32xf32>
    %454 = arith.addf %452, %453 : vector<16x32xf32>
    %455 = arith.mulf %454, %447 : vector<16x32xf32>
    %cst_107 = arith.constant -0.284496725 : f32
    %456 = vector.broadcast %cst_107 : f32 to vector<16x32xf32>
    %457 = arith.addf %455, %456 : vector<16x32xf32>
    %458 = arith.mulf %457, %447 : vector<16x32xf32>
    %cst_108 = arith.constant 0.254829586 : f32
    %459 = vector.broadcast %cst_108 : f32 to vector<16x32xf32>
    %460 = arith.addf %458, %459 : vector<16x32xf32>
    %461 = arith.mulf %460, %447 : vector<16x32xf32>
    %cst_109 = arith.constant 0.000000e+00 : f32
    %462 = vector.broadcast %cst_109 : f32 to vector<16x32xf32>
    %463 = arith.subf %462, %442 : vector<16x32xf32>
    %464 = arith.mulf %463, %442 : vector<16x32xf32>
    %465 = math.exp %464 : vector<16x32xf32>
    %466 = arith.mulf %461, %465 : vector<16x32xf32>
    %cst_110 = arith.constant 1.000000e+00 : f32
    %467 = vector.broadcast %cst_110 : f32 to vector<16x32xf32>
    %468 = arith.subf %467, %466 : vector<16x32xf32>
    %469 = arith.mulf %441, %468 : vector<16x32xf32>
    %cst_111 = arith.constant 1.000000e+00 : f32
    %470 = vector.broadcast %cst_111 : f32 to vector<16x32xf32>
    %471 = arith.addf %470, %469 : vector<16x32xf32>
    %472 = arith.mulf %434, %471 : vector<16x32xf32>
    %473 = arith.addf %472, %299 : vector<16x32xf32>
    %c1_112 = arith.constant 1 : index
    %c0_113 = arith.constant 0 : index
    %474 = vector.load %arg9[%c1_112, %c0_113] : memref<3x32xf32, #tpu.memory_space<vmem>>, vector<1x32xf32>
    %c1_114 = arith.constant 1 : index
    %c0_115 = arith.constant 0 : index
    %475 = vector.load %arg10[%c1_114, %c0_115] : memref<3x32xf32, #tpu.memory_space<vmem>>, vector<1x32xf32>
    %cst_116 = arith.constant dense<0.000000e+00> : vector<16xf32>
    %476 = vector.multi_reduction <add>, %473, %cst_116 [1] : vector<16x32xf32> to vector<16xf32>
    %477 = vector.shape_cast %476 : vector<16xf32> to vector<16x1xf32>
    %cst_117 = arith.constant 3.200000e+01 : f32
    %478 = vector.broadcast %cst_117 : f32 to vector<16x1xf32>
    %479 = arith.divf %477, %478 : vector<16x1xf32>
    %480 = vector.broadcast %479 : vector<16x1xf32> to vector<16x32xf32>
    %481 = arith.subf %473, %480 : vector<16x32xf32>
    %482 = arith.mulf %481, %481 : vector<16x32xf32>
    %cst_118 = arith.constant dense<0.000000e+00> : vector<16xf32>
    %483 = vector.multi_reduction <add>, %482, %cst_118 [1] : vector<16x32xf32> to vector<16xf32>
    %484 = vector.shape_cast %483 : vector<16xf32> to vector<16x1xf32>
    %cst_119 = arith.constant 3.200000e+01 : f32
    %485 = vector.broadcast %cst_119 : f32 to vector<16x1xf32>
    %486 = arith.divf %484, %485 : vector<16x1xf32>
    %487 = vector.broadcast %479 : vector<16x1xf32> to vector<16x32xf32>
    %488 = arith.subf %473, %487 : vector<16x32xf32>
    %cst_120 = arith.constant 9.99999974E-6 : f32
    %489 = vector.broadcast %cst_120 : f32 to vector<16x1xf32>
    %490 = arith.addf %486, %489 : vector<16x1xf32>
    %491 = math.rsqrt %490 : vector<16x1xf32>
    %492 = vector.broadcast %491 : vector<16x1xf32> to vector<16x32xf32>
    %493 = arith.mulf %488, %492 : vector<16x32xf32>
    %494 = vector.broadcast %474 : vector<1x32xf32> to vector<16x32xf32>
    %495 = arith.mulf %493, %494 : vector<16x32xf32>
    %496 = vector.broadcast %475 : vector<1x32xf32> to vector<16x32xf32>
    %497 = arith.addf %495, %496 : vector<16x32xf32>
    %498 = arith.truncf %497 : vector<16x32xf32> to vector<16x32xbf16>
    %c1_121 = arith.constant 1 : index
    %c0_122 = arith.constant 0 : index
    %c0_123 = arith.constant 0 : index
    %499 = vector.load %arg11[%c1_121, %c0_122, %c0_123] : memref<3x32x64xbf16, #tpu.memory_space<vmem>>, vector<1x32x64xbf16>
    %500 = vector.shape_cast %499 : vector<1x32x64xbf16> to vector<32x64xbf16>
    %cst_124 = arith.constant dense<0.000000e+00> : vector<16x64xf32>
    %501 = tpu.matmul %498, %500, %cst_124 {dimension_numbers = #tpu.dot_dimension_numbers<[1], [0], [0], [1], [0, 0, 1, 1], [], []>} : vector<16x32xbf16>, vector<32x64xbf16>, vector<16x64xf32> -> vector<16x64xf32>
    %502 = vector.extract_strided_slice %501 {offsets = [0, 0], sizes = [16, 32], strides = [1, 1]} : vector<16x64xf32> to vector<16x32xf32>
    %503 = vector.extract_strided_slice %501 {offsets = [0, 32], sizes = [16, 32], strides = [1, 1]} : vector<16x64xf32> to vector<16x32xf32>
    %cst_125 = arith.constant 5.000000e-01 : f32
    %504 = vector.broadcast %cst_125 : f32 to vector<16x32xf32>
    %505 = arith.mulf %504, %503 : vector<16x32xf32>
    %cst_126 = arith.constant 0.707106769 : f32
    %506 = vector.broadcast %cst_126 : f32 to vector<16x32xf32>
    %507 = arith.mulf %503, %506 : vector<16x32xf32>
    %cst_127 = arith.constant 0.000000e+00 : f32
    %508 = vector.broadcast %cst_127 : f32 to vector<16x32xf32>
    %509 = arith.cmpf oge, %507, %508 : vector<16x32xf32>
    %cst_128 = arith.constant 1.000000e+00 : f32
    %cst_129 = arith.constant -1.000000e+00 : f32
    %510 = vector.broadcast %cst_128 : f32 to vector<16x32xf32>
    %511 = vector.broadcast %cst_129 : f32 to vector<16x32xf32>
    %512 = arith.select %509, %510, %511 : vector<16x32xi1>, vector<16x32xf32>
    %513 = math.absf %507 : vector<16x32xf32>
    %cst_130 = arith.constant 0.327591091 : f32
    %514 = vector.broadcast %cst_130 : f32 to vector<16x32xf32>
    %515 = arith.mulf %514, %513 : vector<16x32xf32>
    %cst_131 = arith.constant 1.000000e+00 : f32
    %516 = vector.broadcast %cst_131 : f32 to vector<16x32xf32>
    %517 = arith.addf %516, %515 : vector<16x32xf32>
    %518 = tpu.reciprocal %517 {approx = true} : vector<16x32xf32> -> vector<16x32xf32>
    %cst_132 = arith.constant 1.06140542 : f32
    %519 = vector.broadcast %cst_132 : f32 to vector<16x32xf32>
    %520 = arith.mulf %519, %518 : vector<16x32xf32>
    %cst_133 = arith.constant -1.45315206 : f32
    %521 = vector.broadcast %cst_133 : f32 to vector<16x32xf32>
    %522 = arith.addf %520, %521 : vector<16x32xf32>
    %523 = arith.mulf %522, %518 : vector<16x32xf32>
    %cst_134 = arith.constant 1.42141378 : f32
    %524 = vector.broadcast %cst_134 : f32 to vector<16x32xf32>
    %525 = arith.addf %523, %524 : vector<16x32xf32>
    %526 = arith.mulf %525, %518 : vector<16x32xf32>
    %cst_135 = arith.constant -0.284496725 : f32
    %527 = vector.broadcast %cst_135 : f32 to vector<16x32xf32>
    %528 = arith.addf %526, %527 : vector<16x32xf32>
    %529 = arith.mulf %528, %518 : vector<16x32xf32>
    %cst_136 = arith.constant 0.254829586 : f32
    %530 = vector.broadcast %cst_136 : f32 to vector<16x32xf32>
    %531 = arith.addf %529, %530 : vector<16x32xf32>
    %532 = arith.mulf %531, %518 : vector<16x32xf32>
    %cst_137 = arith.constant 0.000000e+00 : f32
    %533 = vector.broadcast %cst_137 : f32 to vector<16x32xf32>
    %534 = arith.subf %533, %513 : vector<16x32xf32>
    %535 = arith.mulf %534, %513 : vector<16x32xf32>
    %536 = math.exp %535 : vector<16x32xf32>
    %537 = arith.mulf %532, %536 : vector<16x32xf32>
    %cst_138 = arith.constant 1.000000e+00 : f32
    %538 = vector.broadcast %cst_138 : f32 to vector<16x32xf32>
    %539 = arith.subf %538, %537 : vector<16x32xf32>
    %540 = arith.mulf %512, %539 : vector<16x32xf32>
    %cst_139 = arith.constant 1.000000e+00 : f32
    %541 = vector.broadcast %cst_139 : f32 to vector<16x32xf32>
    %542 = arith.addf %541, %540 : vector<16x32xf32>
    %543 = arith.mulf %505, %542 : vector<16x32xf32>
    %544 = arith.mulf %502, %543 : vector<16x32xf32>
    %545 = arith.truncf %544 : vector<16x32xf32> to vector<16x32xbf16>
    %c1_140 = arith.constant 1 : index
    %c0_141 = arith.constant 0 : index
    %c0_142 = arith.constant 0 : index
    %546 = vector.load %arg12[%c1_140, %c0_141, %c0_142] : memref<3x32x32xbf16, #tpu.memory_space<vmem>>, vector<1x32x32xbf16>
    %547 = vector.shape_cast %546 : vector<1x32x32xbf16> to vector<32x32xbf16>
    %cst_143 = arith.constant dense<0.000000e+00> : vector<16x32xf32>
    %548 = tpu.matmul %545, %547, %cst_143 {dimension_numbers = #tpu.dot_dimension_numbers<[1], [0], [0], [1], [0, 0, 1, 1], [], []>} : vector<16x32xbf16>, vector<32x32xbf16>, vector<16x32xf32> -> vector<16x32xf32>
    %549 = arith.addf %548, %497 : vector<16x32xf32>
    %c2 = arith.constant 2 : index
    %c0_144 = arith.constant 0 : index
    %550 = vector.load %arg2[%c2, %c0_144] : memref<3x32xf32, #tpu.memory_space<vmem>>, vector<1x32xf32>
    %c2_145 = arith.constant 2 : index
    %c0_146 = arith.constant 0 : index
    %551 = vector.load %arg3[%c2_145, %c0_146] : memref<3x32xf32, #tpu.memory_space<vmem>>, vector<1x32xf32>
    %cst_147 = arith.constant dense<0.000000e+00> : vector<16xf32>
    %552 = vector.multi_reduction <add>, %549, %cst_147 [1] : vector<16x32xf32> to vector<16xf32>
    %553 = vector.shape_cast %552 : vector<16xf32> to vector<16x1xf32>
    %cst_148 = arith.constant 3.200000e+01 : f32
    %554 = vector.broadcast %cst_148 : f32 to vector<16x1xf32>
    %555 = arith.divf %553, %554 : vector<16x1xf32>
    %556 = vector.broadcast %555 : vector<16x1xf32> to vector<16x32xf32>
    %557 = arith.subf %549, %556 : vector<16x32xf32>
    %558 = arith.mulf %557, %557 : vector<16x32xf32>
    %cst_149 = arith.constant dense<0.000000e+00> : vector<16xf32>
    %559 = vector.multi_reduction <add>, %558, %cst_149 [1] : vector<16x32xf32> to vector<16xf32>
    %560 = vector.shape_cast %559 : vector<16xf32> to vector<16x1xf32>
    %cst_150 = arith.constant 3.200000e+01 : f32
    %561 = vector.broadcast %cst_150 : f32 to vector<16x1xf32>
    %562 = arith.divf %560, %561 : vector<16x1xf32>
    %563 = vector.broadcast %555 : vector<16x1xf32> to vector<16x32xf32>
    %564 = arith.subf %549, %563 : vector<16x32xf32>
    %cst_151 = arith.constant 9.99999974E-6 : f32
    %565 = vector.broadcast %cst_151 : f32 to vector<16x1xf32>
    %566 = arith.addf %562, %565 : vector<16x1xf32>
    %567 = math.rsqrt %566 : vector<16x1xf32>
    %568 = vector.broadcast %567 : vector<16x1xf32> to vector<16x32xf32>
    %569 = arith.mulf %564, %568 : vector<16x32xf32>
    %570 = vector.broadcast %550 : vector<1x32xf32> to vector<16x32xf32>
    %571 = arith.mulf %569, %570 : vector<16x32xf32>
    %572 = vector.broadcast %551 : vector<1x32xf32> to vector<16x32xf32>
    %573 = arith.addf %571, %572 : vector<16x32xf32>
    %574 = arith.truncf %573 : vector<16x32xf32> to vector<16x32xbf16>
    %c2_152 = arith.constant 2 : index
    %c0_153 = arith.constant 0 : index
    %c0_154 = arith.constant 0 : index
    %575 = vector.load %arg6[%c2_152, %c0_153, %c0_154] : memref<3x32x32xbf16, #tpu.memory_space<vmem>>, vector<1x32x32xbf16>
    %576 = vector.shape_cast %575 : vector<1x32x32xbf16> to vector<32x32xbf16>
    %cst_155 = arith.constant dense<0.000000e+00> : vector<16x32xf32>
    %577 = tpu.matmul %574, %576, %cst_155 {dimension_numbers = #tpu.dot_dimension_numbers<[1], [0], [0], [1], [0, 0, 1, 1], [], []>} : vector<16x32xbf16>, vector<32x32xbf16>, vector<16x32xf32> -> vector<16x32xf32>
    %578 = vector.extract_strided_slice %577 {offsets = [0, 0], sizes = [16, 16], strides = [1, 1]} : vector<16x32xf32> to vector<16x16xf32>
    %579 = vector.extract_strided_slice %577 {offsets = [0, 16], sizes = [16, 16], strides = [1, 1]} : vector<16x32xf32> to vector<16x16xf32>
    %c2_156 = arith.constant 2 : index
    %c0_157 = arith.constant 0 : index
    %580 = vector.load %arg4[%c2_156, %c0_157] : memref<3x16xf32, #tpu.memory_space<vmem>>, vector<1x16xf32>
    %c2_158 = arith.constant 2 : index
    %c0_159 = arith.constant 0 : index
    %581 = vector.load %arg5[%c2_158, %c0_159] : memref<3x16xf32, #tpu.memory_space<vmem>>, vector<1x16xf32>
    %cst_160 = arith.constant 0.000000e+00 : f32
    %582 = vector.broadcast %cst_160 : f32 to vector<2x16xf32>
    %cst_161 = arith.constant 0.000000e+00 : f32
    %583 = vector.broadcast %cst_161 : f32 to vector<2x16xf32>
    %584 = vector.broadcast %580 : vector<1x16xf32> to vector<2x16xf32>
    %585 = arith.mulf %584, %582 : vector<2x16xf32>
    %586 = vector.broadcast %581 : vector<1x16xf32> to vector<2x16xf32>
    %587 = arith.mulf %586, %583 : vector<2x16xf32>
    %588 = arith.subf %585, %587 : vector<2x16xf32>
    %589 = vector.extract_strided_slice %578 {offsets = [0, 0], sizes = [2, 16], strides = [1, 1]} : vector<16x16xf32> to vector<2x16xf32>
    %590 = arith.addf %588, %589 : vector<2x16xf32>
    %591 = vector.broadcast %580 : vector<1x16xf32> to vector<2x16xf32>
    %592 = arith.mulf %591, %583 : vector<2x16xf32>
    %593 = vector.broadcast %581 : vector<1x16xf32> to vector<2x16xf32>
    %594 = arith.mulf %593, %582 : vector<2x16xf32>
    %595 = arith.addf %592, %594 : vector<2x16xf32>
    %596 = vector.extract_strided_slice %579 {offsets = [0, 0], sizes = [2, 16], strides = [1, 1]} : vector<16x16xf32> to vector<2x16xf32>
    %597 = arith.addf %595, %596 : vector<2x16xf32>
    %598 = vector.broadcast %580 : vector<1x16xf32> to vector<2x16xf32>
    %599 = arith.mulf %598, %590 : vector<2x16xf32>
    %600 = vector.broadcast %581 : vector<1x16xf32> to vector<2x16xf32>
    %601 = arith.mulf %600, %597 : vector<2x16xf32>
    %602 = arith.subf %599, %601 : vector<2x16xf32>
    %603 = vector.extract_strided_slice %578 {offsets = [2, 0], sizes = [2, 16], strides = [1, 1]} : vector<16x16xf32> to vector<2x16xf32>
    %604 = arith.addf %602, %603 : vector<2x16xf32>
    %605 = vector.broadcast %580 : vector<1x16xf32> to vector<2x16xf32>
    %606 = arith.mulf %605, %597 : vector<2x16xf32>
    %607 = vector.broadcast %581 : vector<1x16xf32> to vector<2x16xf32>
    %608 = arith.mulf %607, %590 : vector<2x16xf32>
    %609 = arith.addf %606, %608 : vector<2x16xf32>
    %610 = vector.extract_strided_slice %579 {offsets = [2, 0], sizes = [2, 16], strides = [1, 1]} : vector<16x16xf32> to vector<2x16xf32>
    %611 = arith.addf %609, %610 : vector<2x16xf32>
    %612 = vector.broadcast %580 : vector<1x16xf32> to vector<2x16xf32>
    %613 = arith.mulf %612, %604 : vector<2x16xf32>
    %614 = vector.broadcast %581 : vector<1x16xf32> to vector<2x16xf32>
    %615 = arith.mulf %614, %611 : vector<2x16xf32>
    %616 = arith.subf %613, %615 : vector<2x16xf32>
    %617 = vector.extract_strided_slice %578 {offsets = [4, 0], sizes = [2, 16], strides = [1, 1]} : vector<16x16xf32> to vector<2x16xf32>
    %618 = arith.addf %616, %617 : vector<2x16xf32>
    %619 = vector.broadcast %580 : vector<1x16xf32> to vector<2x16xf32>
    %620 = arith.mulf %619, %611 : vector<2x16xf32>
    %621 = vector.broadcast %581 : vector<1x16xf32> to vector<2x16xf32>
    %622 = arith.mulf %621, %604 : vector<2x16xf32>
    %623 = arith.addf %620, %622 : vector<2x16xf32>
    %624 = vector.extract_strided_slice %579 {offsets = [4, 0], sizes = [2, 16], strides = [1, 1]} : vector<16x16xf32> to vector<2x16xf32>
    %625 = arith.addf %623, %624 : vector<2x16xf32>
    %626 = vector.broadcast %580 : vector<1x16xf32> to vector<2x16xf32>
    %627 = arith.mulf %626, %618 : vector<2x16xf32>
    %628 = vector.broadcast %581 : vector<1x16xf32> to vector<2x16xf32>
    %629 = arith.mulf %628, %625 : vector<2x16xf32>
    %630 = arith.subf %627, %629 : vector<2x16xf32>
    %631 = vector.extract_strided_slice %578 {offsets = [6, 0], sizes = [2, 16], strides = [1, 1]} : vector<16x16xf32> to vector<2x16xf32>
    %632 = arith.addf %630, %631 : vector<2x16xf32>
    %633 = vector.broadcast %580 : vector<1x16xf32> to vector<2x16xf32>
    %634 = arith.mulf %633, %625 : vector<2x16xf32>
    %635 = vector.broadcast %581 : vector<1x16xf32> to vector<2x16xf32>
    %636 = arith.mulf %635, %618 : vector<2x16xf32>
    %637 = arith.addf %634, %636 : vector<2x16xf32>
    %638 = vector.extract_strided_slice %579 {offsets = [6, 0], sizes = [2, 16], strides = [1, 1]} : vector<16x16xf32> to vector<2x16xf32>
    %639 = arith.addf %637, %638 : vector<2x16xf32>
    %640 = vector.broadcast %580 : vector<1x16xf32> to vector<2x16xf32>
    %641 = arith.mulf %640, %632 : vector<2x16xf32>
    %642 = vector.broadcast %581 : vector<1x16xf32> to vector<2x16xf32>
    %643 = arith.mulf %642, %639 : vector<2x16xf32>
    %644 = arith.subf %641, %643 : vector<2x16xf32>
    %645 = vector.extract_strided_slice %578 {offsets = [8, 0], sizes = [2, 16], strides = [1, 1]} : vector<16x16xf32> to vector<2x16xf32>
    %646 = arith.addf %644, %645 : vector<2x16xf32>
    %647 = vector.broadcast %580 : vector<1x16xf32> to vector<2x16xf32>
    %648 = arith.mulf %647, %639 : vector<2x16xf32>
    %649 = vector.broadcast %581 : vector<1x16xf32> to vector<2x16xf32>
    %650 = arith.mulf %649, %632 : vector<2x16xf32>
    %651 = arith.addf %648, %650 : vector<2x16xf32>
    %652 = vector.extract_strided_slice %579 {offsets = [8, 0], sizes = [2, 16], strides = [1, 1]} : vector<16x16xf32> to vector<2x16xf32>
    %653 = arith.addf %651, %652 : vector<2x16xf32>
    %654 = vector.broadcast %580 : vector<1x16xf32> to vector<2x16xf32>
    %655 = arith.mulf %654, %646 : vector<2x16xf32>
    %656 = vector.broadcast %581 : vector<1x16xf32> to vector<2x16xf32>
    %657 = arith.mulf %656, %653 : vector<2x16xf32>
    %658 = arith.subf %655, %657 : vector<2x16xf32>
    %659 = vector.extract_strided_slice %578 {offsets = [10, 0], sizes = [2, 16], strides = [1, 1]} : vector<16x16xf32> to vector<2x16xf32>
    %660 = arith.addf %658, %659 : vector<2x16xf32>
    %661 = vector.broadcast %580 : vector<1x16xf32> to vector<2x16xf32>
    %662 = arith.mulf %661, %653 : vector<2x16xf32>
    %663 = vector.broadcast %581 : vector<1x16xf32> to vector<2x16xf32>
    %664 = arith.mulf %663, %646 : vector<2x16xf32>
    %665 = arith.addf %662, %664 : vector<2x16xf32>
    %666 = vector.extract_strided_slice %579 {offsets = [10, 0], sizes = [2, 16], strides = [1, 1]} : vector<16x16xf32> to vector<2x16xf32>
    %667 = arith.addf %665, %666 : vector<2x16xf32>
    %668 = vector.broadcast %580 : vector<1x16xf32> to vector<2x16xf32>
    %669 = arith.mulf %668, %660 : vector<2x16xf32>
    %670 = vector.broadcast %581 : vector<1x16xf32> to vector<2x16xf32>
    %671 = arith.mulf %670, %667 : vector<2x16xf32>
    %672 = arith.subf %669, %671 : vector<2x16xf32>
    %673 = vector.extract_strided_slice %578 {offsets = [12, 0], sizes = [2, 16], strides = [1, 1]} : vector<16x16xf32> to vector<2x16xf32>
    %674 = arith.addf %672, %673 : vector<2x16xf32>
    %675 = vector.broadcast %580 : vector<1x16xf32> to vector<2x16xf32>
    %676 = arith.mulf %675, %667 : vector<2x16xf32>
    %677 = vector.broadcast %581 : vector<1x16xf32> to vector<2x16xf32>
    %678 = arith.mulf %677, %660 : vector<2x16xf32>
    %679 = arith.addf %676, %678 : vector<2x16xf32>
    %680 = vector.extract_strided_slice %579 {offsets = [12, 0], sizes = [2, 16], strides = [1, 1]} : vector<16x16xf32> to vector<2x16xf32>
    %681 = arith.addf %679, %680 : vector<2x16xf32>
    %682 = vector.broadcast %580 : vector<1x16xf32> to vector<2x16xf32>
    %683 = arith.mulf %682, %674 : vector<2x16xf32>
    %684 = vector.broadcast %581 : vector<1x16xf32> to vector<2x16xf32>
    %685 = arith.mulf %684, %681 : vector<2x16xf32>
    %686 = arith.subf %683, %685 : vector<2x16xf32>
    %687 = vector.extract_strided_slice %578 {offsets = [14, 0], sizes = [2, 16], strides = [1, 1]} : vector<16x16xf32> to vector<2x16xf32>
    %688 = arith.addf %686, %687 : vector<2x16xf32>
    %689 = vector.broadcast %580 : vector<1x16xf32> to vector<2x16xf32>
    %690 = arith.mulf %689, %681 : vector<2x16xf32>
    %691 = vector.broadcast %581 : vector<1x16xf32> to vector<2x16xf32>
    %692 = arith.mulf %691, %674 : vector<2x16xf32>
    %693 = arith.addf %690, %692 : vector<2x16xf32>
    %694 = vector.extract_strided_slice %579 {offsets = [14, 0], sizes = [2, 16], strides = [1, 1]} : vector<16x16xf32> to vector<2x16xf32>
    %695 = arith.addf %693, %694 : vector<2x16xf32>
    %696 = tpu.concatenate %590, %604, %618, %632, %646, %660, %674, %688 in 0 : vector<2x16xf32>, vector<2x16xf32>, vector<2x16xf32>, vector<2x16xf32>, vector<2x16xf32>, vector<2x16xf32>, vector<2x16xf32>, vector<2x16xf32> -> vector<16x16xf32>
    %697 = tpu.concatenate %597, %611, %625, %639, %653, %667, %681, %695 in 0 : vector<2x16xf32>, vector<2x16xf32>, vector<2x16xf32>, vector<2x16xf32>, vector<2x16xf32>, vector<2x16xf32>, vector<2x16xf32>, vector<2x16xf32> -> vector<16x16xf32>
    %698 = tpu.concatenate %696, %697 in 1 : vector<16x16xf32>, vector<16x16xf32> -> vector<16x32xf32>
    %699 = arith.truncf %698 : vector<16x32xf32> to vector<16x32xbf16>
    %c2_162 = arith.constant 2 : index
    %c0_163 = arith.constant 0 : index
    %c0_164 = arith.constant 0 : index
    %700 = vector.load %arg7[%c2_162, %c0_163, %c0_164] : memref<3x32x32xbf16, #tpu.memory_space<vmem>>, vector<1x32x32xbf16>
    %701 = vector.shape_cast %700 : vector<1x32x32xbf16> to vector<32x32xbf16>
    %cst_165 = arith.constant dense<0.000000e+00> : vector<16x32xf32>
    %702 = tpu.matmul %699, %701, %cst_165 {dimension_numbers = #tpu.dot_dimension_numbers<[1], [0], [0], [1], [0, 0, 1, 1], [], []>} : vector<16x32xbf16>, vector<32x32xbf16>, vector<16x32xf32> -> vector<16x32xf32>
    %c2_166 = arith.constant 2 : index
    %c0_167 = arith.constant 0 : index
    %703 = vector.load %arg8[%c2_166, %c0_167] : memref<3x32xf32, #tpu.memory_space<vmem>>, vector<1x32xf32>
    %704 = vector.broadcast %703 : vector<1x32xf32> to vector<16x32xf32>
    %705 = arith.mulf %704, %573 : vector<16x32xf32>
    %706 = arith.addf %702, %705 : vector<16x32xf32>
    %cst_168 = arith.constant 5.000000e-01 : f32
    %707 = vector.broadcast %cst_168 : f32 to vector<16x32xf32>
    %708 = arith.mulf %707, %706 : vector<16x32xf32>
    %cst_169 = arith.constant 0.707106769 : f32
    %709 = vector.broadcast %cst_169 : f32 to vector<16x32xf32>
    %710 = arith.mulf %706, %709 : vector<16x32xf32>
    %cst_170 = arith.constant 0.000000e+00 : f32
    %711 = vector.broadcast %cst_170 : f32 to vector<16x32xf32>
    %712 = arith.cmpf oge, %710, %711 : vector<16x32xf32>
    %cst_171 = arith.constant 1.000000e+00 : f32
    %cst_172 = arith.constant -1.000000e+00 : f32
    %713 = vector.broadcast %cst_171 : f32 to vector<16x32xf32>
    %714 = vector.broadcast %cst_172 : f32 to vector<16x32xf32>
    %715 = arith.select %712, %713, %714 : vector<16x32xi1>, vector<16x32xf32>
    %716 = math.absf %710 : vector<16x32xf32>
    %cst_173 = arith.constant 0.327591091 : f32
    %717 = vector.broadcast %cst_173 : f32 to vector<16x32xf32>
    %718 = arith.mulf %717, %716 : vector<16x32xf32>
    %cst_174 = arith.constant 1.000000e+00 : f32
    %719 = vector.broadcast %cst_174 : f32 to vector<16x32xf32>
    %720 = arith.addf %719, %718 : vector<16x32xf32>
    %721 = tpu.reciprocal %720 {approx = true} : vector<16x32xf32> -> vector<16x32xf32>
    %cst_175 = arith.constant 1.06140542 : f32
    %722 = vector.broadcast %cst_175 : f32 to vector<16x32xf32>
    %723 = arith.mulf %722, %721 : vector<16x32xf32>
    %cst_176 = arith.constant -1.45315206 : f32
    %724 = vector.broadcast %cst_176 : f32 to vector<16x32xf32>
    %725 = arith.addf %723, %724 : vector<16x32xf32>
    %726 = arith.mulf %725, %721 : vector<16x32xf32>
    %cst_177 = arith.constant 1.42141378 : f32
    %727 = vector.broadcast %cst_177 : f32 to vector<16x32xf32>
    %728 = arith.addf %726, %727 : vector<16x32xf32>
    %729 = arith.mulf %728, %721 : vector<16x32xf32>
    %cst_178 = arith.constant -0.284496725 : f32
    %730 = vector.broadcast %cst_178 : f32 to vector<16x32xf32>
    %731 = arith.addf %729, %730 : vector<16x32xf32>
    %732 = arith.mulf %731, %721 : vector<16x32xf32>
    %cst_179 = arith.constant 0.254829586 : f32
    %733 = vector.broadcast %cst_179 : f32 to vector<16x32xf32>
    %734 = arith.addf %732, %733 : vector<16x32xf32>
    %735 = arith.mulf %734, %721 : vector<16x32xf32>
    %cst_180 = arith.constant 0.000000e+00 : f32
    %736 = vector.broadcast %cst_180 : f32 to vector<16x32xf32>
    %737 = arith.subf %736, %716 : vector<16x32xf32>
    %738 = arith.mulf %737, %716 : vector<16x32xf32>
    %739 = math.exp %738 : vector<16x32xf32>
    %740 = arith.mulf %735, %739 : vector<16x32xf32>
    %cst_181 = arith.constant 1.000000e+00 : f32
    %741 = vector.broadcast %cst_181 : f32 to vector<16x32xf32>
    %742 = arith.subf %741, %740 : vector<16x32xf32>
    %743 = arith.mulf %715, %742 : vector<16x32xf32>
    %cst_182 = arith.constant 1.000000e+00 : f32
    %744 = vector.broadcast %cst_182 : f32 to vector<16x32xf32>
    %745 = arith.addf %744, %743 : vector<16x32xf32>
    %746 = arith.mulf %708, %745 : vector<16x32xf32>
    %747 = arith.addf %746, %573 : vector<16x32xf32>
    %c2_183 = arith.constant 2 : index
    %c0_184 = arith.constant 0 : index
    %748 = vector.load %arg9[%c2_183, %c0_184] : memref<3x32xf32, #tpu.memory_space<vmem>>, vector<1x32xf32>
    %c2_185 = arith.constant 2 : index
    %c0_186 = arith.constant 0 : index
    %749 = vector.load %arg10[%c2_185, %c0_186] : memref<3x32xf32, #tpu.memory_space<vmem>>, vector<1x32xf32>
    %cst_187 = arith.constant dense<0.000000e+00> : vector<16xf32>
    %750 = vector.multi_reduction <add>, %747, %cst_187 [1] : vector<16x32xf32> to vector<16xf32>
    %751 = vector.shape_cast %750 : vector<16xf32> to vector<16x1xf32>
    %cst_188 = arith.constant 3.200000e+01 : f32
    %752 = vector.broadcast %cst_188 : f32 to vector<16x1xf32>
    %753 = arith.divf %751, %752 : vector<16x1xf32>
    %754 = vector.broadcast %753 : vector<16x1xf32> to vector<16x32xf32>
    %755 = arith.subf %747, %754 : vector<16x32xf32>
    %756 = arith.mulf %755, %755 : vector<16x32xf32>
    %cst_189 = arith.constant dense<0.000000e+00> : vector<16xf32>
    %757 = vector.multi_reduction <add>, %756, %cst_189 [1] : vector<16x32xf32> to vector<16xf32>
    %758 = vector.shape_cast %757 : vector<16xf32> to vector<16x1xf32>
    %cst_190 = arith.constant 3.200000e+01 : f32
    %759 = vector.broadcast %cst_190 : f32 to vector<16x1xf32>
    %760 = arith.divf %758, %759 : vector<16x1xf32>
    %761 = vector.broadcast %753 : vector<16x1xf32> to vector<16x32xf32>
    %762 = arith.subf %747, %761 : vector<16x32xf32>
    %cst_191 = arith.constant 9.99999974E-6 : f32
    %763 = vector.broadcast %cst_191 : f32 to vector<16x1xf32>
    %764 = arith.addf %760, %763 : vector<16x1xf32>
    %765 = math.rsqrt %764 : vector<16x1xf32>
    %766 = vector.broadcast %765 : vector<16x1xf32> to vector<16x32xf32>
    %767 = arith.mulf %762, %766 : vector<16x32xf32>
    %768 = vector.broadcast %748 : vector<1x32xf32> to vector<16x32xf32>
    %769 = arith.mulf %767, %768 : vector<16x32xf32>
    %770 = vector.broadcast %749 : vector<1x32xf32> to vector<16x32xf32>
    %771 = arith.addf %769, %770 : vector<16x32xf32>
    %772 = arith.truncf %771 : vector<16x32xf32> to vector<16x32xbf16>
    %c2_192 = arith.constant 2 : index
    %c0_193 = arith.constant 0 : index
    %c0_194 = arith.constant 0 : index
    %773 = vector.load %arg11[%c2_192, %c0_193, %c0_194] : memref<3x32x64xbf16, #tpu.memory_space<vmem>>, vector<1x32x64xbf16>
    %774 = vector.shape_cast %773 : vector<1x32x64xbf16> to vector<32x64xbf16>
    %cst_195 = arith.constant dense<0.000000e+00> : vector<16x64xf32>
    %775 = tpu.matmul %772, %774, %cst_195 {dimension_numbers = #tpu.dot_dimension_numbers<[1], [0], [0], [1], [0, 0, 1, 1], [], []>} : vector<16x32xbf16>, vector<32x64xbf16>, vector<16x64xf32> -> vector<16x64xf32>
    %776 = vector.extract_strided_slice %775 {offsets = [0, 0], sizes = [16, 32], strides = [1, 1]} : vector<16x64xf32> to vector<16x32xf32>
    %777 = vector.extract_strided_slice %775 {offsets = [0, 32], sizes = [16, 32], strides = [1, 1]} : vector<16x64xf32> to vector<16x32xf32>
    %cst_196 = arith.constant 5.000000e-01 : f32
    %778 = vector.broadcast %cst_196 : f32 to vector<16x32xf32>
    %779 = arith.mulf %778, %777 : vector<16x32xf32>
    %cst_197 = arith.constant 0.707106769 : f32
    %780 = vector.broadcast %cst_197 : f32 to vector<16x32xf32>
    %781 = arith.mulf %777, %780 : vector<16x32xf32>
    %cst_198 = arith.constant 0.000000e+00 : f32
    %782 = vector.broadcast %cst_198 : f32 to vector<16x32xf32>
    %783 = arith.cmpf oge, %781, %782 : vector<16x32xf32>
    %cst_199 = arith.constant 1.000000e+00 : f32
    %cst_200 = arith.constant -1.000000e+00 : f32
    %784 = vector.broadcast %cst_199 : f32 to vector<16x32xf32>
    %785 = vector.broadcast %cst_200 : f32 to vector<16x32xf32>
    %786 = arith.select %783, %784, %785 : vector<16x32xi1>, vector<16x32xf32>
    %787 = math.absf %781 : vector<16x32xf32>
    %cst_201 = arith.constant 0.327591091 : f32
    %788 = vector.broadcast %cst_201 : f32 to vector<16x32xf32>
    %789 = arith.mulf %788, %787 : vector<16x32xf32>
    %cst_202 = arith.constant 1.000000e+00 : f32
    %790 = vector.broadcast %cst_202 : f32 to vector<16x32xf32>
    %791 = arith.addf %790, %789 : vector<16x32xf32>
    %792 = tpu.reciprocal %791 {approx = true} : vector<16x32xf32> -> vector<16x32xf32>
    %cst_203 = arith.constant 1.06140542 : f32
    %793 = vector.broadcast %cst_203 : f32 to vector<16x32xf32>
    %794 = arith.mulf %793, %792 : vector<16x32xf32>
    %cst_204 = arith.constant -1.45315206 : f32
    %795 = vector.broadcast %cst_204 : f32 to vector<16x32xf32>
    %796 = arith.addf %794, %795 : vector<16x32xf32>
    %797 = arith.mulf %796, %792 : vector<16x32xf32>
    %cst_205 = arith.constant 1.42141378 : f32
    %798 = vector.broadcast %cst_205 : f32 to vector<16x32xf32>
    %799 = arith.addf %797, %798 : vector<16x32xf32>
    %800 = arith.mulf %799, %792 : vector<16x32xf32>
    %cst_206 = arith.constant -0.284496725 : f32
    %801 = vector.broadcast %cst_206 : f32 to vector<16x32xf32>
    %802 = arith.addf %800, %801 : vector<16x32xf32>
    %803 = arith.mulf %802, %792 : vector<16x32xf32>
    %cst_207 = arith.constant 0.254829586 : f32
    %804 = vector.broadcast %cst_207 : f32 to vector<16x32xf32>
    %805 = arith.addf %803, %804 : vector<16x32xf32>
    %806 = arith.mulf %805, %792 : vector<16x32xf32>
    %cst_208 = arith.constant 0.000000e+00 : f32
    %807 = vector.broadcast %cst_208 : f32 to vector<16x32xf32>
    %808 = arith.subf %807, %787 : vector<16x32xf32>
    %809 = arith.mulf %808, %787 : vector<16x32xf32>
    %810 = math.exp %809 : vector<16x32xf32>
    %811 = arith.mulf %806, %810 : vector<16x32xf32>
    %cst_209 = arith.constant 1.000000e+00 : f32
    %812 = vector.broadcast %cst_209 : f32 to vector<16x32xf32>
    %813 = arith.subf %812, %811 : vector<16x32xf32>
    %814 = arith.mulf %786, %813 : vector<16x32xf32>
    %cst_210 = arith.constant 1.000000e+00 : f32
    %815 = vector.broadcast %cst_210 : f32 to vector<16x32xf32>
    %816 = arith.addf %815, %814 : vector<16x32xf32>
    %817 = arith.mulf %779, %816 : vector<16x32xf32>
    %818 = arith.mulf %776, %817 : vector<16x32xf32>
    %819 = arith.truncf %818 : vector<16x32xf32> to vector<16x32xbf16>
    %c2_211 = arith.constant 2 : index
    %c0_212 = arith.constant 0 : index
    %c0_213 = arith.constant 0 : index
    %820 = vector.load %arg12[%c2_211, %c0_212, %c0_213] : memref<3x32x32xbf16, #tpu.memory_space<vmem>>, vector<1x32x32xbf16>
    %821 = vector.shape_cast %820 : vector<1x32x32xbf16> to vector<32x32xbf16>
    %cst_214 = arith.constant dense<0.000000e+00> : vector<16x32xf32>
    %822 = tpu.matmul %819, %821, %cst_214 {dimension_numbers = #tpu.dot_dimension_numbers<[1], [0], [0], [1], [0, 0, 1, 1], [], []>} : vector<16x32xbf16>, vector<32x32xbf16>, vector<16x32xf32> -> vector<16x32xf32>
    %823 = arith.addf %822, %771 : vector<16x32xf32>
    %c0_215 = arith.constant 0 : index
    %c0_216 = arith.constant 0 : index
    %c0_217 = arith.constant 0 : index
    %824 = vector.load %arg13[%c0_215, %c0_216, %c0_217] : memref<1x16x32xf32, #tpu.memory_space<vmem>>, vector<1x16x32xf32>
    %825 = vector.shape_cast %824 : vector<1x16x32xf32> to vector<16x32xf32>
    %826 = vector.shape_cast %823 : vector<16x32xf32> to vector<1x16x32xf32>
    tpu.vector_store %arg13[%c0_215, %c0_216, %c0_217], %826 {strides = array<i32>} : memref<1x16x32xf32, #tpu.memory_space<vmem>>, vector<1x16x32xf32>,
    return
  }
  func.func @transform_0(%arg0: i32) -> (i32, i32, i32) {
    %c0_i32 = arith.constant 0 : i32
    %c0_i32_0 = arith.constant 0 : i32
    %c0_i32_1 = arith.constant 0 : i32
    return %arg0, %c0_i32, %c0_i32_0 : i32, i32, i32
  }
  func.func @transform_1(%arg0: i32) -> (i32, i32) {
    %c0_i32 = arith.constant 0 : i32
    %c0_i32_0 = arith.constant 0 : i32
    %c0_i32_1 = arith.constant 0 : i32
    return %c0_i32, %c0_i32_0 : i32, i32
  }
  func.func @transform_2(%arg0: i32) -> (i32, i32) {
    %c0_i32 = arith.constant 0 : i32
    %c0_i32_0 = arith.constant 0 : i32
    %c0_i32_1 = arith.constant 0 : i32
    return %c0_i32, %c0_i32_0 : i32, i32
  }
  func.func @transform_3(%arg0: i32) -> (i32, i32) {
    %c0_i32 = arith.constant 0 : i32
    %c0_i32_0 = arith.constant 0 : i32
    %c0_i32_1 = arith.constant 0 : i32
    return %c0_i32, %c0_i32_0 : i32, i32
  }
  func.func @transform_4(%arg0: i32) -> (i32, i32) {
    %c0_i32 = arith.constant 0 : i32
    %c0_i32_0 = arith.constant 0 : i32
    %c0_i32_1 = arith.constant 0 : i32
    return %c0_i32, %c0_i32_0 : i32, i32
  }
  func.func @transform_5(%arg0: i32) -> (i32, i32, i32) {
    %c0_i32 = arith.constant 0 : i32
    %c0_i32_0 = arith.constant 0 : i32
    %c0_i32_1 = arith.constant 0 : i32
    %c0_i32_2 = arith.constant 0 : i32
    return %c0_i32, %c0_i32_0, %c0_i32_1 : i32, i32, i32
  }
  func.func @transform_6(%arg0: i32) -> (i32, i32, i32) {
    %c0_i32 = arith.constant 0 : i32
    %c0_i32_0 = arith.constant 0 : i32
    %c0_i32_1 = arith.constant 0 : i32
    %c0_i32_2 = arith.constant 0 : i32
    return %c0_i32, %c0_i32_0, %c0_i32_1 : i32, i32, i32
  }
  func.func @transform_7(%arg0: i32) -> (i32, i32) {
    %c0_i32 = arith.constant 0 : i32
    %c0_i32_0 = arith.constant 0 : i32
    %c0_i32_1 = arith.constant 0 : i32
    return %c0_i32, %c0_i32_0 : i32, i32
  }
  func.func @transform_8(%arg0: i32) -> (i32, i32) {
    %c0_i32 = arith.constant 0 : i32
    %c0_i32_0 = arith.constant 0 : i32
    %c0_i32_1 = arith.constant 0 : i32
    return %c0_i32, %c0_i32_0 : i32, i32
  }
  func.func @transform_9(%arg0: i32) -> (i32, i32) {
    %c0_i32 = arith.constant 0 : i32
    %c0_i32_0 = arith.constant 0 : i32
    %c0_i32_1 = arith.constant 0 : i32
    return %c0_i32, %c0_i32_0 : i32, i32
  }
  func.func @transform_10(%arg0: i32) -> (i32, i32, i32) {
    %c0_i32 = arith.constant 0 : i32
    %c0_i32_0 = arith.constant 0 : i32
    %c0_i32_1 = arith.constant 0 : i32
    %c0_i32_2 = arith.constant 0 : i32
    return %c0_i32, %c0_i32_0, %c0_i32_1 : i32, i32, i32
  }
  func.func @transform_11(%arg0: i32) -> (i32, i32, i32) {
    %c0_i32 = arith.constant 0 : i32
    %c0_i32_0 = arith.constant 0 : i32
    %c0_i32_1 = arith.constant 0 : i32
    %c0_i32_2 = arith.constant 0 : i32
    return %c0_i32, %c0_i32_0, %c0_i32_1 : i32, i32, i32
  }
  func.func @transform_12(%arg0: i32) -> (i32, i32, i32) {
    %c0_i32 = arith.constant 0 : i32
    %c0_i32_0 = arith.constant 0 : i32
    %c0_i32_1 = arith.constant 0 : i32
    return %arg0, %c0_i32, %c0_i32_0 : i32, i32, i32
  }
}

</mosaic_0001>

<llo_original>
// kernel: tpu_custom_call.1
$region0: #{tpu_custom_call.1}
  #allocation0 [shape = 'u32[]', space=smem, size = 0x4, offset = 0x4, fixed_abs, tag = 'smem constant byte address 0x4 - core index']
  #allocation1 [shape = 'u32[144,128]{1,0:T(1,128)}', space=vmem, size = 0x12000, scoped, tag = 'internal scratch']
  %s0 = inlined_call_operand.hbm [shape: f32[1,16,32], index: 0, kind: input, shape index: {}]
  %s1 = inlined_call_operand.hbm [shape: f32[3,32], index: 1, kind: input, shape index: {}]
  %s2 = inlined_call_operand.vmem [shape: f32[3,32], index: 2, kind: input, shape index: {}]
  %s3 = inlined_call_operand.vmem [shape: f32[3,16], index: 3, kind: input, shape index: {}]
  %s4 = inlined_call_operand.vmem [shape: f32[3,16], index: 4, kind: input, shape index: {}]
  %s5 = inlined_call_operand.hbm [shape: bf16[3,32,32], index: 5, kind: input, shape index: {}]
  %s6 = inlined_call_operand.hbm [shape: bf16[3,32,32], index: 6, kind: input, shape index: {}]
  %s7 = inlined_call_operand.vmem [shape: f32[3,32], index: 7, kind: input, shape index: {}]
  %s8 = inlined_call_operand.vmem [shape: f32[3,32], index: 8, kind: input, shape index: {}]
  %s9 = inlined_call_operand.vmem [shape: f32[3,32], index: 9, kind: input, shape index: {}]
  %s10 = inlined_call_operand.hbm [shape: bf16[3,32,64], index: 10, kind: input, shape index: {}]
  %s11 = inlined_call_operand.hbm [shape: bf16[3,32,32], index: 11, kind: input, shape index: {}]
  %s12 = inlined_call_operand.hbm [shape: f32[1,16,32], index: 12, kind: output, shape index: {}]
  %s13 = sld [smem:[#allocation0]]
  $region82: #{tpu_custom_call.1} parent=0
    _
  %s15 = ssub.s32 1, %s13
  %s16 = scalar_select 0, %s15, %s13
  $region1: #{tpu_custom_call.1} parent=0
    #allocation2 [shape = 'u8[8192]{0}', space=vmem, size = 0x2000, scoped, tag = 'input window, operand 0, single buffered']
    #allocation3 [shape = 's32[1]{0}', space=sflag, size = 0x4, scoped, tag = 'scoped memory for tpu_custom_call.1']
    #allocation4 [shape = 's32[1]{0}', space=sflag, size = 0x4, scoped, tag = 'scoped memory for tpu_custom_call.1']
    #allocation5 [shape = 'u8[2048]{0}', space=vmem, size = 0x800, scoped, tag = 'input window, operand 1, single buffered']
    #allocation6 [shape = 's32[1]{0}', space=sflag, size = 0x4, scoped, tag = 'scoped memory for tpu_custom_call.1']
    #allocation7 [shape = 'u8[24576]{0}', space=vmem, size = 0x6000, scoped, tag = 'input window, operand 5, single buffered']
    #allocation8 [shape = 'u8[24576]{0}', space=vmem, size = 0x6000, scoped, tag = 'input window, operand 6, single buffered']
    #allocation9 [shape = 's32[1]{0}', space=sflag, size = 0x4, scoped, tag = 'scoped memory for tpu_custom_call.1']
    #allocation10 [shape = 'u8[24576]{0}', space=vmem, size = 0x6000, scoped, tag = 'input window, operand 10, single buffered']
    #allocation11 [shape = 'u8[24576]{0}', space=vmem, size = 0x6000, scoped, tag = 'input window, operand 11, single buffered']
    #allocation12 [shape = 's32[1]{0}', space=sflag, size = 0x4, scoped, tag = 'scoped memory for tpu_custom_call.1']
    #allocation13 [shape = 'u8[8192]{0}', space=vmem, size = 0x2000, scoped, tag = 'output window, operand 0, single buffered']
    %17 = vsyncpa [#allocation3], 0
    %18 = vsyncpa [#allocation6], 0
    %19 = vsyncpa [#allocation9], 0
    %20 = vsyncpa [#allocation12], 0
    %21 = vsyncpa [#allocation4], 0
    // Predicated region
    $region2: #{tpu_custom_call.1} parent=1 // pred_check
      _
    $region3: #{tpu_custom_call.1} parent=1 // pred_check_branch
      %23 = sbr.rel (0) target = $region5
    $region4: #{tpu_custom_call.1} parent=1 // pred_region
      %s25 = ssub.s32 256, 256
      %26 = vsyncadd [#allocation3], %s25
      %s27 = sshll.u32 [#allocation2], 4
      %s28 = int_to_ptr.vmem [resolvable:$true] %s27
      %33 = dma.hbm_to_vmem [thread:$0]  %s0, 256, %s28, [#allocation3], 128, 128, 8
    $region5: #{tpu_custom_call.1} parent=1 // pred_fallthru
      _
    // Predicated region
    $region6: #{tpu_custom_call.1} parent=1 // pred_check
      _
    $region7: #{tpu_custom_call.1} parent=1 // pred_check_branch
      %35 = sbr.rel (0) target = $region9
    $region8: #{tpu_custom_call.1} parent=1 // pred_region
      %s37 = ssub.s32 64, 64
      %38 = vsyncadd [#allocation6], %s37
      %s40 = sshll.u32 [#allocation5], 4
      %s41 = int_to_ptr.vmem [resolvable:$true] %s40
      %43 = dma.hbm_to_vmem [thread:$0]  %s1, 64, %s41, [#allocation6]
    $region9: #{tpu_custom_call.1} parent=1 // pred_fallthru
      _
    // Predicated region
    $region10: #{tpu_custom_call.1} parent=1 // pred_check
      _
    $region11: #{tpu_custom_call.1} parent=1 // pred_check_branch
      %45 = sbr.rel (0) target = $region13
    $region12: #{tpu_custom_call.1} parent=1 // pred_region
      _
    $region13: #{tpu_custom_call.1} parent=1 // pred_fallthru
      _
    // Predicated region
    $region14: #{tpu_custom_call.1} parent=1 // pred_check
      _
    $region15: #{tpu_custom_call.1} parent=1 // pred_check_branch
      %47 = sbr.rel (0) target = $region17
    $region16: #{tpu_custom_call.1} parent=1 // pred_region
      _
    $region17: #{tpu_custom_call.1} parent=1 // pred_fallthru
      _
    // Predicated region
    $region18: #{tpu_custom_call.1} parent=1 // pred_check
      _
    $region19: #{tpu_custom_call.1} parent=1 // pred_check_branch
      %49 = sbr.rel (0) target = $region21
    $region20: #{tpu_custom_call.1} parent=1 // pred_region
      _
    $region21: #{tpu_custom_call.1} parent=1 // pred_fallthru
      _
    // Predicated region
    $region22: #{tpu_custom_call.1} parent=1 // pred_check
      _
    $region23: #{tpu_custom_call.1} parent=1 // pred_check_branch
      %51 = sbr.rel (0) target = $region25
    $region24: #{tpu_custom_call.1} parent=1 // pred_region
      %s53 = ssub.s32 768, 768
      %54 = vsyncadd [#allocation6], %s53
      %s55 = sshll.u32 [#allocation7], 4
      %s56 = int_to_ptr.vmem [resolvable:$true] %s55
      %61 = dma.hbm_to_vmem [thread:$0]  %s5, 768, %s56, [#allocation6], 64, 64, 4
    $region25: #{tpu_custom_call.1} parent=1 // pred_fallthru
      _
    // Predicated region
    $region26: #{tpu_custom_call.1} parent=1 // pred_check
      _
    $region27: #{tpu_custom_call.1} parent=1 // pred_check_branch
      %63 = sbr.rel (0) target = $region29
    $region28: #{tpu_custom_call.1} parent=1 // pred_region
      %s65 = ssub.s32 768, 768
      %66 = vsyncadd [#allocation9], %s65
      %s67 = sshll.u32 [#allocation8], 4
      %s68 = int_to_ptr.vmem [resolvable:$true] %s67
      %73 = dma.hbm_to_vmem [thread:$0]  %s6, 768, %s68, [#allocation9], 64, 64, 4
    $region29: #{tpu_custom_call.1} parent=1 // pred_fallthru
      _
    // Predicated region
    $region30: #{tpu_custom_call.1} parent=1 // pred_check
      _
    $region31: #{tpu_custom_call.1} parent=1 // pred_check_branch
      %75 = sbr.rel (0) target = $region33
    $region32: #{tpu_custom_call.1} parent=1 // pred_region
      _
    $region33: #{tpu_custom_call.1} parent=1 // pred_fallthru
      _
    // Predicated region
    $region34: #{tpu_custom_call.1} parent=1 // pred_check
      _
    $region35: #{tpu_custom_call.1} parent=1 // pred_check_branch
      %77 = sbr.rel (0) target = $region37
    $region36: #{tpu_custom_call.1} parent=1 // pred_region
      _
    $region37: #{tpu_custom_call.1} parent=1 // pred_fallthru
      _
    // Predicated region
    $region38: #{tpu_custom_call.1} parent=1 // pred_check
      _
    $region39: #{tpu_custom_call.1} parent=1 // pred_check_branch
      %79 = sbr.rel (0) target = $region41
    $region40: #{tpu_custom_call.1} parent=1 // pred_region
      _
    $region41: #{tpu_custom_call.1} parent=1 // pred_fallthru
      _
    // Predicated region
    $region42: #{tpu_custom_call.1} parent=1 // pred_check
      _
    $region43: #{tpu_custom_call.1} parent=1 // pred_check_branch
      %81 = sbr.rel (0) target = $region45
    $region44: #{tpu_custom_call.1} parent=1 // pred_region
      %s83 = ssub.s32 768, 768
      %84 = vsyncadd [#allocation9], %s83
      %s85 = sshll.u32 [#allocation10], 4
      %s86 = int_to_ptr.vmem [resolvable:$true] %s85
      %91 = dma.hbm_to_vmem [thread:$0]  %s10, 768, %s86, [#allocation9], 64, 64, 4
    $region45: #{tpu_custom_call.1} parent=1 // pred_fallthru
      _
    // Predicated region
    $region46: #{tpu_custom_call.1} parent=1 // pred_check
      _
    $region47: #{tpu_custom_call.1} parent=1 // pred_check_branch
      %93 = sbr.rel (0) target = $region49
    $region48: #{tpu_custom_call.1} parent=1 // pred_region
      %s95 = ssub.s32 768, 768
      %96 = vsyncadd [#allocation12], %s95
      %s97 = sshll.u32 [#allocation11], 4
      %s98 = int_to_ptr.vmem [resolvable:$true] %s97
      %103 = dma.hbm_to_vmem [thread:$0]  %s11, 768, %s98, [#allocation12], 64, 64, 4
    $region49: #{tpu_custom_call.1} parent=1 // pred_fallthru
      _
    // Predicated region
    $region50: #{tpu_custom_call.1} parent=1 // pred_check
      _
    $region51: #{tpu_custom_call.1} parent=1 // pred_check_branch
      %105 = sbr.rel (0) target = $region53
    $region52: #{tpu_custom_call.1} parent=1 // pred_region
      %106 = dma.done [#allocation3], 256
    $region53: #{tpu_custom_call.1} parent=1 // pred_fallthru
      _
    // Predicated region
    $region54: #{tpu_custom_call.1} parent=1 // pred_check
      _
    $region55: #{tpu_custom_call.1} parent=1 // pred_check_branch
      %108 = sbr.rel (0) target = $region57
    $region56: #{tpu_custom_call.1} parent=1 // pred_region
      %109 = dma.done [#allocation6], 64
    $region57: #{tpu_custom_call.1} parent=1 // pred_fallthru
      _
    // Predicated region
    $region58: #{tpu_custom_call.1} parent=1 // pred_check
      _
    $region59: #{tpu_custom_call.1} parent=1 // pred_check_branch
      %111 = sbr.rel (0) target = $region61
    $region60: #{tpu_custom_call.1} parent=1 // pred_region
      %112 = dma.done [#allocation6], 768
    $region61: #{tpu_custom_call.1} parent=1 // pred_fallthru
      _
    // Predicated region
    $region62: #{tpu_custom_call.1} parent=1 // pred_check
      _
    $region63: #{tpu_custom_call.1} parent=1 // pred_check_branch
      %114 = sbr.rel (0) target = $region65
    $region64: #{tpu_custom_call.1} parent=1 // pred_region
      %115 = dma.done [#allocation9], 768
    $region65: #{tpu_custom_call.1} parent=1 // pred_fallthru
      _
    // Predicated region
    $region66: #{tpu_custom_call.1} parent=1 // pred_check
      _
    $region67: #{tpu_custom_call.1} parent=1 // pred_check_branch
      %117 = sbr.rel (0) target = $region69
    $region68: #{tpu_custom_call.1} parent=1 // pred_region
      %118 = dma.done [#allocation9], 768
    $region69: #{tpu_custom_call.1} parent=1 // pred_fallthru
      _
    // Predicated region
    $region70: #{tpu_custom_call.1} parent=1 // pred_check
      _
    $region71: #{tpu_custom_call.1} parent=1 // pred_check_branch
      %120 = sbr.rel (0) target = $region73
    $region72: #{tpu_custom_call.1} parent=1 // pred_region
      %121 = dma.done [#allocation12], 768
    $region73: #{tpu_custom_call.1} parent=1 // pred_fallthru
      _
    %v123 = vld [vmem:[#allocation2] sm:$0xff]
    %v124 = vld [vmem:[#allocation2 + $0x8] sm:$0xff]
    %v125 = vld [vmem:[#allocation5] sm:$0x1]
    %v126 = vld [vmem:[%s2] sm:$0x1]
    %vm127 = vcmask 261120
    %v128 = vsel %vm127, %v123, 0.0
    %129 = vadd.xlane.f32.xlu0 %v128
    %v130 = vpop.xlane.xlu0 %129
    %v131 = vsel %vm127, %v124, 0.0
    %132 = vadd.xlane.f32.xlu0 %v131
    %v133 = vpop.xlane.xlu0 %132
    %v134 = vrcp.pop 32.0
    %v135 = vmul.f32 %v130, %v134
    %v136 = vmul.f32 %v133, %v134
    %v137 = vsub.f32 %v123, %v135
    %v138 = vsub.f32 %v124, %v136
    %v139 = vmul.f32 %v137, %v137
    %v140 = vmul.f32 %v138, %v138
    %v141 = vsel %vm127, %v139, 0.0
    %142 = vadd.xlane.f32.xlu0 %v141
    %v143 = vpop.xlane.xlu0 %142
    %v144 = vsel %vm127, %v140, 0.0
    %145 = vadd.xlane.f32.xlu0 %v144
    %v146 = vpop.xlane.xlu0 %145
    %v147 = vmul.f32 %v143, %v134
    %v148 = vmul.f32 %v146, %v134
    %v149 = vadd.f32 %v147, 1e-05
    %v150 = vadd.f32 %v148, 1e-05
    %v151 = vrsqrt.pop %v149
    %v152 = vrsqrt.pop %v150
    %v153 = vmul.f32 %v137, %v151
    %v154 = vmul.f32 %v138, %v152
    %v155 = vlaneseq
    %v156 = vshrl.u32 %v155, 7
    %v157 = vsub.s32 0, %v156
    %v158 = vrot.slane %v125, %v157
    %v159 = vmul.f32 %v153, %v158
    %v160 = vmul.f32 %v154, %v158
    %v161 = vlaneseq
    %v162 = vshrl.u32 %v161, 7
    %v163 = vsub.s32 0, %v162
    %v164 = vrot.slane %v126, %v163
    %v165 = vadd.f32 %v159, %v164
    %v166 = vadd.f32 %v160, %v164
    %v167 = vpack.c.bf16 %v166, %v165
    %v168 = vld [vmem:[#allocation7] sm:$0xf]
    %v169 = vld [vmem:[#allocation7 + $0x4] sm:$0xf]
    %v170 = vld [vmem:[#allocation7 + $0x8] sm:$0xf]
    %v171 = vld [vmem:[#allocation7 + $0xc] sm:$0xf]
    %v176 = vunpack.c.l.b16 %v168
    %v177 = vunpack.c.l.b16 %v169
    %v178 = vunpack.c.l.b16 %v170
    %v179 = vunpack.c.l.b16 %v171
    %v180 = vpack.c.b16 %v177, %v176
    %v181 = vpack.c.b16 %v179, %v178
    %v185 = vsel %vm127, %v167, 0
    %187 = vmatprep.subr.bf16.mxu0 0
    %188 = vmatpush1.bf16.msra.mxu0 %v180
    %189 = vmatprep.subr.bf16.mxu0 0
    %190 = vmatpush1.bf16.msra.mxu0 %v181
    %191 = vmatprep.subr.bf16.mxu0 0
    %192 = vmatpush1.bf16.msra.mxu0 0
    %193 = vmatprep.subr.bf16.mxu0 0
    %194 = vmatpush1.bf16.msra.mxu0 0
    %195 = vmatprep.subr.bf16.mxu0 0
    %196 = vmatpush1.bf16.msra.mxu0 0
    %197 = vmatprep.subr.bf16.mxu0 0
    %198 = vmatpush1.bf16.msra.mxu0 0
    %199 = vmatprep.subr.bf16.mxu0 0
    %200 = vmatpush1.bf16.msra.mxu0 0
    %201 = vmatprep.subr.bf16.mxu0 0
    %202 = vmatpush1.bf16.msra.mxu0 0
    %203 = vmatprep.subr.bf16.mxu0 0
    %204 = vmatpush1.bf16.msra.mxu0 0
    %205 = vmatprep.subr.bf16.mxu0 0
    %206 = vmatpush1.bf16.msra.mxu0 0
    %207 = vmatprep.subr.bf16.mxu0 0
    %208 = vmatpush1.bf16.msra.mxu0 0
    %209 = vmatprep.subr.bf16.mxu0 0
    %210 = vmatpush1.bf16.msra.mxu0 0
    %211 = vmatprep.subr.bf16.mxu0 0
    %212 = vmatpush1.bf16.msra.mxu0 0
    %213 = vmatprep.subr.bf16.mxu0 0
    %214 = vmatpush1.bf16.msra.mxu0 0
    %215 = vmatprep.subr.bf16.mxu0 0
    %216 = vmatpush1.bf16.msra.mxu0 0
    %217 = vmatprep.subr.bf16.mxu0 0
    %218 = vmatpush1.bf16.msra.mxu0 0
    %219 = vmatprep.mubr.bf16.mxu0 0
    %220 = vmatmul.mubr.bf16.gmra.mrb[0].mxu0 %v185
    %v221 = vpop.f32.mrb[0].mxu0
    %v222 = vadd.f32 0.0, %v221
    %v223 = vpop.f32.mrb[0].mxu0
    %v224 = vpop.f32.mrb[0].mxu0
    %v225 = vadd.f32 0.0, %v224
    %v226 = vpop.f32.mrb[0].mxu0
    %227 = vdwg.mxu0
    %v228 = vld [vmem:[%s3] sm:$0x1]
    %v229 = vld [vmem:[%s4] sm:$0x1]
    %v230 = vlaneseq
    %v231 = vshrl.u32 %v230, 7
    %v232 = vsub.s32 0, %v231
    %v233 = vrot.slane %v228, %v232
    %v234 = vmul.f32 %v233, 0.0
    %v235 = vlaneseq
    %v236 = vshrl.u32 %v235, 7
    %v237 = vsub.s32 0, %v236
    %v238 = vrot.slane %v229, %v237
    %v239 = vmul.f32 %v238, 0.0
    %v240 = vsub.f32 %v234, %v239
    %v241 = vadd.f32 %v240, %v222
    %v242 = vadd.f32 %v234, %v239
    %244 = vrot.lane.b32.xlu0 %v222, 112
    %v245 = vpop.permute.xlu0 %244
    %v247 = vadd.f32 %v242, %v245
    %v248 = vmul.f32 %v233, %v241
    %v249 = vmul.f32 %v238, %v247
    %v250 = vsub.f32 %v248, %v249
    %v251 = vrot.slane %v222, 2
    %v253 = vadd.f32 %v250, %v251
    %v254 = vmul.f32 %v233, %v247
    %v255 = vmul.f32 %v238, %v241
    %v256 = vadd.f32 %v254, %v255
    %257 = vrot.lane.b32.xlu0 %v251, 112
    %v258 = vpop.permute.xlu0 %257
    %v260 = vadd.f32 %v256, %v258
    %v261 = vmul.f32 %v233, %v253
    %v262 = vmul.f32 %v238, %v260
    %v263 = vsub.f32 %v261, %v262
    %v264 = vrot.slane %v222, 4
    %v266 = vadd.f32 %v263, %v264
    %v267 = vmul.f32 %v233, %v260
    %v268 = vmul.f32 %v238, %v253
    %v269 = vadd.f32 %v267, %v268
    %270 = vrot.lane.b32.xlu0 %v264, 112
    %v271 = vpop.permute.xlu0 %270
    %v273 = vadd.f32 %v269, %v271
    %v274 = vmul.f32 %v233, %v266
    %v275 = vmul.f32 %v238, %v273
    %v276 = vsub.f32 %v274, %v275
    %v277 = vrot.slane %v222, 6
    %v279 = vadd.f32 %v276, %v277
    %v280 = vmul.f32 %v233, %v273
    %v281 = vmul.f32 %v238, %v266
    %v282 = vadd.f32 %v280, %v281
    %283 = vrot.lane.b32.xlu0 %v277, 112
    %v284 = vpop.permute.xlu0 %283
    %v286 = vadd.f32 %v282, %v284
    %v287 = vmul.f32 %v233, %v279
    %v288 = vmul.f32 %v238, %v286
    %v289 = vsub.f32 %v287, %v288
    %v290 = vadd.f32 %v289, %v225
    %v291 = vmul.f32 %v233, %v286
    %v292 = vmul.f32 %v238, %v279
    %v293 = vadd.f32 %v291, %v292
    %295 = vrot.lane.b32.xlu0 %v225, 112
    %v296 = vpop.permute.xlu0 %295
    %v298 = vadd.f32 %v293, %v296
    %v299 = vmul.f32 %v233, %v290
    %v300 = vmul.f32 %v238, %v298
    %v301 = vsub.f32 %v299, %v300
    %v302 = vrot.slane %v225, 2
    %v304 = vadd.f32 %v301, %v302
    %v305 = vmul.f32 %v233, %v298
    %v306 = vmul.f32 %v238, %v290
    %v307 = vadd.f32 %v305, %v306
    %308 = vrot.lane.b32.xlu0 %v302, 112
    %v309 = vpop.permute.xlu0 %308
    %v311 = vadd.f32 %v307, %v309
    %v312 = vmul.f32 %v233, %v304
    %v313 = vmul.f32 %v238, %v311
    %v314 = vsub.f32 %v312, %v313
    %v315 = vrot.slane %v225, 4
    %v317 = vadd.f32 %v314, %v315
    %v318 = vmul.f32 %v233, %v311
    %v319 = vmul.f32 %v238, %v304
    %v320 = vadd.f32 %v318, %v319
    %321 = vrot.lane.b32.xlu0 %v315, 112
    %v322 = vpop.permute.xlu0 %321
    %v324 = vadd.f32 %v320, %v322
    %v325 = vmul.f32 %v233, %v317
    %v326 = vmul.f32 %v238, %v324
    %v327 = vsub.f32 %v325, %v326
    %v328 = vrot.slane %v225, 6
    %v330 = vadd.f32 %v327, %v328
    %v331 = vmul.f32 %v233, %v324
    %v332 = vmul.f32 %v238, %v317
    %v333 = vadd.f32 %v331, %v332
    %334 = vrot.lane.b32.xlu0 %v328, 112
    %v335 = vpop.permute.xlu0 %334
    %v337 = vadd.f32 %v333, %v335
    %v339 = vrot.slane %v253, 6
    %v342 = vrot.slane %v266, 4
    %v345 = vrot.slane %v279, 2
    %v348 = vrot.slane %v304, 6
    %v351 = vrot.slane %v317, 4
    %v354 = vrot.slane %v330, 2
    %vm356 = vcmask 1041408
    %v357 = vsel %vm356, %v241, %v339
    %vm358 = vcmask 1043456
    %v359 = vsel %vm358, %v357, %v342
    %vm360 = vcmask 1045504
    %v361 = vsel %vm360, %v359, %v345
    %v362 = vsel %vm356, %v290, %v348
    %v363 = vsel %vm358, %v362, %v351
    %v364 = vsel %vm360, %v363, %v354
    %v366 = vrot.slane %v260, 6
    %v369 = vrot.slane %v273, 4
    %v372 = vrot.slane %v286, 2
    %v375 = vrot.slane %v311, 6
    %v378 = vrot.slane %v324, 4
    %v381 = vrot.slane %v337, 2
    %v383 = vsel %vm356, %v247, %v366
    %v384 = vsel %vm358, %v383, %v369
    %v385 = vsel %vm360, %v384, %v372
    %v386 = vsel %vm356, %v298, %v375
    %v387 = vsel %vm358, %v386, %v378
    %v388 = vsel %vm360, %v387, %v381
    %391 = vrot.lane.b32.xlu0 %v385, 16
    %v392 = vpop.permute.xlu0 %391
    %393 = vrot.lane.b32.xlu0 %v388, 16
    %v394 = vpop.permute.xlu0 %393
    %vm397 = vcmask 130048
    %v398 = vsel %vm397, %v361, %v392
    %v399 = vsel %vm397, %v364, %v394
    %v400 = vpack.c.bf16 %v399, %v398
    %v401 = vld [vmem:[#allocation8] sm:$0xf]
    %v402 = vld [vmem:[#allocation8 + $0x4] sm:$0xf]
    %v403 = vld [vmem:[#allocation8 + $0x8] sm:$0xf]
    %v404 = vld [vmem:[#allocation8 + $0xc] sm:$0xf]
    %v405 = vld [vmem:[%s7] sm:$0x1]
    %v406 = vlaneseq
    %v407 = vshrl.u32 %v406, 7
    %v408 = vsub.s32 0, %v407
    %v409 = vrot.slane %v405, %v408
    %v410 = vmul.f32 %v409, %v165
    %v411 = vmul.f32 %v409, %v166
    %v416 = vunpack.c.l.b16 %v401
    %v417 = vunpack.c.l.b16 %v402
    %v418 = vunpack.c.l.b16 %v403
    %v419 = vunpack.c.l.b16 %v404
    %v420 = vpack.c.b16 %v417, %v416
    %v421 = vpack.c.b16 %v419, %v418
    %v425 = vsel %vm127, %v400, 0
    %427 = vmatprep.subr.bf16.mxu0 0
    %428 = vmatpush1.bf16.msra.mxu0 %v420
    %429 = vmatprep.subr.bf16.mxu0 0
    %430 = vmatpush1.bf16.msra.mxu0 %v421
    %431 = vmatprep.subr.bf16.mxu0 0
    %432 = vmatpush1.bf16.msra.mxu0 0
    %433 = vmatprep.subr.bf16.mxu0 0
    %434 = vmatpush1.bf16.msra.mxu0 0
    %435 = vmatprep.subr.bf16.mxu0 0
    %436 = vmatpush1.bf16.msra.mxu0 0
    %437 = vmatprep.subr.bf16.mxu0 0
    %438 = vmatpush1.bf16.msra.mxu0 0
    %439 = vmatprep.subr.bf16.mxu0 0
    %440 = vmatpush1.bf16.msra.mxu0 0
    %441 = vmatprep.subr.bf16.mxu0 0
    %442 = vmatpush1.bf16.msra.mxu0 0
    %443 = vmatprep.subr.bf16.mxu0 0
    %444 = vmatpush1.bf16.msra.mxu0 0
    %445 = vmatprep.subr.bf16.mxu0 0
    %446 = vmatpush1.bf16.msra.mxu0 0
    %447 = vmatprep.subr.bf16.mxu0 0
    %448 = vmatpush1.bf16.msra.mxu0 0
    %449 = vmatprep.subr.bf16.mxu0 0
    %450 = vmatpush1.bf16.msra.mxu0 0
    %451 = vmatprep.subr.bf16.mxu0 0
    %452 = vmatpush1.bf16.msra.mxu0 0
    %453 = vmatprep.subr.bf16.mxu0 0
    %454 = vmatpush1.bf16.msra.mxu0 0
    %455 = vmatprep.subr.bf16.mxu0 0
    %456 = vmatpush1.bf16.msra.mxu0 0
    %457 = vmatprep.subr.bf16.mxu0 0
    %458 = vmatpush1.bf16.msra.mxu0 0
    %459 = vmatprep.mubr.bf16.mxu0 0
    %460 = vmatmul.mubr.bf16.gmra.mrb[0].mxu0 %v425
    %v461 = vpop.f32.mrb[0].mxu0
    %v462 = vadd.f32 %v410, %v461
    %v463 = vpop.f32.mrb[0].mxu0
    %v464 = vpop.f32.mrb[0].mxu0
    %v465 = vadd.f32 %v411, %v464
    %v466 = vpop.f32.mrb[0].mxu0
    %467 = vdwg.mxu0
    %v468 = vmul.f32 %v462, 0.5
    %v469 = vmul.f32 %v465, 0.5
    %v470 = vmul.f32 %v462, 0.70710677
    %v471 = vmul.f32 %v465, 0.70710677
    %vm472 = vcmp.ge.f32.partialorder %v470, 0.0
    %vm473 = vcmp.ge.f32.partialorder %v471, 0.0
    %v474 = vsel %vm472, 1.0, -1.0
    %v475 = vsel %vm473, 1.0, -1.0
    %v476 = vand.u32 2147483647, %v470
    %v477 = vand.u32 2147483647, %v471
    %v478 = vmul.f32 %v476, 0.3275911
    %v479 = vmul.f32 %v477, 0.3275911
    %v480 = vadd.f32 %v478, 1.0
    %v481 = vadd.f32 %v479, 1.0
    %v482 = vrcp.pop %v480
    %v483 = vrcp.pop %v481
    %v484 = vmul.f32 %v482, 1.0614054
    %v485 = vmul.f32 %v483, 1.0614054
    %v486 = vadd.f32 %v484, -1.4531521
    %v487 = vadd.f32 %v485, -1.4531521
    %v488 = vmul.f32 %v486, %v482
    %v489 = vmul.f32 %v487, %v483
    %v490 = vadd.f32 %v488, 1.4214138
    %v491 = vadd.f32 %v489, 1.4214138
    %v492 = vmul.f32 %v490, %v482
    %v493 = vmul.f32 %v491, %v483
    %v494 = vadd.f32 %v492, -0.28449672
    %v495 = vadd.f32 %v493, -0.28449672
    %v496 = vmul.f32 %v494, %v482
    %v497 = vmul.f32 %v495, %v483
    %v498 = vadd.f32 %v496, 0.2548296
    %v499 = vadd.f32 %v497, 0.2548296
    %v500 = vmul.f32 %v498, %v482
    %v501 = vmul.f32 %v499, %v483
    %v502 = vsub.f32 0.0, %v476
    %v503 = vsub.f32 0.0, %v477
    %v504 = vmul.f32 %v502, %v476
    %v505 = vmul.f32 %v503, %v477
    %v506 = vmul.f32 %v504, 1.442695
    %v507 = vpow.pop %v506
    %v508 = vmul.f32 %v505, 1.442695
    %v509 = vpow.pop %v508
    %v510 = vmul.f32 %v500, %v507
    %v511 = vmul.f32 %v501, %v509
    %v512 = vsub.f32 1.0, %v510
    %v513 = vsub.f32 1.0, %v511
    %v514 = vmul.f32 %v474, %v512
    %v515 = vmul.f32 %v475, %v513
    %v516 = vadd.f32 %v514, 1.0
    %v517 = vadd.f32 %v515, 1.0
    %v518 = vmul.f32 %v468, %v516
    %v519 = vmul.f32 %v469, %v517
    %v520 = vadd.f32 %v518, %v165
    %v521 = vadd.f32 %v519, %v166
    %v522 = vld [vmem:[%s8] sm:$0x1]
    %v523 = vld [vmem:[%s9] sm:$0x1]
    %v524 = vsel %vm127, %v520, 0.0
    %525 = vadd.xlane.f32.xlu0 %v524
    %v526 = vpop.xlane.xlu0 %525
    %v527 = vsel %vm127, %v521, 0.0
    %528 = vadd.xlane.f32.xlu0 %v527
    %v529 = vpop.xlane.xlu0 %528
    %v530 = vmul.f32 %v526, %v134
    %v531 = vmul.f32 %v529, %v134
    %v532 = vsub.f32 %v520, %v530
    %v533 = vsub.f32 %v521, %v531
    %v534 = vmul.f32 %v532, %v532
    %v535 = vmul.f32 %v533, %v533
    %v536 = vsel %vm127, %v534, 0.0
    %537 = vadd.xlane.f32.xlu0 %v536
    %v538 = vpop.xlane.xlu0 %537
    %v539 = vsel %vm127, %v535, 0.0
    %540 = vadd.xlane.f32.xlu0 %v539
    %v541 = vpop.xlane.xlu0 %540
    %v542 = vmul.f32 %v538, %v134
    %v543 = vmul.f32 %v541, %v134
    %v544 = vadd.f32 %v542, 1e-05
    %v545 = vadd.f32 %v543, 1e-05
    %v546 = vrsqrt.pop %v544
    %v547 = vrsqrt.pop %v545
    %v548 = vmul.f32 %v532, %v546
    %v549 = vmul.f32 %v533, %v547
    %v550 = vlaneseq
    %v551 = vshrl.u32 %v550, 7
    %v552 = vsub.s32 0, %v551
    %v553 = vrot.slane %v522, %v552
    %v554 = vmul.f32 %v548, %v553
    %v555 = vmul.f32 %v549, %v553
    %v556 = vlaneseq
    %v557 = vshrl.u32 %v556, 7
    %v558 = vsub.s32 0, %v557
    %v559 = vrot.slane %v523, %v558
    %v560 = vadd.f32 %v554, %v559
    %v561 = vadd.f32 %v555, %v559
    %v562 = vpack.c.bf16 %v561, %v560
    %v563 = vld [vmem:[#allocation10] sm:$0xf]
    %v564 = vld [vmem:[#allocation10 + $0x4] sm:$0xf]
    %v565 = vld [vmem:[#allocation10 + $0x8] sm:$0xf]
    %v566 = vld [vmem:[#allocation10 + $0xc] sm:$0xf]
    %v571 = vunpack.c.l.b16 %v563
    %v572 = vunpack.c.l.b16 %v564
    %v573 = vunpack.c.l.b16 %v565
    %v574 = vunpack.c.l.b16 %v566
    %v575 = vpack.c.b16 %v572, %v571
    %v576 = vpack.c.b16 %v574, %v573
    %v580 = vsel %vm127, %v562, 0
    %582 = vmatprep.subr.bf16.mxu0 0
    %583 = vmatpush1.bf16.msra.mxu0 %v575
    %584 = vmatprep.subr.bf16.mxu0 0
    %585 = vmatpush1.bf16.msra.mxu0 %v576
    %586 = vmatprep.subr.bf16.mxu0 0
    %587 = vmatpush1.bf16.msra.mxu0 0
    %588 = vmatprep.subr.bf16.mxu0 0
    %589 = vmatpush1.bf16.msra.mxu0 0
    %590 = vmatprep.subr.bf16.mxu0 0
    %591 = vmatpush1.bf16.msra.mxu0 0
    %592 = vmatprep.subr.bf16.mxu0 0
    %593 = vmatpush1.bf16.msra.mxu0 0
    %594 = vmatprep.subr.bf16.mxu0 0
    %595 = vmatpush1.bf16.msra.mxu0 0
    %596 = vmatprep.subr.bf16.mxu0 0
    %597 = vmatpush1.bf16.msra.mxu0 0
    %598 = vmatprep.subr.bf16.mxu0 0
    %599 = vmatpush1.bf16.msra.mxu0 0
    %600 = vmatprep.subr.bf16.mxu0 0
    %601 = vmatpush1.bf16.msra.mxu0 0
    %602 = vmatprep.subr.bf16.mxu0 0
    %603 = vmatpush1.bf16.msra.mxu0 0
    %604 = vmatprep.subr.bf16.mxu0 0
    %605 = vmatpush1.bf16.msra.mxu0 0
    %606 = vmatprep.subr.bf16.mxu0 0
    %607 = vmatpush1.bf16.msra.mxu0 0
    %608 = vmatprep.subr.bf16.mxu0 0
    %609 = vmatpush1.bf16.msra.mxu0 0
    %610 = vmatprep.subr.bf16.mxu0 0
    %611 = vmatpush1.bf16.msra.mxu0 0
    %612 = vmatprep.subr.bf16.mxu0 0
    %613 = vmatpush1.bf16.msra.mxu0 0
    %614 = vmatprep.mubr.bf16.mxu0 0
    %615 = vmatmul.mubr.bf16.gmra.mrb[0].mxu0 %v580
    %v616 = vpop.f32.mrb[0].mxu0
    %v617 = vadd.f32 0.0, %v616
    %v618 = vpop.f32.mrb[0].mxu0
    %v619 = vpop.f32.mrb[0].mxu0
    %v620 = vadd.f32 0.0, %v619
    %v621 = vpop.f32.mrb[0].mxu0
    %622 = vdwg.mxu0
    %v623 = vmul.f32 %v617, 0.5
    %v624 = vmul.f32 %v620, 0.5
    %v625 = vmul.f32 %v617, 0.70710677
    %v626 = vmul.f32 %v620, 0.70710677
    %vm627 = vcmp.ge.f32.partialorder %v625, 0.0
    %vm628 = vcmp.ge.f32.partialorder %v626, 0.0
    %v629 = vsel %vm627, 1.0, -1.0
    %v630 = vsel %vm628, 1.0, -1.0
    %v631 = vand.u32 2147483647, %v625
    %v632 = vand.u32 2147483647, %v626
    %v633 = vmul.f32 %v631, 0.3275911
    %v634 = vmul.f32 %v632, 0.3275911
    %v635 = vadd.f32 %v633, 1.0
    %v636 = vadd.f32 %v634, 1.0
    %v637 = vrcp.pop %v635
    %v638 = vrcp.pop %v636
    %v639 = vmul.f32 %v637, 1.0614054
    %v640 = vmul.f32 %v638, 1.0614054
    %v641 = vadd.f32 %v639, -1.4531521
    %v642 = vadd.f32 %v640, -1.4531521
    %v643 = vmul.f32 %v641, %v637
    %v644 = vmul.f32 %v642, %v638
    %v645 = vadd.f32 %v643, 1.4214138
    %v646 = vadd.f32 %v644, 1.4214138
    %v647 = vmul.f32 %v645, %v637
    %v648 = vmul.f32 %v646, %v638
    %v649 = vadd.f32 %v647, -0.28449672
    %v650 = vadd.f32 %v648, -0.28449672
    %v651 = vmul.f32 %v649, %v637
    %v652 = vmul.f32 %v650, %v638
    %v653 = vadd.f32 %v651, 0.2548296
    %v654 = vadd.f32 %v652, 0.2548296
    %v655 = vmul.f32 %v653, %v637
    %v656 = vmul.f32 %v654, %v638
    %v657 = vsub.f32 0.0, %v631
    %v658 = vsub.f32 0.0, %v632
    %v659 = vmul.f32 %v657, %v631
    %v660 = vmul.f32 %v658, %v632
    %v661 = vmul.f32 %v659, 1.442695
    %v662 = vpow.pop %v661
    %v663 = vmul.f32 %v660, 1.442695
    %v664 = vpow.pop %v663
    %v665 = vmul.f32 %v655, %v662
    %v666 = vmul.f32 %v656, %v664
    %v667 = vsub.f32 1.0, %v665
    %v668 = vsub.f32 1.0, %v666
    %v669 = vmul.f32 %v629, %v667
    %v670 = vmul.f32 %v630, %v668
    %v671 = vadd.f32 %v669, 1.0
    %v672 = vadd.f32 %v670, 1.0
    %v673 = vmul.f32 %v623, %v671
    %v674 = vmul.f32 %v624, %v672
    %677 = vrot.lane.b32.xlu0 %v673, 96
    %v678 = vpop.permute.xlu0 %677
    %679 = vrot.lane.b32.xlu0 %v674, 96
    %v680 = vpop.permute.xlu0 %679
    %v683 = vmul.f32 %v617, %v678
    %v684 = vmul.f32 %v620, %v680
    %v685 = vpack.c.bf16 %v684, %v683
    %v686 = vld [vmem:[#allocation11] sm:$0xf]
    %v687 = vld [vmem:[#allocation11 + $0x4] sm:$0xf]
    %v688 = vld [vmem:[#allocation11 + $0x8] sm:$0xf]
    %v689 = vld [vmem:[#allocation11 + $0xc] sm:$0xf]
    %v694 = vunpack.c.l.b16 %v686
    %v695 = vunpack.c.l.b16 %v687
    %v696 = vunpack.c.l.b16 %v688
    %v697 = vunpack.c.l.b16 %v689
    %v698 = vpack.c.b16 %v695, %v694
    %v699 = vpack.c.b16 %v697, %v696
    %v703 = vsel %vm127, %v685, 0
    %705 = vmatprep.subr.bf16.mxu0 0
    %706 = vmatpush1.bf16.msra.mxu0 %v698
    %707 = vmatprep.subr.bf16.mxu0 0
    %708 = vmatpush1.bf16.msra.mxu0 %v699
    %709 = vmatprep.subr.bf16.mxu0 0
    %710 = vmatpush1.bf16.msra.mxu0 0
    %711 = vmatprep.subr.bf16.mxu0 0
    %712 = vmatpush1.bf16.msra.mxu0 0
    %713 = vmatprep.subr.bf16.mxu0 0
    %714 = vmatpush1.bf16.msra.mxu0 0
    %715 = vmatprep.subr.bf16.mxu0 0
    %716 = vmatpush1.bf16.msra.mxu0 0
    %717 = vmatprep.subr.bf16.mxu0 0
    %718 = vmatpush1.bf16.msra.mxu0 0
    %719 = vmatprep.subr.bf16.mxu0 0
    %720 = vmatpush1.bf16.msra.mxu0 0
    %721 = vmatprep.subr.bf16.mxu0 0
    %722 = vmatpush1.bf16.msra.mxu0 0
    %723 = vmatprep.subr.bf16.mxu0 0
    %724 = vmatpush1.bf16.msra.mxu0 0
    %725 = vmatprep.subr.bf16.mxu0 0
    %726 = vmatpush1.bf16.msra.mxu0 0
    %727 = vmatprep.subr.bf16.mxu0 0
    %728 = vmatpush1.bf16.msra.mxu0 0
    %729 = vmatprep.subr.bf16.mxu0 0
    %730 = vmatpush1.bf16.msra.mxu0 0
    %731 = vmatprep.subr.bf16.mxu0 0
    %732 = vmatpush1.bf16.msra.mxu0 0
    %733 = vmatprep.subr.bf16.mxu0 0
    %734 = vmatpush1.bf16.msra.mxu0 0
    %735 = vmatprep.subr.bf16.mxu0 0
    %736 = vmatpush1.bf16.msra.mxu0 0
    %737 = vmatprep.mubr.bf16.mxu0 0
    %738 = vmatmul.mubr.bf16.gmra.mrb[0].mxu0 %v703
    %v739 = vpop.f32.mrb[0].mxu0
    %v740 = vadd.f32 %v560, %v739
    %v741 = vpop.f32.mrb[0].mxu0
    %v742 = vpop.f32.mrb[0].mxu0
    %v743 = vadd.f32 %v561, %v742
    %v744 = vpop.f32.mrb[0].mxu0
    %745 = vdwg.mxu0
    %v746 = vld [vmem:[#allocation5 + $0x1] sm:$0x1]
    %v747 = vld [vmem:[%s2 + $0x1] sm:$0x1]
    %v748 = vsel %vm127, %v740, 0.0
    %749 = vadd.xlane.f32.xlu0 %v748
    %v750 = vpop.xlane.xlu0 %749
    %v751 = vsel %vm127, %v743, 0.0
    %752 = vadd.xlane.f32.xlu0 %v751
    %v753 = vpop.xlane.xlu0 %752
    %v754 = vmul.f32 %v750, %v134
    %v755 = vmul.f32 %v753, %v134
    %v756 = vsub.f32 %v740, %v754
    %v757 = vsub.f32 %v743, %v755
    %v758 = vmul.f32 %v756, %v756
    %v759 = vmul.f32 %v757, %v757
    %v760 = vsel %vm127, %v758, 0.0
    %761 = vadd.xlane.f32.xlu0 %v760
    %v762 = vpop.xlane.xlu0 %761
    %v763 = vsel %vm127, %v759, 0.0
    %764 = vadd.xlane.f32.xlu0 %v763
    %v765 = vpop.xlane.xlu0 %764
    %v766 = vmul.f32 %v762, %v134
    %v767 = vmul.f32 %v765, %v134
    %v768 = vadd.f32 %v766, 1e-05
    %v769 = vadd.f32 %v767, 1e-05
    %v770 = vrsqrt.pop %v768
    %v771 = vrsqrt.pop %v769
    %v772 = vmul.f32 %v756, %v770
    %v773 = vmul.f32 %v757, %v771
    %v774 = vlaneseq
    %v775 = vshrl.u32 %v774, 7
    %v776 = vsub.s32 0, %v775
    %v777 = vrot.slane %v746, %v776
    %v778 = vmul.f32 %v772, %v777
    %v779 = vmul.f32 %v773, %v777
    %v780 = vlaneseq
    %v781 = vshrl.u32 %v780, 7
    %v782 = vsub.s32 0, %v781
    %v783 = vrot.slane %v747, %v782
    %v784 = vadd.f32 %v778, %v783
    %v785 = vadd.f32 %v779, %v783
    %v786 = vpack.c.bf16 %v785, %v784
    %s787 = scalar_lea.vmem [#allocation7], 16
    %v788 = vld [vmem:[%s787] sm:$0xf]
    %v789 = vld [vmem:[%s787 + $0x4] sm:$0xf]
    %v790 = vld [vmem:[%s787 + $0x8] sm:$0xf]
    %v791 = vld [vmem:[%s787 + $0xc] sm:$0xf]
    %v796 = vunpack.c.l.b16 %v788
    %v797 = vunpack.c.l.b16 %v789
    %v798 = vunpack.c.l.b16 %v790
    %v799 = vunpack.c.l.b16 %v791
    %v800 = vpack.c.b16 %v797, %v796
    %v801 = vpack.c.b16 %v799, %v798
    %v805 = vsel %vm127, %v786, 0
    %807 = vmatprep.subr.bf16.mxu0 0
    %808 = vmatpush1.bf16.msra.mxu0 %v800
    %809 = vmatprep.subr.bf16.mxu0 0
    %810 = vmatpush1.bf16.msra.mxu0 %v801
    %811 = vmatprep.subr.bf16.mxu0 0
    %812 = vmatpush1.bf16.msra.mxu0 0
    %813 = vmatprep.subr.bf16.mxu0 0
    %814 = vmatpush1.bf16.msra.mxu0 0
    %815 = vmatprep.subr.bf16.mxu0 0
    %816 = vmatpush1.bf16.msra.mxu0 0
    %817 = vmatprep.subr.bf16.mxu0 0
    %818 = vmatpush1.bf16.msra.mxu0 0
    %819 = vmatprep.subr.bf16.mxu0 0
    %820 = vmatpush1.bf16.msra.mxu0 0
    %821 = vmatprep.subr.bf16.mxu0 0
    %822 = vmatpush1.bf16.msra.mxu0 0
    %823 = vmatprep.subr.bf16.mxu0 0
    %824 = vmatpush1.bf16.msra.mxu0 0
    %825 = vmatprep.subr.bf16.mxu0 0
    %826 = vmatpush1.bf16.msra.mxu0 0
    %827 = vmatprep.subr.bf16.mxu0 0
    %828 = vmatpush1.bf16.msra.mxu0 0
    %829 = vmatprep.subr.bf16.mxu0 0
    %830 = vmatpush1.bf16.msra.mxu0 0
    %831 = vmatprep.subr.bf16.mxu0 0
    %832 = vmatpush1.bf16.msra.mxu0 0
    %833 = vmatprep.subr.bf16.mxu0 0
    %834 = vmatpush1.bf16.msra.mxu0 0
    %835 = vmatprep.subr.bf16.mxu0 0
    %836 = vmatpush1.bf16.msra.mxu0 0
    %837 = vmatprep.subr.bf16.mxu0 0
    %838 = vmatpush1.bf16.msra.mxu0 0
    %839 = vmatprep.mubr.bf16.mxu0 0
    %840 = vmatmul.mubr.bf16.gmra.mrb[0].mxu0 %v805
    %v841 = vpop.f32.mrb[0].mxu0
    %v842 = vadd.f32 0.0, %v841
    %v843 = vpop.f32.mrb[0].mxu0
    %v844 = vpop.f32.mrb[0].mxu0
    %v845 = vadd.f32 0.0, %v844
    %v846 = vpop.f32.mrb[0].mxu0
    %847 = vdwg.mxu0
    %v848 = vld [vmem:[%s3 + $0x1] sm:$0x1]
    %v849 = vld [vmem:[%s4 + $0x1] sm:$0x1]
    %v850 = vlaneseq
    %v851 = vshrl.u32 %v850, 7
    %v852 = vsub.s32 0, %v851
    %v853 = vrot.slane %v848, %v852
    %v854 = vmul.f32 %v853, 0.0
    %v855 = vlaneseq
    %v856 = vshrl.u32 %v855, 7
    %v857 = vsub.s32 0, %v856
    %v858 = vrot.slane %v849, %v857
    %v859 = vmul.f32 %v858, 0.0
    %v860 = vsub.f32 %v854, %v859
    %v861 = vadd.f32 %v860, %v842
    %v862 = vadd.f32 %v854, %v859
    %864 = vrot.lane.b32.xlu0 %v842, 112
    %v865 = vpop.permute.xlu0 %864
    %v867 = vadd.f32 %v862, %v865
    %v868 = vmul.f32 %v853, %v861
    %v869 = vmul.f32 %v858, %v867
    %v870 = vsub.f32 %v868, %v869
    %v871 = vrot.slane %v842, 2
    %v873 = vadd.f32 %v870, %v871
    %v874 = vmul.f32 %v853, %v867
    %v875 = vmul.f32 %v858, %v861
    %v876 = vadd.f32 %v874, %v875
    %877 = vrot.lane.b32.xlu0 %v871, 112
    %v878 = vpop.permute.xlu0 %877
    %v880 = vadd.f32 %v876, %v878
    %v881 = vmul.f32 %v853, %v873
    %v882 = vmul.f32 %v858, %v880
    %v883 = vsub.f32 %v881, %v882
    %v884 = vrot.slane %v842, 4
    %v886 = vadd.f32 %v883, %v884
    %v887 = vmul.f32 %v853, %v880
    %v888 = vmul.f32 %v858, %v873
    %v889 = vadd.f32 %v887, %v888
    %890 = vrot.lane.b32.xlu0 %v884, 112
    %v891 = vpop.permute.xlu0 %890
    %v893 = vadd.f32 %v889, %v891
    %v894 = vmul.f32 %v853, %v886
    %v895 = vmul.f32 %v858, %v893
    %v896 = vsub.f32 %v894, %v895
    %v897 = vrot.slane %v842, 6
    %v899 = vadd.f32 %v896, %v897
    %v900 = vmul.f32 %v853, %v893
    %v901 = vmul.f32 %v858, %v886
    %v902 = vadd.f32 %v900, %v901
    %903 = vrot.lane.b32.xlu0 %v897, 112
    %v904 = vpop.permute.xlu0 %903
    %v906 = vadd.f32 %v902, %v904
    %v907 = vmul.f32 %v853, %v899
    %v908 = vmul.f32 %v858, %v906
    %v909 = vsub.f32 %v907, %v908
    %v910 = vadd.f32 %v909, %v845
    %v911 = vmul.f32 %v853, %v906
    %v912 = vmul.f32 %v858, %v899
    %v913 = vadd.f32 %v911, %v912
    %915 = vrot.lane.b32.xlu0 %v845, 112
    %v916 = vpop.permute.xlu0 %915
    %v918 = vadd.f32 %v913, %v916
    %v919 = vmul.f32 %v853, %v910
    %v920 = vmul.f32 %v858, %v918
    %v921 = vsub.f32 %v919, %v920
    %v922 = vrot.slane %v845, 2
    %v924 = vadd.f32 %v921, %v922
    %v925 = vmul.f32 %v853, %v918
    %v926 = vmul.f32 %v858, %v910
    %v927 = vadd.f32 %v925, %v926
    %928 = vrot.lane.b32.xlu0 %v922, 112
    %v929 = vpop.permute.xlu0 %928
    %v931 = vadd.f32 %v927, %v929
    %v932 = vmul.f32 %v853, %v924
    %v933 = vmul.f32 %v858, %v931
    %v934 = vsub.f32 %v932, %v933
    %v935 = vrot.slane %v845, 4
    %v937 = vadd.f32 %v934, %v935
    %v938 = vmul.f32 %v853, %v931
    %v939 = vmul.f32 %v858, %v924
    %v940 = vadd.f32 %v938, %v939
    %941 = vrot.lane.b32.xlu0 %v935, 112
    %v942 = vpop.permute.xlu0 %941
    %v944 = vadd.f32 %v940, %v942
    %v945 = vmul.f32 %v853, %v937
    %v946 = vmul.f32 %v858, %v944
    %v947 = vsub.f32 %v945, %v946
    %v948 = vrot.slane %v845, 6
    %v950 = vadd.f32 %v947, %v948
    %v951 = vmul.f32 %v853, %v944
    %v952 = vmul.f32 %v858, %v937
    %v953 = vadd.f32 %v951, %v952
    %954 = vrot.lane.b32.xlu0 %v948, 112
    %v955 = vpop.permute.xlu0 %954
    %v957 = vadd.f32 %v953, %v955
    %v959 = vrot.slane %v873, 6
    %v962 = vrot.slane %v886, 4
    %v965 = vrot.slane %v899, 2
    %v968 = vrot.slane %v924, 6
    %v971 = vrot.slane %v937, 4
    %v974 = vrot.slane %v950, 2
    %v976 = vsel %vm356, %v861, %v959
    %v977 = vsel %vm358, %v976, %v962
    %v978 = vsel %vm360, %v977, %v965
    %v979 = vsel %vm356, %v910, %v968
    %v980 = vsel %vm358, %v979, %v971
    %v981 = vsel %vm360, %v980, %v974
    %v983 = vrot.slane %v880, 6
    %v986 = vrot.slane %v893, 4
    %v989 = vrot.slane %v906, 2
    %v992 = vrot.slane %v931, 6
    %v995 = vrot.slane %v944, 4
    %v998 = vrot.slane %v957, 2
    %v1000 = vsel %vm356, %v867, %v983
    %v1001 = vsel %vm358, %v1000, %v986
    %v1002 = vsel %vm360, %v1001, %v989
    %v1003 = vsel %vm356, %v918, %v992
    %v1004 = vsel %vm358, %v1003, %v995
    %v1005 = vsel %vm360, %v1004, %v998
    %1008 = vrot.lane.b32.xlu0 %v1002, 16
    %v1009 = vpop.permute.xlu0 %1008
    %1010 = vrot.lane.b32.xlu0 %v1005, 16
    %v1011 = vpop.permute.xlu0 %1010
    %v1014 = vsel %vm397, %v978, %v1009
    %v1015 = vsel %vm397, %v981, %v1011
    %v1016 = vpack.c.bf16 %v1015, %v1014
    %s1017 = scalar_lea.vmem [#allocation8], 16
    %v1018 = vld [vmem:[%s1017] sm:$0xf]
    %v1019 = vld [vmem:[%s1017 + $0x4] sm:$0xf]
    %v1020 = vld [vmem:[%s1017 + $0x8] sm:$0xf]
    %v1021 = vld [vmem:[%s1017 + $0xc] sm:$0xf]
    %v1022 = vld [vmem:[%s7 + $0x1] sm:$0x1]
    %v1023 = vlaneseq
    %v1024 = vshrl.u32 %v1023, 7
    %v1025 = vsub.s32 0, %v1024
    %v1026 = vrot.slane %v1022, %v1025
    %v1027 = vmul.f32 %v1026, %v784
    %v1028 = vmul.f32 %v1026, %v785
    %v1033 = vunpack.c.l.b16 %v1018
    %v1034 = vunpack.c.l.b16 %v1019
    %v1035 = vunpack.c.l.b16 %v1020
    %v1036 = vunpack.c.l.b16 %v1021
    %v1037 = vpack.c.b16 %v1034, %v1033
    %v1038 = vpack.c.b16 %v1036, %v1035
    %v1042 = vsel %vm127, %v1016, 0
    %1044 = vmatprep.subr.bf16.mxu0 0
    %1045 = vmatpush1.bf16.msra.mxu0 %v1037
    %1046 = vmatprep.subr.bf16.mxu0 0
    %1047 = vmatpush1.bf16.msra.mxu0 %v1038
    %1048 = vmatprep.subr.bf16.mxu0 0
    %1049 = vmatpush1.bf16.msra.mxu0 0
    %1050 = vmatprep.subr.bf16.mxu0 0
    %1051 = vmatpush1.bf16.msra.mxu0 0
    %1052 = vmatprep.subr.bf16.mxu0 0
    %1053 = vmatpush1.bf16.msra.mxu0 0
    %1054 = vmatprep.subr.bf16.mxu0 0
    %1055 = vmatpush1.bf16.msra.mxu0 0
    %1056 = vmatprep.subr.bf16.mxu0 0
    %1057 = vmatpush1.bf16.msra.mxu0 0
    %1058 = vmatprep.subr.bf16.mxu0 0
    %1059 = vmatpush1.bf16.msra.mxu0 0
    %1060 = vmatprep.subr.bf16.mxu0 0
    %1061 = vmatpush1.bf16.msra.mxu0 0
    %1062 = vmatprep.subr.bf16.mxu0 0
    %1063 = vmatpush1.bf16.msra.mxu0 0
    %1064 = vmatprep.subr.bf16.mxu0 0
    %1065 = vmatpush1.bf16.msra.mxu0 0
    %1066 = vmatprep.subr.bf16.mxu0 0
    %1067 = vmatpush1.bf16.msra.mxu0 0
    %1068 = vmatprep.subr.bf16.mxu0 0
    %1069 = vmatpush1.bf16.msra.mxu0 0
    %1070 = vmatprep.subr.bf16.mxu0 0
    %1071 = vmatpush1.bf16.msra.mxu0 0
    %1072 = vmatprep.subr.bf16.mxu0 0
    %1073 = vmatpush1.bf16.msra.mxu0 0
    %1074 = vmatprep.subr.bf16.mxu0 0
    %1075 = vmatpush1.bf16.msra.mxu0 0
    %1076 = vmatprep.mubr.bf16.mxu0 0
    %1077 = vmatmul.mubr.bf16.gmra.mrb[0].mxu0 %v1042
    %v1078 = vpop.f32.mrb[0].mxu0
    %v1079 = vadd.f32 %v1027, %v1078
    %v1080 = vpop.f32.mrb[0].mxu0
    %v1081 = vpop.f32.mrb[0].mxu0
    %v1082 = vadd.f32 %v1028, %v1081
    %v1083 = vpop.f32.mrb[0].mxu0
    %1084 = vdwg.mxu0
    %v1085 = vmul.f32 %v1079, 0.5
    %v1086 = vmul.f32 %v1082, 0.5
    %v1087 = vmul.f32 %v1079, 0.70710677
    %v1088 = vmul.f32 %v1082, 0.70710677
    %vm1089 = vcmp.ge.f32.partialorder %v1087, 0.0
    %vm1090 = vcmp.ge.f32.partialorder %v1088, 0.0
    %v1091 = vsel %vm1089, 1.0, -1.0
    %v1092 = vsel %vm1090, 1.0, -1.0
    %v1093 = vand.u32 2147483647, %v1087
    %v1094 = vand.u32 2147483647, %v1088
    %v1095 = vmul.f32 %v1093, 0.3275911
    %v1096 = vmul.f32 %v1094, 0.3275911
    %v1097 = vadd.f32 %v1095, 1.0
    %v1098 = vadd.f32 %v1096, 1.0
    %v1099 = vrcp.pop %v1097
    %v1100 = vrcp.pop %v1098
    %v1101 = vmul.f32 %v1099, 1.0614054
    %v1102 = vmul.f32 %v1100, 1.0614054
    %v1103 = vadd.f32 %v1101, -1.4531521
    %v1104 = vadd.f32 %v1102, -1.4531521
    %v1105 = vmul.f32 %v1103, %v1099
    %v1106 = vmul.f32 %v1104, %v1100
    %v1107 = vadd.f32 %v1105, 1.4214138
    %v1108 = vadd.f32 %v1106, 1.4214138
    %v1109 = vmul.f32 %v1107, %v1099
    %v1110 = vmul.f32 %v1108, %v1100
    %v1111 = vadd.f32 %v1109, -0.28449672
    %v1112 = vadd.f32 %v1110, -0.28449672
    %v1113 = vmul.f32 %v1111, %v1099
    %v1114 = vmul.f32 %v1112, %v1100
    %v1115 = vadd.f32 %v1113, 0.2548296
    %v1116 = vadd.f32 %v1114, 0.2548296
    %v1117 = vmul.f32 %v1115, %v1099
    %v1118 = vmul.f32 %v1116, %v1100
    %v1119 = vsub.f32 0.0, %v1093
    %v1120 = vsub.f32 0.0, %v1094
    %v1121 = vmul.f32 %v1119, %v1093
    %v1122 = vmul.f32 %v1120, %v1094
    %v1123 = vmul.f32 %v1121, 1.442695
    %v1124 = vpow.pop %v1123
    %v1125 = vmul.f32 %v1122, 1.442695
    %v1126 = vpow.pop %v1125
    %v1127 = vmul.f32 %v1117, %v1124
    %v1128 = vmul.f32 %v1118, %v1126
    %v1129 = vsub.f32 1.0, %v1127
    %v1130 = vsub.f32 1.0, %v1128
    %v1131 = vmul.f32 %v1091, %v1129
    %v1132 = vmul.f32 %v1092, %v1130
    %v1133 = vadd.f32 %v1131, 1.0
    %v1134 = vadd.f32 %v1132, 1.0
    %v1135 = vmul.f32 %v1085, %v1133
    %v1136 = vmul.f32 %v1086, %v1134
    %v1137 = vadd.f32 %v1135, %v784
    %v1138 = vadd.f32 %v1136, %v785
    %v1139 = vld [vmem:[%s8 + $0x1] sm:$0x1]
    %v1140 = vld [vmem:[%s9 + $0x1] sm:$0x1]
    %v1141 = vsel %vm127, %v1137, 0.0
    %1142 = vadd.xlane.f32.xlu0 %v1141
    %v1143 = vpop.xlane.xlu0 %1142
    %v1144 = vsel %vm127, %v1138, 0.0
    %1145 = vadd.xlane.f32.xlu0 %v1144
    %v1146 = vpop.xlane.xlu0 %1145
    %v1147 = vmul.f32 %v1143, %v134
    %v1148 = vmul.f32 %v1146, %v134
    %v1149 = vsub.f32 %v1137, %v1147
    %v1150 = vsub.f32 %v1138, %v1148
    %v1151 = vmul.f32 %v1149, %v1149
    %v1152 = vmul.f32 %v1150, %v1150
    %v1153 = vsel %vm127, %v1151, 0.0
    %1154 = vadd.xlane.f32.xlu0 %v1153
    %v1155 = vpop.xlane.xlu0 %1154
    %v1156 = vsel %vm127, %v1152, 0.0
    %1157 = vadd.xlane.f32.xlu0 %v1156
    %v1158 = vpop.xlane.xlu0 %1157
    %v1159 = vmul.f32 %v1155, %v134
    %v1160 = vmul.f32 %v1158, %v134
    %v1161 = vadd.f32 %v1159, 1e-05
    %v1162 = vadd.f32 %v1160, 1e-05
    %v1163 = vrsqrt.pop %v1161
    %v1164 = vrsqrt.pop %v1162
    %v1165 = vmul.f32 %v1149, %v1163
    %v1166 = vmul.f32 %v1150, %v1164
    %v1167 = vlaneseq
    %v1168 = vshrl.u32 %v1167, 7
    %v1169 = vsub.s32 0, %v1168
    %v1170 = vrot.slane %v1139, %v1169
    %v1171 = vmul.f32 %v1165, %v1170
    %v1172 = vmul.f32 %v1166, %v1170
    %v1173 = vlaneseq
    %v1174 = vshrl.u32 %v1173, 7
    %v1175 = vsub.s32 0, %v1174
    %v1176 = vrot.slane %v1140, %v1175
    %v1177 = vadd.f32 %v1171, %v1176
    %v1178 = vadd.f32 %v1172, %v1176
    %v1179 = vpack.c.bf16 %v1178, %v1177
    %s1180 = scalar_lea.vmem [#allocation10], 16
    %v1181 = vld [vmem:[%s1180] sm:$0xf]
    %v1182 = vld [vmem:[%s1180 + $0x4] sm:$0xf]
    %v1183 = vld [vmem:[%s1180 + $0x8] sm:$0xf]
    %v1184 = vld [vmem:[%s1180 + $0xc] sm:$0xf]
    %v1189 = vunpack.c.l.b16 %v1181
    %v1190 = vunpack.c.l.b16 %v1182
    %v1191 = vunpack.c.l.b16 %v1183
    %v1192 = vunpack.c.l.b16 %v1184
    %v1193 = vpack.c.b16 %v1190, %v1189
    %v1194 = vpack.c.b16 %v1192, %v1191
    %v1198 = vsel %vm127, %v1179, 0
    %1200 = vmatprep.subr.bf16.mxu0 0
    %1201 = vmatpush1.bf16.msra.mxu0 %v1193
    %1202 = vmatprep.subr.bf16.mxu0 0
    %1203 = vmatpush1.bf16.msra.mxu0 %v1194
    %1204 = vmatprep.subr.bf16.mxu0 0
    %1205 = vmatpush1.bf16.msra.mxu0 0
    %1206 = vmatprep.subr.bf16.mxu0 0
    %1207 = vmatpush1.bf16.msra.mxu0 0
    %1208 = vmatprep.subr.bf16.mxu0 0
    %1209 = vmatpush1.bf16.msra.mxu0 0
    %1210 = vmatprep.subr.bf16.mxu0 0
    %1211 = vmatpush1.bf16.msra.mxu0 0
    %1212 = vmatprep.subr.bf16.mxu0 0
    %1213 = vmatpush1.bf16.msra.mxu0 0
    %1214 = vmatprep.subr.bf16.mxu0 0
    %1215 = vmatpush1.bf16.msra.mxu0 0
    %1216 = vmatprep.subr.bf16.mxu0 0
    %1217 = vmatpush1.bf16.msra.mxu0 0
    %1218 = vmatprep.subr.bf16.mxu0 0
    %1219 = vmatpush1.bf16.msra.mxu0 0
    %1220 = vmatprep.subr.bf16.mxu0 0
    %1221 = vmatpush1.bf16.msra.mxu0 0
    %1222 = vmatprep.subr.bf16.mxu0 0
    %1223 = vmatpush1.bf16.msra.mxu0 0
    %1224 = vmatprep.subr.bf16.mxu0 0
    %1225 = vmatpush1.bf16.msra.mxu0 0
    %1226 = vmatprep.subr.bf16.mxu0 0
    %1227 = vmatpush1.bf16.msra.mxu0 0
    %1228 = vmatprep.subr.bf16.mxu0 0
    %1229 = vmatpush1.bf16.msra.mxu0 0
    %1230 = vmatprep.subr.bf16.mxu0 0
    %1231 = vmatpush1.bf16.msra.mxu0 0
    %1232 = vmatprep.mubr.bf16.mxu0 0
    %1233 = vmatmul.mubr.bf16.gmra.mrb[0].mxu0 %v1198
    %v1234 = vpop.f32.mrb[0].mxu0
    %v1235 = vadd.f32 0.0, %v1234
    %v1236 = vpop.f32.mrb[0].mxu0
    %v1237 = vpop.f32.mrb[0].mxu0
    %v1238 = vadd.f32 0.0, %v1237
    %v1239 = vpop.f32.mrb[0].mxu0
    %1240 = vdwg.mxu0
    %v1241 = vmul.f32 %v1235, 0.5
    %v1242 = vmul.f32 %v1238, 0.5
    %v1243 = vmul.f32 %v1235, 0.70710677
    %v1244 = vmul.f32 %v1238, 0.70710677
    %vm1245 = vcmp.ge.f32.partialorder %v1243, 0.0
    %vm1246 = vcmp.ge.f32.partialorder %v1244, 0.0
    %v1247 = vsel %vm1245, 1.0, -1.0
    %v1248 = vsel %vm1246, 1.0, -1.0
    %v1249 = vand.u32 2147483647, %v1243
    %v1250 = vand.u32 2147483647, %v1244
    %v1251 = vmul.f32 %v1249, 0.3275911
    %v1252 = vmul.f32 %v1250, 0.3275911
    %v1253 = vadd.f32 %v1251, 1.0
    %v1254 = vadd.f32 %v1252, 1.0
    %v1255 = vrcp.pop %v1253
    %v1256 = vrcp.pop %v1254
    %v1257 = vmul.f32 %v1255, 1.0614054
    %v1258 = vmul.f32 %v1256, 1.0614054
    %v1259 = vadd.f32 %v1257, -1.4531521
    %v1260 = vadd.f32 %v1258, -1.4531521
    %v1261 = vmul.f32 %v1259, %v1255
    %v1262 = vmul.f32 %v1260, %v1256
    %v1263 = vadd.f32 %v1261, 1.4214138
    %v1264 = vadd.f32 %v1262, 1.4214138
    %v1265 = vmul.f32 %v1263, %v1255
    %v1266 = vmul.f32 %v1264, %v1256
    %v1267 = vadd.f32 %v1265, -0.28449672
    %v1268 = vadd.f32 %v1266, -0.28449672
    %v1269 = vmul.f32 %v1267, %v1255
    %v1270 = vmul.f32 %v1268, %v1256
    %v1271 = vadd.f32 %v1269, 0.2548296
    %v1272 = vadd.f32 %v1270, 0.2548296
    %v1273 = vmul.f32 %v1271, %v1255
    %v1274 = vmul.f32 %v1272, %v1256
    %v1275 = vsub.f32 0.0, %v1249
    %v1276 = vsub.f32 0.0, %v1250
    %v1277 = vmul.f32 %v1275, %v1249
    %v1278 = vmul.f32 %v1276, %v1250
    %v1279 = vmul.f32 %v1277, 1.442695
    %v1280 = vpow.pop %v1279
    %v1281 = vmul.f32 %v1278, 1.442695
    %v1282 = vpow.pop %v1281
    %v1283 = vmul.f32 %v1273, %v1280
    %v1284 = vmul.f32 %v1274, %v1282
    %v1285 = vsub.f32 1.0, %v1283
    %v1286 = vsub.f32 1.0, %v1284
    %v1287 = vmul.f32 %v1247, %v1285
    %v1288 = vmul.f32 %v1248, %v1286
    %v1289 = vadd.f32 %v1287, 1.0
    %v1290 = vadd.f32 %v1288, 1.0
    %v1291 = vmul.f32 %v1241, %v1289
    %v1292 = vmul.f32 %v1242, %v1290
    %1295 = vrot.lane.b32.xlu0 %v1291, 96
    %v1296 = vpop.permute.xlu0 %1295
    %1297 = vrot.lane.b32.xlu0 %v1292, 96
    %v1298 = vpop.permute.xlu0 %1297
    %v1301 = vmul.f32 %v1235, %v1296
    %v1302 = vmul.f32 %v1238, %v1298
    %v1303 = vpack.c.bf16 %v1302, %v1301
    %s1304 = scalar_lea.vmem [#allocation11], 16
    %v1305 = vld [vmem:[%s1304] sm:$0xf]
    %v1306 = vld [vmem:[%s1304 + $0x4] sm:$0xf]
    %v1307 = vld [vmem:[%s1304 + $0x8] sm:$0xf]
    %v1308 = vld [vmem:[%s1304 + $0xc] sm:$0xf]
    %v1313 = vunpack.c.l.b16 %v1305
    %v1314 = vunpack.c.l.b16 %v1306
    %v1315 = vunpack.c.l.b16 %v1307
    %v1316 = vunpack.c.l.b16 %v1308
    %v1317 = vpack.c.b16 %v1314, %v1313
    %v1318 = vpack.c.b16 %v1316, %v1315
    %v1322 = vsel %vm127, %v1303, 0
    %1324 = vmatprep.subr.bf16.mxu0 0
    %1325 = vmatpush1.bf16.msra.mxu0 %v1317
    %1326 = vmatprep.subr.bf16.mxu0 0
    %1327 = vmatpush1.bf16.msra.mxu0 %v1318
    %1328 = vmatprep.subr.bf16.mxu0 0
    %1329 = vmatpush1.bf16.msra.mxu0 0
    %1330 = vmatprep.subr.bf16.mxu0 0
    %1331 = vmatpush1.bf16.msra.mxu0 0
    %1332 = vmatprep.subr.bf16.mxu0 0
    %1333 = vmatpush1.bf16.msra.mxu0 0
    %1334 = vmatprep.subr.bf16.mxu0 0
    %1335 = vmatpush1.bf16.msra.mxu0 0
    %1336 = vmatprep.subr.bf16.mxu0 0
    %1337 = vmatpush1.bf16.msra.mxu0 0
    %1338 = vmatprep.subr.bf16.mxu0 0
    %1339 = vmatpush1.bf16.msra.mxu0 0
    %1340 = vmatprep.subr.bf16.mxu0 0
    %1341 = vmatpush1.bf16.msra.mxu0 0
    %1342 = vmatprep.subr.bf16.mxu0 0
    %1343 = vmatpush1.bf16.msra.mxu0 0
    %1344 = vmatprep.subr.bf16.mxu0 0
    %1345 = vmatpush1.bf16.msra.mxu0 0
    %1346 = vmatprep.subr.bf16.mxu0 0
    %1347 = vmatpush1.bf16.msra.mxu0 0
    %1348 = vmatprep.subr.bf16.mxu0 0
    %1349 = vmatpush1.bf16.msra.mxu0 0
    %1350 = vmatprep.subr.bf16.mxu0 0
    %1351 = vmatpush1.bf16.msra.mxu0 0
    %1352 = vmatprep.subr.bf16.mxu0 0
    %1353 = vmatpush1.bf16.msra.mxu0 0
    %1354 = vmatprep.subr.bf16.mxu0 0
    %1355 = vmatpush1.bf16.msra.mxu0 0
    %1356 = vmatprep.mubr.bf16.mxu0 0
    %1357 = vmatmul.mubr.bf16.gmra.mrb[0].mxu0 %v1322
    %v1358 = vpop.f32.mrb[0].mxu0
    %v1359 = vadd.f32 %v1177, %v1358
    %v1360 = vpop.f32.mrb[0].mxu0
    %v1361 = vpop.f32.mrb[0].mxu0
    %v1362 = vadd.f32 %v1178, %v1361
    %v1363 = vpop.f32.mrb[0].mxu0
    %1364 = vdwg.mxu0
    %v1365 = vld [vmem:[#allocation5 + $0x2] sm:$0x1]
    %v1366 = vld [vmem:[%s2 + $0x2] sm:$0x1]
    %v1367 = vsel %vm127, %v1359, 0.0
    %1368 = vadd.xlane.f32.xlu0 %v1367
    %v1369 = vpop.xlane.xlu0 %1368
    %v1370 = vsel %vm127, %v1362, 0.0
    %1371 = vadd.xlane.f32.xlu0 %v1370
    %v1372 = vpop.xlane.xlu0 %1371
    %v1373 = vmul.f32 %v1369, %v134
    %v1374 = vmul.f32 %v1372, %v134
    %v1375 = vsub.f32 %v1359, %v1373
    %v1376 = vsub.f32 %v1362, %v1374
    %v1377 = vmul.f32 %v1375, %v1375
    %v1378 = vmul.f32 %v1376, %v1376
    %v1379 = vsel %vm127, %v1377, 0.0
    %1380 = vadd.xlane.f32.xlu0 %v1379
    %v1381 = vpop.xlane.xlu0 %1380
    %v1382 = vsel %vm127, %v1378, 0.0
    %1383 = vadd.xlane.f32.xlu0 %v1382
    %v1384 = vpop.xlane.xlu0 %1383
    %v1385 = vmul.f32 %v1381, %v134
    %v1386 = vmul.f32 %v1384, %v134
    %v1387 = vadd.f32 %v1385, 1e-05
    %v1388 = vadd.f32 %v1386, 1e-05
    %v1389 = vrsqrt.pop %v1387
    %v1390 = vrsqrt.pop %v1388
    %v1391 = vmul.f32 %v1375, %v1389
    %v1392 = vmul.f32 %v1376, %v1390
    %v1393 = vlaneseq
    %v1394 = vshrl.u32 %v1393, 7
    %v1395 = vsub.s32 0, %v1394
    %v1396 = vrot.slane %v1365, %v1395
    %v1397 = vmul.f32 %v1391, %v1396
    %v1398 = vmul.f32 %v1392, %v1396
    %v1399 = vlaneseq
    %v1400 = vshrl.u32 %v1399, 7
    %v1401 = vsub.s32 0, %v1400
    %v1402 = vrot.slane %v1366, %v1401
    %v1403 = vadd.f32 %v1397, %v1402
    %v1404 = vadd.f32 %v1398, %v1402
    %v1405 = vpack.c.bf16 %v1404, %v1403
    %s1406 = scalar_lea.vmem [#allocation7], 32
    %v1407 = vld [vmem:[%s1406] sm:$0xf]
    %v1408 = vld [vmem:[%s1406 + $0x4] sm:$0xf]
    %v1409 = vld [vmem:[%s1406 + $0x8] sm:$0xf]
    %v1410 = vld [vmem:[%s1406 + $0xc] sm:$0xf]
    %v1415 = vunpack.c.l.b16 %v1407
    %v1416 = vunpack.c.l.b16 %v1408
    %v1417 = vunpack.c.l.b16 %v1409
    %v1418 = vunpack.c.l.b16 %v1410
    %v1419 = vpack.c.b16 %v1416, %v1415
    %v1420 = vpack.c.b16 %v1418, %v1417
    %v1424 = vsel %vm127, %v1405, 0
    %1426 = vmatprep.subr.bf16.mxu0 0
    %1427 = vmatpush1.bf16.msra.mxu0 %v1419
    %1428 = vmatprep.subr.bf16.mxu0 0
    %1429 = vmatpush1.bf16.msra.mxu0 %v1420
    %1430 = vmatprep.subr.bf16.mxu0 0
    %1431 = vmatpush1.bf16.msra.mxu0 0
    %1432 = vmatprep.subr.bf16.mxu0 0
    %1433 = vmatpush1.bf16.msra.mxu0 0
    %1434 = vmatprep.subr.bf16.mxu0 0
    %1435 = vmatpush1.bf16.msra.mxu0 0
    %1436 = vmatprep.subr.bf16.mxu0 0
    %1437 = vmatpush1.bf16.msra.mxu0 0
    %1438 = vmatprep.subr.bf16.mxu0 0
    %1439 = vmatpush1.bf16.msra.mxu0 0
    %1440 = vmatprep.subr.bf16.mxu0 0
    %1441 = vmatpush1.bf16.msra.mxu0 0
    %1442 = vmatprep.subr.bf16.mxu0 0
    %1443 = vmatpush1.bf16.msra.mxu0 0
    %1444 = vmatprep.subr.bf16.mxu0 0
    %1445 = vmatpush1.bf16.msra.mxu0 0
    %1446 = vmatprep.subr.bf16.mxu0 0
    %1447 = vmatpush1.bf16.msra.mxu0 0
    %1448 = vmatprep.subr.bf16.mxu0 0
    %1449 = vmatpush1.bf16.msra.mxu0 0
    %1450 = vmatprep.subr.bf16.mxu0 0
    %1451 = vmatpush1.bf16.msra.mxu0 0
    %1452 = vmatprep.subr.bf16.mxu0 0
    %1453 = vmatpush1.bf16.msra.mxu0 0
    %1454 = vmatprep.subr.bf16.mxu0 0
    %1455 = vmatpush1.bf16.msra.mxu0 0
    %1456 = vmatprep.subr.bf16.mxu0 0
    %1457 = vmatpush1.bf16.msra.mxu0 0
    %1458 = vmatprep.mubr.bf16.mxu0 0
    %1459 = vmatmul.mubr.bf16.gmra.mrb[0].mxu0 %v1424
    %v1460 = vpop.f32.mrb[0].mxu0
    %v1461 = vadd.f32 0.0, %v1460
    %v1462 = vpop.f32.mrb[0].mxu0
    %v1463 = vpop.f32.mrb[0].mxu0
    %v1464 = vadd.f32 0.0, %v1463
    %v1465 = vpop.f32.mrb[0].mxu0
    %1466 = vdwg.mxu0
    %v1467 = vld [vmem:[%s3 + $0x2] sm:$0x1]
    %v1468 = vld [vmem:[%s4 + $0x2] sm:$0x1]
    %v1469 = vlaneseq
    %v1470 = vshrl.u32 %v1469, 7
    %v1471 = vsub.s32 0, %v1470
    %v1472 = vrot.slane %v1467, %v1471
    %v1473 = vmul.f32 %v1472, 0.0
    %v1474 = vlaneseq
    %v1475 = vshrl.u32 %v1474, 7
    %v1476 = vsub.s32 0, %v1475
    %v1477 = vrot.slane %v1468, %v1476
    %v1478 = vmul.f32 %v1477, 0.0
    %v1479 = vsub.f32 %v1473, %v1478
    %v1480 = vadd.f32 %v1479, %v1461
    %v1481 = vadd.f32 %v1473, %v1478
    %1483 = vrot.lane.b32.xlu0 %v1461, 112
    %v1484 = vpop.permute.xlu0 %1483
    %v1486 = vadd.f32 %v1481, %v1484
    %v1487 = vmul.f32 %v1472, %v1480
    %v1488 = vmul.f32 %v1477, %v1486
    %v1489 = vsub.f32 %v1487, %v1488
    %v1490 = vrot.slane %v1461, 2
    %v1492 = vadd.f32 %v1489, %v1490
    %v1493 = vmul.f32 %v1472, %v1486
    %v1494 = vmul.f32 %v1477, %v1480
    %v1495 = vadd.f32 %v1493, %v1494
    %1496 = vrot.lane.b32.xlu0 %v1490, 112
    %v1497 = vpop.permute.xlu0 %1496
    %v1499 = vadd.f32 %v1495, %v1497
    %v1500 = vmul.f32 %v1472, %v1492
    %v1501 = vmul.f32 %v1477, %v1499
    %v1502 = vsub.f32 %v1500, %v1501
    %v1503 = vrot.slane %v1461, 4
    %v1505 = vadd.f32 %v1502, %v1503
    %v1506 = vmul.f32 %v1472, %v1499
    %v1507 = vmul.f32 %v1477, %v1492
    %v1508 = vadd.f32 %v1506, %v1507
    %1509 = vrot.lane.b32.xlu0 %v1503, 112
    %v1510 = vpop.permute.xlu0 %1509
    %v1512 = vadd.f32 %v1508, %v1510
    %v1513 = vmul.f32 %v1472, %v1505
    %v1514 = vmul.f32 %v1477, %v1512
    %v1515 = vsub.f32 %v1513, %v1514
    %v1516 = vrot.slane %v1461, 6
    %v1518 = vadd.f32 %v1515, %v1516
    %v1519 = vmul.f32 %v1472, %v1512
    %v1520 = vmul.f32 %v1477, %v1505
    %v1521 = vadd.f32 %v1519, %v1520
    %1522 = vrot.lane.b32.xlu0 %v1516, 112
    %v1523 = vpop.permute.xlu0 %1522
    %v1525 = vadd.f32 %v1521, %v1523
    %v1526 = vmul.f32 %v1472, %v1518
    %v1527 = vmul.f32 %v1477, %v1525
    %v1528 = vsub.f32 %v1526, %v1527
    %v1529 = vadd.f32 %v1528, %v1464
    %v1530 = vmul.f32 %v1472, %v1525
    %v1531 = vmul.f32 %v1477, %v1518
    %v1532 = vadd.f32 %v1530, %v1531
    %1534 = vrot.lane.b32.xlu0 %v1464, 112
    %v1535 = vpop.permute.xlu0 %1534
    %v1537 = vadd.f32 %v1532, %v1535
    %v1538 = vmul.f32 %v1472, %v1529
    %v1539 = vmul.f32 %v1477, %v1537
    %v1540 = vsub.f32 %v1538, %v1539
    %v1541 = vrot.slane %v1464, 2
    %v1543 = vadd.f32 %v1540, %v1541
    %v1544 = vmul.f32 %v1472, %v1537
    %v1545 = vmul.f32 %v1477, %v1529
    %v1546 = vadd.f32 %v1544, %v1545
    %1547 = vrot.lane.b32.xlu0 %v1541, 112
    %v1548 = vpop.permute.xlu0 %1547
    %v1550 = vadd.f32 %v1546, %v1548
    %v1551 = vmul.f32 %v1472, %v1543
    %v1552 = vmul.f32 %v1477, %v1550
    %v1553 = vsub.f32 %v1551, %v1552
    %v1554 = vrot.slane %v1464, 4
    %v1556 = vadd.f32 %v1553, %v1554
    %v1557 = vmul.f32 %v1472, %v1550
    %v1558 = vmul.f32 %v1477, %v1543
    %v1559 = vadd.f32 %v1557, %v1558
    %1560 = vrot.lane.b32.xlu0 %v1554, 112
    %v1561 = vpop.permute.xlu0 %1560
    %v1563 = vadd.f32 %v1559, %v1561
    %v1564 = vmul.f32 %v1472, %v1556
    %v1565 = vmul.f32 %v1477, %v1563
    %v1566 = vsub.f32 %v1564, %v1565
    %v1567 = vrot.slane %v1464, 6
    %v1569 = vadd.f32 %v1566, %v1567
    %v1570 = vmul.f32 %v1472, %v1563
    %v1571 = vmul.f32 %v1477, %v1556
    %v1572 = vadd.f32 %v1570, %v1571
    %1573 = vrot.lane.b32.xlu0 %v1567, 112
    %v1574 = vpop.permute.xlu0 %1573
    %v1576 = vadd.f32 %v1572, %v1574
    %v1578 = vrot.slane %v1492, 6
    %v1581 = vrot.slane %v1505, 4
    %v1584 = vrot.slane %v1518, 2
    %v1587 = vrot.slane %v1543, 6
    %v1590 = vrot.slane %v1556, 4
    %v1593 = vrot.slane %v1569, 2
    %v1595 = vsel %vm356, %v1480, %v1578
    %v1596 = vsel %vm358, %v1595, %v1581
    %v1597 = vsel %vm360, %v1596, %v1584
    %v1598 = vsel %vm356, %v1529, %v1587
    %v1599 = vsel %vm358, %v1598, %v1590
    %v1600 = vsel %vm360, %v1599, %v1593
    %v1602 = vrot.slane %v1499, 6
    %v1605 = vrot.slane %v1512, 4
    %v1608 = vrot.slane %v1525, 2
    %v1611 = vrot.slane %v1550, 6
    %v1614 = vrot.slane %v1563, 4
    %v1617 = vrot.slane %v1576, 2
    %v1619 = vsel %vm356, %v1486, %v1602
    %v1620 = vsel %vm358, %v1619, %v1605
    %v1621 = vsel %vm360, %v1620, %v1608
    %v1622 = vsel %vm356, %v1537, %v1611
    %v1623 = vsel %vm358, %v1622, %v1614
    %v1624 = vsel %vm360, %v1623, %v1617
    %1627 = vrot.lane.b32.xlu0 %v1621, 16
    %v1628 = vpop.permute.xlu0 %1627
    %1629 = vrot.lane.b32.xlu0 %v1624, 16
    %v1630 = vpop.permute.xlu0 %1629
    %v1633 = vsel %vm397, %v1597, %v1628
    %v1634 = vsel %vm397, %v1600, %v1630
    %v1635 = vpack.c.bf16 %v1634, %v1633
    %s1636 = scalar_lea.vmem [#allocation8], 32
    %v1637 = vld [vmem:[%s1636] sm:$0xf]
    %v1638 = vld [vmem:[%s1636 + $0x4] sm:$0xf]
    %v1639 = vld [vmem:[%s1636 + $0x8] sm:$0xf]
    %v1640 = vld [vmem:[%s1636 + $0xc] sm:$0xf]
    %v1641 = vld [vmem:[%s7 + $0x2] sm:$0x1]
    %v1642 = vlaneseq
    %v1643 = vshrl.u32 %v1642, 7
    %v1644 = vsub.s32 0, %v1643
    %v1645 = vrot.slane %v1641, %v1644
    %v1646 = vmul.f32 %v1645, %v1403
    %v1647 = vmul.f32 %v1645, %v1404
    %v1652 = vunpack.c.l.b16 %v1637
    %v1653 = vunpack.c.l.b16 %v1638
    %v1654 = vunpack.c.l.b16 %v1639
    %v1655 = vunpack.c.l.b16 %v1640
    %v1656 = vpack.c.b16 %v1653, %v1652
    %v1657 = vpack.c.b16 %v1655, %v1654
    %v1661 = vsel %vm127, %v1635, 0
    %1663 = vmatprep.subr.bf16.mxu0 0
    %1664 = vmatpush1.bf16.msra.mxu0 %v1656
    %1665 = vmatprep.subr.bf16.mxu0 0
    %1666 = vmatpush1.bf16.msra.mxu0 %v1657
    %1667 = vmatprep.subr.bf16.mxu0 0
    %1668 = vmatpush1.bf16.msra.mxu0 0
    %1669 = vmatprep.subr.bf16.mxu0 0
    %1670 = vmatpush1.bf16.msra.mxu0 0
    %1671 = vmatprep.subr.bf16.mxu0 0
    %1672 = vmatpush1.bf16.msra.mxu0 0
    %1673 = vmatprep.subr.bf16.mxu0 0
    %1674 = vmatpush1.bf16.msra.mxu0 0
    %1675 = vmatprep.subr.bf16.mxu0 0
    %1676 = vmatpush1.bf16.msra.mxu0 0
    %1677 = vmatprep.subr.bf16.mxu0 0
    %1678 = vmatpush1.bf16.msra.mxu0 0
    %1679 = vmatprep.subr.bf16.mxu0 0
    %1680 = vmatpush1.bf16.msra.mxu0 0
    %1681 = vmatprep.subr.bf16.mxu0 0
    %1682 = vmatpush1.bf16.msra.mxu0 0
    %1683 = vmatprep.subr.bf16.mxu0 0
    %1684 = vmatpush1.bf16.msra.mxu0 0
    %1685 = vmatprep.subr.bf16.mxu0 0
    %1686 = vmatpush1.bf16.msra.mxu0 0
    %1687 = vmatprep.subr.bf16.mxu0 0
    %1688 = vmatpush1.bf16.msra.mxu0 0
    %1689 = vmatprep.subr.bf16.mxu0 0
    %1690 = vmatpush1.bf16.msra.mxu0 0
    %1691 = vmatprep.subr.bf16.mxu0 0
    %1692 = vmatpush1.bf16.msra.mxu0 0
    %1693 = vmatprep.subr.bf16.mxu0 0
    %1694 = vmatpush1.bf16.msra.mxu0 0
    %1695 = vmatprep.mubr.bf16.mxu0 0
    %1696 = vmatmul.mubr.bf16.gmra.mrb[0].mxu0 %v1661
    %v1697 = vpop.f32.mrb[0].mxu0
    %v1698 = vadd.f32 %v1646, %v1697
    %v1699 = vpop.f32.mrb[0].mxu0
    %v1700 = vpop.f32.mrb[0].mxu0
    %v1701 = vadd.f32 %v1647, %v1700
    %v1702 = vpop.f32.mrb[0].mxu0
    %1703 = vdwg.mxu0
    %v1704 = vmul.f32 %v1698, 0.5
    %v1705 = vmul.f32 %v1701, 0.5
    %v1706 = vmul.f32 %v1698, 0.70710677
    %v1707 = vmul.f32 %v1701, 0.70710677
    %vm1708 = vcmp.ge.f32.partialorder %v1706, 0.0
    %vm1709 = vcmp.ge.f32.partialorder %v1707, 0.0
    %v1710 = vsel %vm1708, 1.0, -1.0
    %v1711 = vsel %vm1709, 1.0, -1.0
    %v1712 = vand.u32 2147483647, %v1706
    %v1713 = vand.u32 2147483647, %v1707
    %v1714 = vmul.f32 %v1712, 0.3275911
    %v1715 = vmul.f32 %v1713, 0.3275911
    %v1716 = vadd.f32 %v1714, 1.0
    %v1717 = vadd.f32 %v1715, 1.0
    %v1718 = vrcp.pop %v1716
    %v1719 = vrcp.pop %v1717
    %v1720 = vmul.f32 %v1718, 1.0614054
    %v1721 = vmul.f32 %v1719, 1.0614054
    %v1722 = vadd.f32 %v1720, -1.4531521
    %v1723 = vadd.f32 %v1721, -1.4531521
    %v1724 = vmul.f32 %v1722, %v1718
    %v1725 = vmul.f32 %v1723, %v1719
    %v1726 = vadd.f32 %v1724, 1.4214138
    %v1727 = vadd.f32 %v1725, 1.4214138
    %v1728 = vmul.f32 %v1726, %v1718
    %v1729 = vmul.f32 %v1727, %v1719
    %v1730 = vadd.f32 %v1728, -0.28449672
    %v1731 = vadd.f32 %v1729, -0.28449672
    %v1732 = vmul.f32 %v1730, %v1718
    %v1733 = vmul.f32 %v1731, %v1719
    %v1734 = vadd.f32 %v1732, 0.2548296
    %v1735 = vadd.f32 %v1733, 0.2548296
    %v1736 = vmul.f32 %v1734, %v1718
    %v1737 = vmul.f32 %v1735, %v1719
    %v1738 = vsub.f32 0.0, %v1712
    %v1739 = vsub.f32 0.0, %v1713
    %v1740 = vmul.f32 %v1738, %v1712
    %v1741 = vmul.f32 %v1739, %v1713
    %v1742 = vmul.f32 %v1740, 1.442695
    %v1743 = vpow.pop %v1742
    %v1744 = vmul.f32 %v1741, 1.442695
    %v1745 = vpow.pop %v1744
    %v1746 = vmul.f32 %v1736, %v1743
    %v1747 = vmul.f32 %v1737, %v1745
    %v1748 = vsub.f32 1.0, %v1746
    %v1749 = vsub.f32 1.0, %v1747
    %v1750 = vmul.f32 %v1710, %v1748
    %v1751 = vmul.f32 %v1711, %v1749
    %v1752 = vadd.f32 %v1750, 1.0
    %v1753 = vadd.f32 %v1751, 1.0
    %v1754 = vmul.f32 %v1704, %v1752
    %v1755 = vmul.f32 %v1705, %v1753
    %v1756 = vadd.f32 %v1754, %v1403
    %v1757 = vadd.f32 %v1755, %v1404
    %v1758 = vld [vmem:[%s8 + $0x2] sm:$0x1]
    %v1759 = vld [vmem:[%s9 + $0x2] sm:$0x1]
    %v1760 = vsel %vm127, %v1756, 0.0
    %1761 = vadd.xlane.f32.xlu0 %v1760
    %v1762 = vpop.xlane.xlu0 %1761
    %v1763 = vsel %vm127, %v1757, 0.0
    %1764 = vadd.xlane.f32.xlu0 %v1763
    %v1765 = vpop.xlane.xlu0 %1764
    %v1766 = vmul.f32 %v1762, %v134
    %v1767 = vmul.f32 %v1765, %v134
    %v1768 = vsub.f32 %v1756, %v1766
    %v1769 = vsub.f32 %v1757, %v1767
    %v1770 = vmul.f32 %v1768, %v1768
    %v1771 = vmul.f32 %v1769, %v1769
    %v1772 = vsel %vm127, %v1770, 0.0
    %1773 = vadd.xlane.f32.xlu0 %v1772
    %v1774 = vpop.xlane.xlu0 %1773
    %v1775 = vsel %vm127, %v1771, 0.0
    %1776 = vadd.xlane.f32.xlu0 %v1775
    %v1777 = vpop.xlane.xlu0 %1776
    %v1778 = vmul.f32 %v1774, %v134
    %v1779 = vmul.f32 %v1777, %v134
    %v1780 = vadd.f32 %v1778, 1e-05
    %v1781 = vadd.f32 %v1779, 1e-05
    %v1782 = vrsqrt.pop %v1780
    %v1783 = vrsqrt.pop %v1781
    %v1784 = vmul.f32 %v1768, %v1782
    %v1785 = vmul.f32 %v1769, %v1783
    %v1786 = vlaneseq
    %v1787 = vshrl.u32 %v1786, 7
    %v1788 = vsub.s32 0, %v1787
    %v1789 = vrot.slane %v1758, %v1788
    %v1790 = vmul.f32 %v1784, %v1789
    %v1791 = vmul.f32 %v1785, %v1789
    %v1792 = vlaneseq
    %v1793 = vshrl.u32 %v1792, 7
    %v1794 = vsub.s32 0, %v1793
    %v1795 = vrot.slane %v1759, %v1794
    %v1796 = vadd.f32 %v1790, %v1795
    %v1797 = vadd.f32 %v1791, %v1795
    %v1798 = vpack.c.bf16 %v1797, %v1796
    %s1799 = scalar_lea.vmem [#allocation10], 32
    %v1800 = vld [vmem:[%s1799] sm:$0xf]
    %v1801 = vld [vmem:[%s1799 + $0x4] sm:$0xf]
    %v1802 = vld [vmem:[%s1799 + $0x8] sm:$0xf]
    %v1803 = vld [vmem:[%s1799 + $0xc] sm:$0xf]
    %v1808 = vunpack.c.l.b16 %v1800
    %v1809 = vunpack.c.l.b16 %v1801
    %v1810 = vunpack.c.l.b16 %v1802
    %v1811 = vunpack.c.l.b16 %v1803
    %v1812 = vpack.c.b16 %v1809, %v1808
    %v1813 = vpack.c.b16 %v1811, %v1810
    %v1817 = vsel %vm127, %v1798, 0
    %1819 = vmatprep.subr.bf16.mxu0 0
    %1820 = vmatpush1.bf16.msra.mxu0 %v1812
    %1821 = vmatprep.subr.bf16.mxu0 0
    %1822 = vmatpush1.bf16.msra.mxu0 %v1813
    %1823 = vmatprep.subr.bf16.mxu0 0
    %1824 = vmatpush1.bf16.msra.mxu0 0
    %1825 = vmatprep.subr.bf16.mxu0 0
    %1826 = vmatpush1.bf16.msra.mxu0 0
    %1827 = vmatprep.subr.bf16.mxu0 0
    %1828 = vmatpush1.bf16.msra.mxu0 0
    %1829 = vmatprep.subr.bf16.mxu0 0
    %1830 = vmatpush1.bf16.msra.mxu0 0
    %1831 = vmatprep.subr.bf16.mxu0 0
    %1832 = vmatpush1.bf16.msra.mxu0 0
    %1833 = vmatprep.subr.bf16.mxu0 0
    %1834 = vmatpush1.bf16.msra.mxu0 0
    %1835 = vmatprep.subr.bf16.mxu0 0
    %1836 = vmatpush1.bf16.msra.mxu0 0
    %1837 = vmatprep.subr.bf16.mxu0 0
    %1838 = vmatpush1.bf16.msra.mxu0 0
    %1839 = vmatprep.subr.bf16.mxu0 0
    %1840 = vmatpush1.bf16.msra.mxu0 0
    %1841 = vmatprep.subr.bf16.mxu0 0
    %1842 = vmatpush1.bf16.msra.mxu0 0
    %1843 = vmatprep.subr.bf16.mxu0 0
    %1844 = vmatpush1.bf16.msra.mxu0 0
    %1845 = vmatprep.subr.bf16.mxu0 0
    %1846 = vmatpush1.bf16.msra.mxu0 0
    %1847 = vmatprep.subr.bf16.mxu0 0
    %1848 = vmatpush1.bf16.msra.mxu0 0
    %1849 = vmatprep.subr.bf16.mxu0 0
    %1850 = vmatpush1.bf16.msra.mxu0 0
    %1851 = vmatprep.mubr.bf16.mxu0 0
    %1852 = vmatmul.mubr.bf16.gmra.mrb[0].mxu0 %v1817
    %v1853 = vpop.f32.mrb[0].mxu0
    %v1854 = vadd.f32 0.0, %v1853
    %v1855 = vpop.f32.mrb[0].mxu0
    %v1856 = vpop.f32.mrb[0].mxu0
    %v1857 = vadd.f32 0.0, %v1856
    %v1858 = vpop.f32.mrb[0].mxu0
    %1859 = vdwg.mxu0
    %v1860 = vmul.f32 %v1854, 0.5
    %v1861 = vmul.f32 %v1857, 0.5
    %v1862 = vmul.f32 %v1854, 0.70710677
    %v1863 = vmul.f32 %v1857, 0.70710677
    %vm1864 = vcmp.ge.f32.partialorder %v1862, 0.0
    %vm1865 = vcmp.ge.f32.partialorder %v1863, 0.0
    %v1866 = vsel %vm1864, 1.0, -1.0
    %v1867 = vsel %vm1865, 1.0, -1.0
    %v1868 = vand.u32 2147483647, %v1862
    %v1869 = vand.u32 2147483647, %v1863
    %v1870 = vmul.f32 %v1868, 0.3275911
    %v1871 = vmul.f32 %v1869, 0.3275911
    %v1872 = vadd.f32 %v1870, 1.0
    %v1873 = vadd.f32 %v1871, 1.0
    %v1874 = vrcp.pop %v1872
    %v1875 = vrcp.pop %v1873
    %v1876 = vmul.f32 %v1874, 1.0614054
    %v1877 = vmul.f32 %v1875, 1.0614054
    %v1878 = vadd.f32 %v1876, -1.4531521
    %v1879 = vadd.f32 %v1877, -1.4531521
    %v1880 = vmul.f32 %v1878, %v1874
    %v1881 = vmul.f32 %v1879, %v1875
    %v1882 = vadd.f32 %v1880, 1.4214138
    %v1883 = vadd.f32 %v1881, 1.4214138
    %v1884 = vmul.f32 %v1882, %v1874
    %v1885 = vmul.f32 %v1883, %v1875
    %v1886 = vadd.f32 %v1884, -0.28449672
    %v1887 = vadd.f32 %v1885, -0.28449672
    %v1888 = vmul.f32 %v1886, %v1874
    %v1889 = vmul.f32 %v1887, %v1875
    %v1890 = vadd.f32 %v1888, 0.2548296
    %v1891 = vadd.f32 %v1889, 0.2548296
    %v1892 = vmul.f32 %v1890, %v1874
    %v1893 = vmul.f32 %v1891, %v1875
    %v1894 = vsub.f32 0.0, %v1868
    %v1895 = vsub.f32 0.0, %v1869
    %v1896 = vmul.f32 %v1894, %v1868
    %v1897 = vmul.f32 %v1895, %v1869
    %v1898 = vmul.f32 %v1896, 1.442695
    %v1899 = vpow.pop %v1898
    %v1900 = vmul.f32 %v1897, 1.442695
    %v1901 = vpow.pop %v1900
    %v1902 = vmul.f32 %v1892, %v1899
    %v1903 = vmul.f32 %v1893, %v1901
    %v1904 = vsub.f32 1.0, %v1902
    %v1905 = vsub.f32 1.0, %v1903
    %v1906 = vmul.f32 %v1866, %v1904
    %v1907 = vmul.f32 %v1867, %v1905
    %v1908 = vadd.f32 %v1906, 1.0
    %v1909 = vadd.f32 %v1907, 1.0
    %v1910 = vmul.f32 %v1860, %v1908
    %v1911 = vmul.f32 %v1861, %v1909
    %1914 = vrot.lane.b32.xlu0 %v1910, 96
    %v1915 = vpop.permute.xlu0 %1914
    %1916 = vrot.lane.b32.xlu0 %v1911, 96
    %v1917 = vpop.permute.xlu0 %1916
    %v1920 = vmul.f32 %v1854, %v1915
    %v1921 = vmul.f32 %v1857, %v1917
    %v1922 = vpack.c.bf16 %v1921, %v1920
    %s1923 = scalar_lea.vmem [#allocation11], 32
    %v1924 = vld [vmem:[%s1923] sm:$0xf]
    %v1925 = vld [vmem:[%s1923 + $0x4] sm:$0xf]
    %v1926 = vld [vmem:[%s1923 + $0x8] sm:$0xf]
    %v1927 = vld [vmem:[%s1923 + $0xc] sm:$0xf]
    %v1932 = vunpack.c.l.b16 %v1924
    %v1933 = vunpack.c.l.b16 %v1925
    %v1934 = vunpack.c.l.b16 %v1926
    %v1935 = vunpack.c.l.b16 %v1927
    %v1936 = vpack.c.b16 %v1933, %v1932
    %v1937 = vpack.c.b16 %v1935, %v1934
    %v1941 = vsel %vm127, %v1922, 0
    %1943 = vmatprep.subr.bf16.mxu0 0
    %1944 = vmatpush1.bf16.msra.mxu0 %v1936
    %1945 = vmatprep.subr.bf16.mxu0 0
    %1946 = vmatpush1.bf16.msra.mxu0 %v1937
    %1947 = vmatprep.subr.bf16.mxu0 0
    %1948 = vmatpush1.bf16.msra.mxu0 0
    %1949 = vmatprep.subr.bf16.mxu0 0
    %1950 = vmatpush1.bf16.msra.mxu0 0
    %1951 = vmatprep.subr.bf16.mxu0 0
    %1952 = vmatpush1.bf16.msra.mxu0 0
    %1953 = vmatprep.subr.bf16.mxu0 0
    %1954 = vmatpush1.bf16.msra.mxu0 0
    %1955 = vmatprep.subr.bf16.mxu0 0
    %1956 = vmatpush1.bf16.msra.mxu0 0
    %1957 = vmatprep.subr.bf16.mxu0 0
    %1958 = vmatpush1.bf16.msra.mxu0 0
    %1959 = vmatprep.subr.bf16.mxu0 0
    %1960 = vmatpush1.bf16.msra.mxu0 0
    %1961 = vmatprep.subr.bf16.mxu0 0
    %1962 = vmatpush1.bf16.msra.mxu0 0
    %1963 = vmatprep.subr.bf16.mxu0 0
    %1964 = vmatpush1.bf16.msra.mxu0 0
    %1965 = vmatprep.subr.bf16.mxu0 0
    %1966 = vmatpush1.bf16.msra.mxu0 0
    %1967 = vmatprep.subr.bf16.mxu0 0
    %1968 = vmatpush1.bf16.msra.mxu0 0
    %1969 = vmatprep.subr.bf16.mxu0 0
    %1970 = vmatpush1.bf16.msra.mxu0 0
    %1971 = vmatprep.subr.bf16.mxu0 0
    %1972 = vmatpush1.bf16.msra.mxu0 0
    %1973 = vmatprep.subr.bf16.mxu0 0
    %1974 = vmatpush1.bf16.msra.mxu0 0
    %1975 = vmatprep.mubr.bf16.mxu0 0
    %1976 = vmatmul.mubr.bf16.gmra.mrb[0].mxu0 %v1941
    %v1977 = vpop.f32.mrb[0].mxu0
    %v1978 = vadd.f32 %v1796, %v1977
    %v1979 = vpop.f32.mrb[0].mxu0
    %v1980 = vpop.f32.mrb[0].mxu0
    %v1981 = vadd.f32 %v1797, %v1980
    %v1982 = vpop.f32.mrb[0].mxu0
    %1983 = vdwg.mxu0
    %1984 = vst.msk [vmem:[#allocation13] sm:$0xff] %vm127, %v1978
    %1985 = vst.msk [vmem:[#allocation13 + $0x8] sm:$0xff] %vm127, %v1981
    // Predicated region
    $region74: #{tpu_custom_call.1} parent=1 // pred_check
      _
    $region75: #{tpu_custom_call.1} parent=1 // pred_check_branch
      %1987 = sbr.rel (0) target = $region77
    $region76: #{tpu_custom_call.1} parent=1 // pred_region
      %s1989 = ssub.s32 256, 256
      %1990 = vsyncadd [#allocation4], %s1989
      %s1991 = sshll.u32 [#allocation13], 4
      %s1992 = int_to_ptr.vmem [resolvable:$true] %s1991
      %1997 = dma.vmem_to_hbm [thread:$0]  %s1992, 256, %s12, [#allocation4], 128, 128, 8
    $region77: #{tpu_custom_call.1} parent=1 // pred_fallthru
      _
    // Predicated region
    $region78: #{tpu_custom_call.1} parent=1 // pred_check
      _
    $region79: #{tpu_custom_call.1} parent=1 // pred_check_branch
      %1999 = sbr.rel (0) target = $region81
    $region80: #{tpu_custom_call.1} parent=1 // pred_region
      %2000 = dma.done [#allocation4], 256
    $region81: #{tpu_custom_call.1} parent=1 // pred_fallthru
      _
    %2001 = vsyncpa [#allocation3], 1
    %2002 = vsyncpa [#allocation6], 1
    %2003 = vsyncpa [#allocation9], 1
    %2004 = vsyncpa [#allocation12], 1
    %2005 = vsyncpa [#allocation4], 1

</llo_original>
